<compile_context>
chip_gen: v5e
topology: v5e:2x2
jax: 0.10.0
libtpu: 0.0.40
codegen_flags: <defaults>
</compile_context>

<pallas_src>
import functools

import jax
import jax.numpy as jnp
import numpy as np
from jax.experimental import pallas as pl
from jax.experimental.pallas import tpu as pltpu

KSIZE = 7
PAD = KSIZE // 2


def _round_up(x, m):
    return (x + m - 1) // m * m


def _pick_bblk(batch):
    # Largest divisor of `batch` that is <= 8 (8 sublanes per f32 vreg).  For
    # production batches pad B to a multiple of 8 instead; on v7x also keep
    # B // Bblk >= 2 so the "parallel" grid axis can feed both TensorCores.
    for cand in (8, 4, 2, 1):
        if batch % cand == 0:
            return cand
    return 1


def cbam_kernel(wsp_ref, x_ref, w1_ref, w2t_ref, cmask_ref, o_ref, plane_ref,
                *, W, PL):
    # x_ref block: (Bblk, C, H*W) -- lane-dense flattened images.
    Bblk, C, HW = x_ref.shape
    L = plane_ref.shape[1]

    # ---- channel attention + mean/max plane fill (per image; every op is a
    # dense (C, HW) / (C, 1) VPU/XLU op with C >= 8 sublanes) ----------------
    # TODO(synk): at production widths (C = 256..2048) run the two MLP layers
    # as jnp.dot MXU calls on a pooled (Bblk, C) matrix; at C=32 / Cr=2 the
    # broadcast+reduce form below is marginal and avoids any relayout.
    scales = []
    for b in range(Bblk):
        xb = x_ref[b].astype(jnp.float32)                     # (C, HW)
        pooled = jnp.mean(xb, axis=1, keepdims=True)          # (C, 1) global avg pool
        h1 = jnp.maximum(
            jnp.sum(pooled * w1_ref[...], axis=0, keepdims=True), 0.0)   # (1, Cr)
        scale_b = jax.nn.sigmoid(
            jnp.sum(h1 * w2t_ref[...], axis=1, keepdims=True))           # (C, 1)
        ca_b = xb * scale_b                                   # (C, HW) channel-refined
        # mean/max over channels -> one row each of the stacked padded plane.
        plane_ref[b, PL:PL + HW] = jnp.mean(ca_b, axis=0)
        plane_ref[Bblk + b, PL:PL + HW] = jnp.max(ca_b, axis=0)
        scales.append(scale_b)

    # Refresh the zero halo (lane-aligned 128-wide slabs; cheap, and correct
    # even when the "parallel" batch axis is split across TensorCores, unlike
    # a program_id()==0-gated one-time init).
    plane_ref[:, 0:PL] = jnp.zeros((2 * Bblk, PL), jnp.float32)
    plane_ref[:, PL + HW:L] = jnp.zeros((2 * Bblk, L - PL - HW), jnp.float32)

    plane = plane_ref[...]                                    # (2*Bblk, L)

    # ---- 7x7 spatial conv on the stacked planes: ONE roll per (dy, dx) tap --
    row_is_mean = jax.lax.broadcasted_iota(jnp.int32, (2 * Bblk, 1), 0) < Bblk
    acc2 = jnp.zeros((2 * Bblk, HW), jnp.float32)
    for dx in range(-PAD, PAD + 1):                           # static unrolled taps
        part = jnp.zeros((2 * Bblk, HW), jnp.float32)
        for dy in range(-PAD, PAD + 1):
            t = (dy + PAD) * KSIZE + (dx + PAD)
            w_mean = wsp_ref[t]                               # SMEM scalars
            w_max = wsp_ref[KSIZE * KSIZE + t]
            wcol = jnp.where(row_is_mean, w_mean, w_max)      # (2*Bblk, 1)
            s = PL + dy * W + dx                              # static source offset
            # win[:, i] == plane[:, i + s] for i < HW  (XLU lane rotate)
            win = pltpu.roll(plane, shift=(-s) % L, axis=1)[:, :HW]
            part = part + wcol * win
        if dx != 0:   # kill taps whose column wrapped across an image row
            part = part * cmask_ref[dx + PAD:dx + PAD + 1, :]
        acc2 = acc2 + part
    # Combine the mean-plane half and max-plane half once.
    acc = acc2[:Bblk, :] + acc2[Bblk:, :]                     # (Bblk, HW)
    # Spatial sigmoid: exp + EUP reciprocal keeps the divide off the VALUs.
    sa = pl.reciprocal(1.0 + jnp.exp(-acc), approx=True)      # (Bblk, HW)

    # ---- output: recompute x * ca_scale instead of carrying ca over the conv
    for b in range(Bblk):
        o_ref[b] = (x_ref[b].astype(jnp.float32) * scales[b] * sa[b]
                    ).astype(o_ref.dtype)


def cbam_pallas(x_nchw, w1, w2, wsp):
    """x_nchw: (B, C, H, W); w1: (C, Cr); w2: (Cr, C); wsp: (2, 7, 7)."""
    B, C, H, W = x_nchw.shape
    Cr = w1.shape[1]
    HW = H * W

    Bblk = _pick_bblk(B)

    # Padded-plane geometry: the image starts at a 128-aligned lane offset PL
    # with >= PAD rows (+PAD cols) of zero halo on each side; total length is a
    # multiple of 128 so the taps' lane rotates stay on aligned vregs.
    halo = PAD * W + PAD
    PL = _round_up(max(halo, 1), 128)
    L = _round_up(PL + HW + halo, 128)
    # Guard (review item): roll-based padding is only valid while the halo fits.
    assert PL >= halo and (L - PL - HW) >= halo
    assert B % Bblk == 0

    x_flat = x_nchw.reshape(B, C, HW)                 # free reshape (contiguous)
    w2t = jnp.transpose(w2)                           # (C, Cr), tiny
    wsp_flat = wsp.reshape(-1).astype(jnp.float32)    # (2*7*7,) scalars -> SMEM

    # {0,1} masks killing conv taps whose column index falls outside the image
    # (in the flattened layout they would otherwise wrap into the neighbouring
    # row).  Row k corresponds to dx = k - PAD.  Built at trace time in numpy.
    cols = np.arange(HW) % W
    cmask_np = np.stack(
        [((cols + (k - PAD) >= 0) & (cols + (k - PAD) < W)).astype(np.float32)
         for k in range(KSIZE)], axis=0)              # (KSIZE, HW)
    cmask = jnp.asarray(cmask_np)

    kernel = functools.partial(cbam_kernel, W=W, PL=PL)

    out_flat = pl.pallas_call(
        kernel,
        out_shape=jax.ShapeDtypeStruct((B, C, HW), x_nchw.dtype),
        grid_spec=pltpu.PrefetchScalarGridSpec(
            num_scalar_prefetch=0,
            grid=(B // Bblk,),
            in_specs=[
                pl.BlockSpec(memory_space=pltpu.MemorySpace.SMEM),   # 7x7 tap weights
                # x: Bblk images per step.  TODO(synk): if DMA becomes exposed
                # at production shapes, add pipeline_mode=pl.Buffered(3) here.
                pl.BlockSpec((Bblk, C, HW), lambda b: (b, 0, 0)),
                pl.BlockSpec((C, Cr), lambda b: (0, 0)),             # w1 (C -> C/r)
                pl.BlockSpec((C, Cr), lambda b: (0, 0)),             # w2^T (C/r -> C)
                pl.BlockSpec((KSIZE, HW), lambda b: (0, 0)),         # column masks
            ],
            out_specs=pl.BlockSpec((Bblk, C, HW), lambda b: (b, 0, 0)),
            # Persistent stacked mean/max padded planes (halo stays zero).
            scratch_shapes=[pltpu.VMEM((2 * Bblk, L), jnp.float32)],
        ),
        compiler_params=pltpu.CompilerParams(
            dimension_semantics=("parallel",)),
    )(wsp_flat, x_flat, w1, w2t, cmask)

    return out_flat.reshape(B, C, H, W)               # free reshape back to NCHW


def cbam_reference(x_nchw, w1, w2, wsp):
    """Pure-JAX reference matching the PyTorch module semantics."""
    x = jnp.transpose(x_nchw, (0, 2, 3, 1))               # (B, H, W, C)
    pooled = x.mean(axis=(1, 2))                          # (B, C)
    h1 = jax.nn.relu(pooled @ w1)                         # (B, Cr)
    scale = jax.nn.sigmoid(h1 @ w2)                       # (B, C)
    ca = x * scale[:, None, None, :]
    stacked = jnp.stack([ca.mean(-1), ca.max(-1)], axis=-1)   # (B, H, W, 2)
    kern = jnp.transpose(wsp, (1, 2, 0))[:, :, :, None]       # (7, 7, 2, 1) HWIO
    conv = jax.lax.conv_general_dilated(
        stacked, kern, window_strides=(1, 1), padding="SAME",
        dimension_numbers=("NHWC", "HWIO", "NHWC"))
    sa = jax.nn.sigmoid(conv)                             # (B, H, W, 1)
    out = sa * ca
    return jnp.transpose(out, (0, 3, 1, 2))               # back to NCHW


if __name__ == "__main__":
    # Small shapes consistent with the module: reduction=16 => channels >= 16.
    B, C, H, W = 2, 32, 16, 16
    reduction = 16
    Cr = C // reduction                                   # = 2

    key = jax.random.PRNGKey(0)
    k1, k2, k3, k4 = jax.random.split(key, 4)
    x = jax.random.normal(k1, (B, C, H, W), jnp.float32)
    w1 = jax.random.normal(k2, (C, Cr), jnp.float32) * 0.1        # Conv2d(C, C/r, 1)
    w2 = jax.random.normal(k3, (Cr, C), jnp.float32) * 0.1        # Conv2d(C/r, C, 1)
    wsp = jax.random.normal(k4, (2, KSIZE, KSIZE), jnp.float32) * 0.1  # Conv2d(2, 1, 7)

    out = jax.block_until_ready(cbam_pallas(x, w1, w2, wsp))
    ref = jax.block_until_ready(cbam_reference(x, w1, w2, wsp))
    assert out.shape == (B, C, H, W)
    # 2e-3 tolerance: the spatial sigmoid uses the approximate EUP reciprocal.
    np.testing.assert_allclose(np.asarray(out), np.asarray(ref), rtol=2e-3, atol=2e-3)

    print("KERNEL_OK")
</pallas_src>

<mosaic_0001>
module attributes {stable_mosaic.version = 11 : i64} {
  func.func @cbam_kernel(%arg0: i32, %arg1: memref<98xf32, #tpu.memory_space<smem>>, %arg2: memref<2x32x256xf32, #tpu.memory_space<vmem>>, %arg3: memref<32x2xf32, #tpu.memory_space<vmem>>, %arg4: memref<32x2xf32, #tpu.memory_space<vmem>>, %arg5: memref<7x256xf32, #tpu.memory_space<vmem>>, %arg6: memref<2x32x256xf32, #tpu.memory_space<vmem>>, %arg7: memref<4x512xf32, #tpu.memory_space<vmem>>) attributes {dimension_semantics = [#tpu.dimension_semantics<parallel>], iteration_bounds = array<i64: 1>, scalar_prefetch = 0 : i64, scratch_operands = 1 : i64, tpu.core_type = #tpu.core_type<tc>, window_params = [{transform_indices = @transform_0, window_bounds = array<i64: 98>}, {transform_indices = @transform_1, window_bounds = array<i64: 2, 32, 256>}, {pipeline_mode = #tpu.pipeline_mode<synchronous>, transform_indices = @transform_2, window_bounds = array<i64: 32, 2>}, {pipeline_mode = #tpu.pipeline_mode<synchronous>, transform_indices = @transform_3, window_bounds = array<i64: 32, 2>}, {pipeline_mode = #tpu.pipeline_mode<synchronous>, transform_indices = @transform_4, window_bounds = array<i64: 7, 256>}, {transform_indices = @transform_5, window_bounds = array<i64: 2, 32, 256>}]} {
    %c0 = arith.constant 0 : index
    %c0_0 = arith.constant 0 : index
    %c0_1 = arith.constant 0 : index
    %0 = vector.load %arg2[%c0, %c0_0, %c0_1] : memref<2x32x256xf32, #tpu.memory_space<vmem>>, vector<1x32x256xf32>
    %1 = vector.shape_cast %0 : vector<1x32x256xf32> to vector<32x256xf32>
    %cst = arith.constant dense<0.000000e+00> : vector<32xf32>
    %2 = vector.multi_reduction <add>, %1, %cst [1] : vector<32x256xf32> to vector<32xf32>
    %3 = vector.shape_cast %2 : vector<32xf32> to vector<32x1xf32>
    %cst_2 = arith.constant 2.560000e+02 : f32
    %4 = vector.broadcast %cst_2 : f32 to vector<32x1xf32>
    %5 = arith.divf %3, %4 : vector<32x1xf32>
    %c0_3 = arith.constant 0 : index
    %c0_4 = arith.constant 0 : index
    %6 = vector.load %arg3[%c0_3, %c0_4] : memref<32x2xf32, #tpu.memory_space<vmem>>, vector<32x2xf32>
    %7 = vector.broadcast %5 : vector<32x1xf32> to vector<32x2xf32>
    %8 = arith.mulf %7, %6 : vector<32x2xf32>
    %cst_5 = arith.constant dense<0.000000e+00> : vector<2xf32>
    %9 = vector.multi_reduction <add>, %8, %cst_5 [0] : vector<32x2xf32> to vector<2xf32>
    %10 = vector.shape_cast %9 : vector<2xf32> to vector<1x2xf32>
    %cst_6 = arith.constant 0.000000e+00 : f32
    %11 = vector.broadcast %cst_6 : f32 to vector<1x2xf32>
    %12 = arith.maximumf %10, %11 : vector<1x2xf32>
    %c0_7 = arith.constant 0 : index
    %c0_8 = arith.constant 0 : index
    %13 = vector.load %arg4[%c0_7, %c0_8] : memref<32x2xf32, #tpu.memory_space<vmem>>, vector<32x2xf32>
    %14 = vector.broadcast %12 : vector<1x2xf32> to vector<32x2xf32>
    %15 = arith.mulf %14, %13 : vector<32x2xf32>
    %cst_9 = arith.constant dense<0.000000e+00> : vector<32xf32>
    %16 = vector.multi_reduction <add>, %15, %cst_9 [1] : vector<32x2xf32> to vector<32xf32>
    %17 = vector.shape_cast %16 : vector<32xf32> to vector<32x1xf32>
    %18 = arith.negf %17 : vector<32x1xf32>
    %19 = math.exp %18 : vector<32x1xf32>
    %cst_10 = arith.constant 1.000000e+00 : f32
    %20 = vector.broadcast %cst_10 : f32 to vector<32x1xf32>
    %21 = arith.addf %20, %19 : vector<32x1xf32>
    %22 = arith.divf %20, %21 : vector<32x1xf32>
    %23 = vector.broadcast %22 : vector<32x1xf32> to vector<32x256xf32>
    %24 = arith.mulf %1, %23 : vector<32x256xf32>
    %cst_11 = arith.constant dense<0.000000e+00> : vector<256xf32>
    %25 = vector.multi_reduction <add>, %24, %cst_11 [0] : vector<32x256xf32> to vector<256xf32>
    %cst_12 = arith.constant 3.200000e+01 : f32
    %26 = vector.broadcast %cst_12 : f32 to vector<256xf32>
    %27 = arith.divf %25, %26 : vector<256xf32>
    %c0_13 = arith.constant 0 : index
    %c128 = arith.constant 128 : index
    %28 = vector.load %arg7[%c0_13, %c128] : memref<4x512xf32, #tpu.memory_space<vmem>>, vector<1x256xf32>
    %29 = vector.shape_cast %28 : vector<1x256xf32> to vector<256xf32>
    %30 = vector.shape_cast %27 : vector<256xf32> to vector<1x256xf32>
    tpu.vector_store %arg7[%c0_13, %c128], %30 {strides = array<i32>} : memref<4x512xf32, #tpu.memory_space<vmem>>, vector<1x256xf32>,
    %cst_14 = arith.constant dense<0xFF800000> : vector<256xf32>
    %31 = vector.multi_reduction <maximumf>, %24, %cst_14 [0] : vector<32x256xf32> to vector<256xf32>
    %c2 = arith.constant 2 : index
    %c128_15 = arith.constant 128 : index
    %32 = vector.load %arg7[%c2, %c128_15] : memref<4x512xf32, #tpu.memory_space<vmem>>, vector<1x256xf32>
    %33 = vector.shape_cast %32 : vector<1x256xf32> to vector<256xf32>
    %34 = vector.shape_cast %31 : vector<256xf32> to vector<1x256xf32>
    tpu.vector_store %arg7[%c2, %c128_15], %34 {strides = array<i32>} : memref<4x512xf32, #tpu.memory_space<vmem>>, vector<1x256xf32>,
    %c1 = arith.constant 1 : index
    %c0_16 = arith.constant 0 : index
    %c0_17 = arith.constant 0 : index
    %35 = vector.load %arg2[%c1, %c0_16, %c0_17] : memref<2x32x256xf32, #tpu.memory_space<vmem>>, vector<1x32x256xf32>
    %36 = vector.shape_cast %35 : vector<1x32x256xf32> to vector<32x256xf32>
    %cst_18 = arith.constant dense<0.000000e+00> : vector<32xf32>
    %37 = vector.multi_reduction <add>, %36, %cst_18 [1] : vector<32x256xf32> to vector<32xf32>
    %38 = vector.shape_cast %37 : vector<32xf32> to vector<32x1xf32>
    %cst_19 = arith.constant 2.560000e+02 : f32
    %39 = vector.broadcast %cst_19 : f32 to vector<32x1xf32>
    %40 = arith.divf %38, %39 : vector<32x1xf32>
    %c0_20 = arith.constant 0 : index
    %c0_21 = arith.constant 0 : index
    %41 = vector.load %arg3[%c0_20, %c0_21] : memref<32x2xf32, #tpu.memory_space<vmem>>, vector<32x2xf32>
    %42 = vector.broadcast %40 : vector<32x1xf32> to vector<32x2xf32>
    %43 = arith.mulf %42, %41 : vector<32x2xf32>
    %cst_22 = arith.constant dense<0.000000e+00> : vector<2xf32>
    %44 = vector.multi_reduction <add>, %43, %cst_22 [0] : vector<32x2xf32> to vector<2xf32>
    %45 = vector.shape_cast %44 : vector<2xf32> to vector<1x2xf32>
    %cst_23 = arith.constant 0.000000e+00 : f32
    %46 = vector.broadcast %cst_23 : f32 to vector<1x2xf32>
    %47 = arith.maximumf %45, %46 : vector<1x2xf32>
    %c0_24 = arith.constant 0 : index
    %c0_25 = arith.constant 0 : index
    %48 = vector.load %arg4[%c0_24, %c0_25] : memref<32x2xf32, #tpu.memory_space<vmem>>, vector<32x2xf32>
    %49 = vector.broadcast %47 : vector<1x2xf32> to vector<32x2xf32>
    %50 = arith.mulf %49, %48 : vector<32x2xf32>
    %cst_26 = arith.constant dense<0.000000e+00> : vector<32xf32>
    %51 = vector.multi_reduction <add>, %50, %cst_26 [1] : vector<32x2xf32> to vector<32xf32>
    %52 = vector.shape_cast %51 : vector<32xf32> to vector<32x1xf32>
    %53 = arith.negf %52 : vector<32x1xf32>
    %54 = math.exp %53 : vector<32x1xf32>
    %cst_27 = arith.constant 1.000000e+00 : f32
    %55 = vector.broadcast %cst_27 : f32 to vector<32x1xf32>
    %56 = arith.addf %55, %54 : vector<32x1xf32>
    %57 = arith.divf %55, %56 : vector<32x1xf32>
    %58 = vector.broadcast %57 : vector<32x1xf32> to vector<32x256xf32>
    %59 = arith.mulf %36, %58 : vector<32x256xf32>
    %cst_28 = arith.constant dense<0.000000e+00> : vector<256xf32>
    %60 = vector.multi_reduction <add>, %59, %cst_28 [0] : vector<32x256xf32> to vector<256xf32>
    %cst_29 = arith.constant 3.200000e+01 : f32
    %61 = vector.broadcast %cst_29 : f32 to vector<256xf32>
    %62 = arith.divf %60, %61 : vector<256xf32>
    %c1_30 = arith.constant 1 : index
    %c128_31 = arith.constant 128 : index
    %63 = vector.load %arg7[%c1_30, %c128_31] : memref<4x512xf32, #tpu.memory_space<vmem>>, vector<1x256xf32>
    %64 = vector.shape_cast %63 : vector<1x256xf32> to vector<256xf32>
    %65 = vector.shape_cast %62 : vector<256xf32> to vector<1x256xf32>
    tpu.vector_store %arg7[%c1_30, %c128_31], %65 {strides = array<i32>} : memref<4x512xf32, #tpu.memory_space<vmem>>, vector<1x256xf32>,
    %cst_32 = arith.constant dense<0xFF800000> : vector<256xf32>
    %66 = vector.multi_reduction <maximumf>, %59, %cst_32 [0] : vector<32x256xf32> to vector<256xf32>
    %c3 = arith.constant 3 : index
    %c128_33 = arith.constant 128 : index
    %67 = vector.load %arg7[%c3, %c128_33] : memref<4x512xf32, #tpu.memory_space<vmem>>, vector<1x256xf32>
    %68 = vector.shape_cast %67 : vector<1x256xf32> to vector<256xf32>
    %69 = vector.shape_cast %66 : vector<256xf32> to vector<1x256xf32>
    tpu.vector_store %arg7[%c3, %c128_33], %69 {strides = array<i32>} : memref<4x512xf32, #tpu.memory_space<vmem>>, vector<1x256xf32>,
    %cst_34 = arith.constant 0.000000e+00 : f32
    %70 = vector.broadcast %cst_34 : f32 to vector<4x128xf32>
    %c0_35 = arith.constant 0 : index
    %c0_36 = arith.constant 0 : index
    %71 = vector.load %arg7[%c0_35, %c0_36] : memref<4x512xf32, #tpu.memory_space<vmem>>, vector<4x128xf32>
    tpu.vector_store %arg7[%c0_35, %c0_36], %70 {strides = array<i32>} : memref<4x512xf32, #tpu.memory_space<vmem>>, vector<4x128xf32>,
    %cst_37 = arith.constant 0.000000e+00 : f32
    %72 = vector.broadcast %cst_37 : f32 to vector<4x128xf32>
    %c0_38 = arith.constant 0 : index
    %c384 = arith.constant 384 : index
    %73 = vector.load %arg7[%c0_38, %c384] : memref<4x512xf32, #tpu.memory_space<vmem>>, vector<4x128xf32>
    tpu.vector_store %arg7[%c0_38, %c384], %72 {strides = array<i32>} : memref<4x512xf32, #tpu.memory_space<vmem>>, vector<4x128xf32>,
    %c0_39 = arith.constant 0 : index
    %c0_40 = arith.constant 0 : index
    %74 = vector.load %arg7[%c0_39, %c0_40] : memref<4x512xf32, #tpu.memory_space<vmem>>, vector<4x512xf32>
    %75 = tpu.iota {dimensions = array<i32: 0>} : vector<4x1xi32>
    %c2_i32 = arith.constant 2 : i32
    %76 = vector.broadcast %c2_i32 : i32 to vector<4x1xi32>
    %77 = arith.cmpi slt, %75, %76 : vector<4x1xi32>
    %cst_41 = arith.constant 0.000000e+00 : f32
    %78 = vector.broadcast %cst_41 : f32 to vector<4x256xf32>
    %cst_42 = arith.constant 0.000000e+00 : f32
    %79 = vector.broadcast %cst_42 : f32 to vector<4x256xf32>
    %c0_43 = arith.constant 0 : index
    %80 = memref.load %arg1[%c0_43] : memref<98xf32, #tpu.memory_space<smem>>
    %c49 = arith.constant 49 : index
    %81 = memref.load %arg1[%c49] : memref<98xf32, #tpu.memory_space<smem>>
    %82 = vector.broadcast %80 : f32 to vector<4x1xf32>
    %83 = vector.broadcast %81 : f32 to vector<4x1xf32>
    %84 = arith.select %77, %82, %83 : vector<4x1xi1>, vector<4x1xf32>
    %c435_i32 = arith.constant 435 : i32
    %85 = tpu.dynamic_rotate %74 by %c435_i32 dim 1 : vector<4x512xf32>, i32 -> vector<4x512xf32>
    %86 = vector.extract_strided_slice %85 {offsets = [0, 0], sizes = [4, 256], strides = [1, 1]} : vector<4x512xf32> to vector<4x256xf32>
    %87 = vector.broadcast %84 : vector<4x1xf32> to vector<4x256xf32>
    %88 = arith.mulf %87, %86 : vector<4x256xf32>
    %89 = arith.addf %79, %88 : vector<4x256xf32>
    %c7 = arith.constant 7 : index
    %90 = memref.load %arg1[%c7] : memref<98xf32, #tpu.memory_space<smem>>
    %c56 = arith.constant 56 : index
    %91 = memref.load %arg1[%c56] : memref<98xf32, #tpu.memory_space<smem>>
    %92 = vector.broadcast %90 : f32 to vector<4x1xf32>
    %93 = vector.broadcast %91 : f32 to vector<4x1xf32>
    %94 = arith.select %77, %92, %93 : vector<4x1xi1>, vector<4x1xf32>
    %c419_i32 = arith.constant 419 : i32
    %95 = tpu.dynamic_rotate %74 by %c419_i32 dim 1 : vector<4x512xf32>, i32 -> vector<4x512xf32>
    %96 = vector.extract_strided_slice %95 {offsets = [0, 0], sizes = [4, 256], strides = [1, 1]} : vector<4x512xf32> to vector<4x256xf32>
    %97 = vector.broadcast %94 : vector<4x1xf32> to vector<4x256xf32>
    %98 = arith.mulf %97, %96 : vector<4x256xf32>
    %99 = arith.addf %89, %98 : vector<4x256xf32>
    %c14 = arith.constant 14 : index
    %100 = memref.load %arg1[%c14] : memref<98xf32, #tpu.memory_space<smem>>
    %c63 = arith.constant 63 : index
    %101 = memref.load %arg1[%c63] : memref<98xf32, #tpu.memory_space<smem>>
    %102 = vector.broadcast %100 : f32 to vector<4x1xf32>
    %103 = vector.broadcast %101 : f32 to vector<4x1xf32>
    %104 = arith.select %77, %102, %103 : vector<4x1xi1>, vector<4x1xf32>
    %c403_i32 = arith.constant 403 : i32
    %105 = tpu.dynamic_rotate %74 by %c403_i32 dim 1 : vector<4x512xf32>, i32 -> vector<4x512xf32>
    %106 = vector.extract_strided_slice %105 {offsets = [0, 0], sizes = [4, 256], strides = [1, 1]} : vector<4x512xf32> to vector<4x256xf32>
    %107 = vector.broadcast %104 : vector<4x1xf32> to vector<4x256xf32>
    %108 = arith.mulf %107, %106 : vector<4x256xf32>
    %109 = arith.addf %99, %108 : vector<4x256xf32>
    %c21 = arith.constant 21 : index
    %110 = memref.load %arg1[%c21] : memref<98xf32, #tpu.memory_space<smem>>
    %c70 = arith.constant 70 : index
    %111 = memref.load %arg1[%c70] : memref<98xf32, #tpu.memory_space<smem>>
    %112 = vector.broadcast %110 : f32 to vector<4x1xf32>
    %113 = vector.broadcast %111 : f32 to vector<4x1xf32>
    %114 = arith.select %77, %112, %113 : vector<4x1xi1>, vector<4x1xf32>
    %c387_i32 = arith.constant 387 : i32
    %115 = tpu.dynamic_rotate %74 by %c387_i32 dim 1 : vector<4x512xf32>, i32 -> vector<4x512xf32>
    %116 = vector.extract_strided_slice %115 {offsets = [0, 0], sizes = [4, 256], strides = [1, 1]} : vector<4x512xf32> to vector<4x256xf32>
    %117 = vector.broadcast %114 : vector<4x1xf32> to vector<4x256xf32>
    %118 = arith.mulf %117, %116 : vector<4x256xf32>
    %119 = arith.addf %109, %118 : vector<4x256xf32>
    %c28 = arith.constant 28 : index
    %120 = memref.load %arg1[%c28] : memref<98xf32, #tpu.memory_space<smem>>
    %c77 = arith.constant 77 : index
    %121 = memref.load %arg1[%c77] : memref<98xf32, #tpu.memory_space<smem>>
    %122 = vector.broadcast %120 : f32 to vector<4x1xf32>
    %123 = vector.broadcast %121 : f32 to vector<4x1xf32>
    %124 = arith.select %77, %122, %123 : vector<4x1xi1>, vector<4x1xf32>
    %c371_i32 = arith.constant 371 : i32
    %125 = tpu.dynamic_rotate %74 by %c371_i32 dim 1 : vector<4x512xf32>, i32 -> vector<4x512xf32>
    %126 = vector.extract_strided_slice %125 {offsets = [0, 0], sizes = [4, 256], strides = [1, 1]} : vector<4x512xf32> to vector<4x256xf32>
    %127 = vector.broadcast %124 : vector<4x1xf32> to vector<4x256xf32>
    %128 = arith.mulf %127, %126 : vector<4x256xf32>
    %129 = arith.addf %119, %128 : vector<4x256xf32>
    %c35 = arith.constant 35 : index
    %130 = memref.load %arg1[%c35] : memref<98xf32, #tpu.memory_space<smem>>
    %c84 = arith.constant 84 : index
    %131 = memref.load %arg1[%c84] : memref<98xf32, #tpu.memory_space<smem>>
    %132 = vector.broadcast %130 : f32 to vector<4x1xf32>
    %133 = vector.broadcast %131 : f32 to vector<4x1xf32>
    %134 = arith.select %77, %132, %133 : vector<4x1xi1>, vector<4x1xf32>
    %c355_i32 = arith.constant 355 : i32
    %135 = tpu.dynamic_rotate %74 by %c355_i32 dim 1 : vector<4x512xf32>, i32 -> vector<4x512xf32>
    %136 = vector.extract_strided_slice %135 {offsets = [0, 0], sizes = [4, 256], strides = [1, 1]} : vector<4x512xf32> to vector<4x256xf32>
    %137 = vector.broadcast %134 : vector<4x1xf32> to vector<4x256xf32>
    %138 = arith.mulf %137, %136 : vector<4x256xf32>
    %139 = arith.addf %129, %138 : vector<4x256xf32>
    %c42 = arith.constant 42 : index
    %140 = memref.load %arg1[%c42] : memref<98xf32, #tpu.memory_space<smem>>
    %c91 = arith.constant 91 : index
    %141 = memref.load %arg1[%c91] : memref<98xf32, #tpu.memory_space<smem>>
    %142 = vector.broadcast %140 : f32 to vector<4x1xf32>
    %143 = vector.broadcast %141 : f32 to vector<4x1xf32>
    %144 = arith.select %77, %142, %143 : vector<4x1xi1>, vector<4x1xf32>
    %c339_i32 = arith.constant 339 : i32
    %145 = tpu.dynamic_rotate %74 by %c339_i32 dim 1 : vector<4x512xf32>, i32 -> vector<4x512xf32>
    %146 = vector.extract_strided_slice %145 {offsets = [0, 0], sizes = [4, 256], strides = [1, 1]} : vector<4x512xf32> to vector<4x256xf32>
    %147 = vector.broadcast %144 : vector<4x1xf32> to vector<4x256xf32>
    %148 = arith.mulf %147, %146 : vector<4x256xf32>
    %149 = arith.addf %139, %148 : vector<4x256xf32>
    %c0_44 = arith.constant 0 : index
    %c0_45 = arith.constant 0 : index
    %150 = vector.load %arg5[%c0_44, %c0_45] : memref<7x256xf32, #tpu.memory_space<vmem>>, vector<1x256xf32>
    %151 = vector.broadcast %150 : vector<1x256xf32> to vector<4x256xf32>
    %152 = arith.mulf %149, %151 : vector<4x256xf32>
    %153 = arith.addf %78, %152 : vector<4x256xf32>
    %cst_46 = arith.constant 0.000000e+00 : f32
    %154 = vector.broadcast %cst_46 : f32 to vector<4x256xf32>
    %c1_47 = arith.constant 1 : index
    %155 = memref.load %arg1[%c1_47] : memref<98xf32, #tpu.memory_space<smem>>
    %c50 = arith.constant 50 : index
    %156 = memref.load %arg1[%c50] : memref<98xf32, #tpu.memory_space<smem>>
    %157 = vector.broadcast %155 : f32 to vector<4x1xf32>
    %158 = vector.broadcast %156 : f32 to vector<4x1xf32>
    %159 = arith.select %77, %157, %158 : vector<4x1xi1>, vector<4x1xf32>
    %c434_i32 = arith.constant 434 : i32
    %160 = tpu.dynamic_rotate %74 by %c434_i32 dim 1 : vector<4x512xf32>, i32 -> vector<4x512xf32>
    %161 = vector.extract_strided_slice %160 {offsets = [0, 0], sizes = [4, 256], strides = [1, 1]} : vector<4x512xf32> to vector<4x256xf32>
    %162 = vector.broadcast %159 : vector<4x1xf32> to vector<4x256xf32>
    %163 = arith.mulf %162, %161 : vector<4x256xf32>
    %164 = arith.addf %154, %163 : vector<4x256xf32>
    %c8 = arith.constant 8 : index
    %165 = memref.load %arg1[%c8] : memref<98xf32, #tpu.memory_space<smem>>
    %c57 = arith.constant 57 : index
    %166 = memref.load %arg1[%c57] : memref<98xf32, #tpu.memory_space<smem>>
    %167 = vector.broadcast %165 : f32 to vector<4x1xf32>
    %168 = vector.broadcast %166 : f32 to vector<4x1xf32>
    %169 = arith.select %77, %167, %168 : vector<4x1xi1>, vector<4x1xf32>
    %c418_i32 = arith.constant 418 : i32
    %170 = tpu.dynamic_rotate %74 by %c418_i32 dim 1 : vector<4x512xf32>, i32 -> vector<4x512xf32>
    %171 = vector.extract_strided_slice %170 {offsets = [0, 0], sizes = [4, 256], strides = [1, 1]} : vector<4x512xf32> to vector<4x256xf32>
    %172 = vector.broadcast %169 : vector<4x1xf32> to vector<4x256xf32>
    %173 = arith.mulf %172, %171 : vector<4x256xf32>
    %174 = arith.addf %164, %173 : vector<4x256xf32>
    %c15 = arith.constant 15 : index
    %175 = memref.load %arg1[%c15] : memref<98xf32, #tpu.memory_space<smem>>
    %c64 = arith.constant 64 : index
    %176 = memref.load %arg1[%c64] : memref<98xf32, #tpu.memory_space<smem>>
    %177 = vector.broadcast %175 : f32 to vector<4x1xf32>
    %178 = vector.broadcast %176 : f32 to vector<4x1xf32>
    %179 = arith.select %77, %177, %178 : vector<4x1xi1>, vector<4x1xf32>
    %c402_i32 = arith.constant 402 : i32
    %180 = tpu.dynamic_rotate %74 by %c402_i32 dim 1 : vector<4x512xf32>, i32 -> vector<4x512xf32>
    %181 = vector.extract_strided_slice %180 {offsets = [0, 0], sizes = [4, 256], strides = [1, 1]} : vector<4x512xf32> to vector<4x256xf32>
    %182 = vector.broadcast %179 : vector<4x1xf32> to vector<4x256xf32>
    %183 = arith.mulf %182, %181 : vector<4x256xf32>
    %184 = arith.addf %174, %183 : vector<4x256xf32>
    %c22 = arith.constant 22 : index
    %185 = memref.load %arg1[%c22] : memref<98xf32, #tpu.memory_space<smem>>
    %c71 = arith.constant 71 : index
    %186 = memref.load %arg1[%c71] : memref<98xf32, #tpu.memory_space<smem>>
    %187 = vector.broadcast %185 : f32 to vector<4x1xf32>
    %188 = vector.broadcast %186 : f32 to vector<4x1xf32>
    %189 = arith.select %77, %187, %188 : vector<4x1xi1>, vector<4x1xf32>
    %c386_i32 = arith.constant 386 : i32
    %190 = tpu.dynamic_rotate %74 by %c386_i32 dim 1 : vector<4x512xf32>, i32 -> vector<4x512xf32>
    %191 = vector.extract_strided_slice %190 {offsets = [0, 0], sizes = [4, 256], strides = [1, 1]} : vector<4x512xf32> to vector<4x256xf32>
    %192 = vector.broadcast %189 : vector<4x1xf32> to vector<4x256xf32>
    %193 = arith.mulf %192, %191 : vector<4x256xf32>
    %194 = arith.addf %184, %193 : vector<4x256xf32>
    %c29 = arith.constant 29 : index
    %195 = memref.load %arg1[%c29] : memref<98xf32, #tpu.memory_space<smem>>
    %c78 = arith.constant 78 : index
    %196 = memref.load %arg1[%c78] : memref<98xf32, #tpu.memory_space<smem>>
    %197 = vector.broadcast %195 : f32 to vector<4x1xf32>
    %198 = vector.broadcast %196 : f32 to vector<4x1xf32>
    %199 = arith.select %77, %197, %198 : vector<4x1xi1>, vector<4x1xf32>
    %c370_i32 = arith.constant 370 : i32
    %200 = tpu.dynamic_rotate %74 by %c370_i32 dim 1 : vector<4x512xf32>, i32 -> vector<4x512xf32>
    %201 = vector.extract_strided_slice %200 {offsets = [0, 0], sizes = [4, 256], strides = [1, 1]} : vector<4x512xf32> to vector<4x256xf32>
    %202 = vector.broadcast %199 : vector<4x1xf32> to vector<4x256xf32>
    %203 = arith.mulf %202, %201 : vector<4x256xf32>
    %204 = arith.addf %194, %203 : vector<4x256xf32>
    %c36 = arith.constant 36 : index
    %205 = memref.load %arg1[%c36] : memref<98xf32, #tpu.memory_space<smem>>
    %c85 = arith.constant 85 : index
    %206 = memref.load %arg1[%c85] : memref<98xf32, #tpu.memory_space<smem>>
    %207 = vector.broadcast %205 : f32 to vector<4x1xf32>
    %208 = vector.broadcast %206 : f32 to vector<4x1xf32>
    %209 = arith.select %77, %207, %208 : vector<4x1xi1>, vector<4x1xf32>
    %c354_i32 = arith.constant 354 : i32
    %210 = tpu.dynamic_rotate %74 by %c354_i32 dim 1 : vector<4x512xf32>, i32 -> vector<4x512xf32>
    %211 = vector.extract_strided_slice %210 {offsets = [0, 0], sizes = [4, 256], strides = [1, 1]} : vector<4x512xf32> to vector<4x256xf32>
    %212 = vector.broadcast %209 : vector<4x1xf32> to vector<4x256xf32>
    %213 = arith.mulf %212, %211 : vector<4x256xf32>
    %214 = arith.addf %204, %213 : vector<4x256xf32>
    %c43 = arith.constant 43 : index
    %215 = memref.load %arg1[%c43] : memref<98xf32, #tpu.memory_space<smem>>
    %c92 = arith.constant 92 : index
    %216 = memref.load %arg1[%c92] : memref<98xf32, #tpu.memory_space<smem>>
    %217 = vector.broadcast %215 : f32 to vector<4x1xf32>
    %218 = vector.broadcast %216 : f32 to vector<4x1xf32>
    %219 = arith.select %77, %217, %218 : vector<4x1xi1>, vector<4x1xf32>
    %c338_i32 = arith.constant 338 : i32
    %220 = tpu.dynamic_rotate %74 by %c338_i32 dim 1 : vector<4x512xf32>, i32 -> vector<4x512xf32>
    %221 = vector.extract_strided_slice %220 {offsets = [0, 0], sizes = [4, 256], strides = [1, 1]} : vector<4x512xf32> to vector<4x256xf32>
    %222 = vector.broadcast %219 : vector<4x1xf32> to vector<4x256xf32>
    %223 = arith.mulf %222, %221 : vector<4x256xf32>
    %224 = arith.addf %214, %223 : vector<4x256xf32>
    %c1_48 = arith.constant 1 : index
    %c0_49 = arith.constant 0 : index
    %225 = vector.load %arg5[%c1_48, %c0_49] : memref<7x256xf32, #tpu.memory_space<vmem>>, vector<1x256xf32>
    %226 = vector.broadcast %225 : vector<1x256xf32> to vector<4x256xf32>
    %227 = arith.mulf %224, %226 : vector<4x256xf32>
    %228 = arith.addf %153, %227 : vector<4x256xf32>
    %cst_50 = arith.constant 0.000000e+00 : f32
    %229 = vector.broadcast %cst_50 : f32 to vector<4x256xf32>
    %c2_51 = arith.constant 2 : index
    %230 = memref.load %arg1[%c2_51] : memref<98xf32, #tpu.memory_space<smem>>
    %c51 = arith.constant 51 : index
    %231 = memref.load %arg1[%c51] : memref<98xf32, #tpu.memory_space<smem>>
    %232 = vector.broadcast %230 : f32 to vector<4x1xf32>
    %233 = vector.broadcast %231 : f32 to vector<4x1xf32>
    %234 = arith.select %77, %232, %233 : vector<4x1xi1>, vector<4x1xf32>
    %c433_i32 = arith.constant 433 : i32
    %235 = tpu.dynamic_rotate %74 by %c433_i32 dim 1 : vector<4x512xf32>, i32 -> vector<4x512xf32>
    %236 = vector.extract_strided_slice %235 {offsets = [0, 0], sizes = [4, 256], strides = [1, 1]} : vector<4x512xf32> to vector<4x256xf32>
    %237 = vector.broadcast %234 : vector<4x1xf32> to vector<4x256xf32>
    %238 = arith.mulf %237, %236 : vector<4x256xf32>
    %239 = arith.addf %229, %238 : vector<4x256xf32>
    %c9 = arith.constant 9 : index
    %240 = memref.load %arg1[%c9] : memref<98xf32, #tpu.memory_space<smem>>
    %c58 = arith.constant 58 : index
    %241 = memref.load %arg1[%c58] : memref<98xf32, #tpu.memory_space<smem>>
    %242 = vector.broadcast %240 : f32 to vector<4x1xf32>
    %243 = vector.broadcast %241 : f32 to vector<4x1xf32>
    %244 = arith.select %77, %242, %243 : vector<4x1xi1>, vector<4x1xf32>
    %c417_i32 = arith.constant 417 : i32
    %245 = tpu.dynamic_rotate %74 by %c417_i32 dim 1 : vector<4x512xf32>, i32 -> vector<4x512xf32>
    %246 = vector.extract_strided_slice %245 {offsets = [0, 0], sizes = [4, 256], strides = [1, 1]} : vector<4x512xf32> to vector<4x256xf32>
    %247 = vector.broadcast %244 : vector<4x1xf32> to vector<4x256xf32>
    %248 = arith.mulf %247, %246 : vector<4x256xf32>
    %249 = arith.addf %239, %248 : vector<4x256xf32>
    %c16 = arith.constant 16 : index
    %250 = memref.load %arg1[%c16] : memref<98xf32, #tpu.memory_space<smem>>
    %c65 = arith.constant 65 : index
    %251 = memref.load %arg1[%c65] : memref<98xf32, #tpu.memory_space<smem>>
    %252 = vector.broadcast %250 : f32 to vector<4x1xf32>
    %253 = vector.broadcast %251 : f32 to vector<4x1xf32>
    %254 = arith.select %77, %252, %253 : vector<4x1xi1>, vector<4x1xf32>
    %c401_i32 = arith.constant 401 : i32
    %255 = tpu.dynamic_rotate %74 by %c401_i32 dim 1 : vector<4x512xf32>, i32 -> vector<4x512xf32>
    %256 = vector.extract_strided_slice %255 {offsets = [0, 0], sizes = [4, 256], strides = [1, 1]} : vector<4x512xf32> to vector<4x256xf32>
    %257 = vector.broadcast %254 : vector<4x1xf32> to vector<4x256xf32>
    %258 = arith.mulf %257, %256 : vector<4x256xf32>
    %259 = arith.addf %249, %258 : vector<4x256xf32>
    %c23 = arith.constant 23 : index
    %260 = memref.load %arg1[%c23] : memref<98xf32, #tpu.memory_space<smem>>
    %c72 = arith.constant 72 : index
    %261 = memref.load %arg1[%c72] : memref<98xf32, #tpu.memory_space<smem>>
    %262 = vector.broadcast %260 : f32 to vector<4x1xf32>
    %263 = vector.broadcast %261 : f32 to vector<4x1xf32>
    %264 = arith.select %77, %262, %263 : vector<4x1xi1>, vector<4x1xf32>
    %c385_i32 = arith.constant 385 : i32
    %265 = tpu.dynamic_rotate %74 by %c385_i32 dim 1 : vector<4x512xf32>, i32 -> vector<4x512xf32>
    %266 = vector.extract_strided_slice %265 {offsets = [0, 0], sizes = [4, 256], strides = [1, 1]} : vector<4x512xf32> to vector<4x256xf32>
    %267 = vector.broadcast %264 : vector<4x1xf32> to vector<4x256xf32>
    %268 = arith.mulf %267, %266 : vector<4x256xf32>
    %269 = arith.addf %259, %268 : vector<4x256xf32>
    %c30 = arith.constant 30 : index
    %270 = memref.load %arg1[%c30] : memref<98xf32, #tpu.memory_space<smem>>
    %c79 = arith.constant 79 : index
    %271 = memref.load %arg1[%c79] : memref<98xf32, #tpu.memory_space<smem>>
    %272 = vector.broadcast %270 : f32 to vector<4x1xf32>
    %273 = vector.broadcast %271 : f32 to vector<4x1xf32>
    %274 = arith.select %77, %272, %273 : vector<4x1xi1>, vector<4x1xf32>
    %c369_i32 = arith.constant 369 : i32
    %275 = tpu.dynamic_rotate %74 by %c369_i32 dim 1 : vector<4x512xf32>, i32 -> vector<4x512xf32>
    %276 = vector.extract_strided_slice %275 {offsets = [0, 0], sizes = [4, 256], strides = [1, 1]} : vector<4x512xf32> to vector<4x256xf32>
    %277 = vector.broadcast %274 : vector<4x1xf32> to vector<4x256xf32>
    %278 = arith.mulf %277, %276 : vector<4x256xf32>
    %279 = arith.addf %269, %278 : vector<4x256xf32>
    %c37 = arith.constant 37 : index
    %280 = memref.load %arg1[%c37] : memref<98xf32, #tpu.memory_space<smem>>
    %c86 = arith.constant 86 : index
    %281 = memref.load %arg1[%c86] : memref<98xf32, #tpu.memory_space<smem>>
    %282 = vector.broadcast %280 : f32 to vector<4x1xf32>
    %283 = vector.broadcast %281 : f32 to vector<4x1xf32>
    %284 = arith.select %77, %282, %283 : vector<4x1xi1>, vector<4x1xf32>
    %c353_i32 = arith.constant 353 : i32
    %285 = tpu.dynamic_rotate %74 by %c353_i32 dim 1 : vector<4x512xf32>, i32 -> vector<4x512xf32>
    %286 = vector.extract_strided_slice %285 {offsets = [0, 0], sizes = [4, 256], strides = [1, 1]} : vector<4x512xf32> to vector<4x256xf32>
    %287 = vector.broadcast %284 : vector<4x1xf32> to vector<4x256xf32>
    %288 = arith.mulf %287, %286 : vector<4x256xf32>
    %289 = arith.addf %279, %288 : vector<4x256xf32>
    %c44 = arith.constant 44 : index
    %290 = memref.load %arg1[%c44] : memref<98xf32, #tpu.memory_space<smem>>
    %c93 = arith.constant 93 : index
    %291 = memref.load %arg1[%c93] : memref<98xf32, #tpu.memory_space<smem>>
    %292 = vector.broadcast %290 : f32 to vector<4x1xf32>
    %293 = vector.broadcast %291 : f32 to vector<4x1xf32>
    %294 = arith.select %77, %292, %293 : vector<4x1xi1>, vector<4x1xf32>
    %c337_i32 = arith.constant 337 : i32
    %295 = tpu.dynamic_rotate %74 by %c337_i32 dim 1 : vector<4x512xf32>, i32 -> vector<4x512xf32>
    %296 = vector.extract_strided_slice %295 {offsets = [0, 0], sizes = [4, 256], strides = [1, 1]} : vector<4x512xf32> to vector<4x256xf32>
    %297 = vector.broadcast %294 : vector<4x1xf32> to vector<4x256xf32>
    %298 = arith.mulf %297, %296 : vector<4x256xf32>
    %299 = arith.addf %289, %298 : vector<4x256xf32>
    %c2_52 = arith.constant 2 : index
    %c0_53 = arith.constant 0 : index
    %300 = vector.load %arg5[%c2_52, %c0_53] : memref<7x256xf32, #tpu.memory_space<vmem>>, vector<1x256xf32>
    %301 = vector.broadcast %300 : vector<1x256xf32> to vector<4x256xf32>
    %302 = arith.mulf %299, %301 : vector<4x256xf32>
    %303 = arith.addf %228, %302 : vector<4x256xf32>
    %cst_54 = arith.constant 0.000000e+00 : f32
    %304 = vector.broadcast %cst_54 : f32 to vector<4x256xf32>
    %c3_55 = arith.constant 3 : index
    %305 = memref.load %arg1[%c3_55] : memref<98xf32, #tpu.memory_space<smem>>
    %c52 = arith.constant 52 : index
    %306 = memref.load %arg1[%c52] : memref<98xf32, #tpu.memory_space<smem>>
    %307 = vector.broadcast %305 : f32 to vector<4x1xf32>
    %308 = vector.broadcast %306 : f32 to vector<4x1xf32>
    %309 = arith.select %77, %307, %308 : vector<4x1xi1>, vector<4x1xf32>
    %c432_i32 = arith.constant 432 : i32
    %310 = tpu.dynamic_rotate %74 by %c432_i32 dim 1 : vector<4x512xf32>, i32 -> vector<4x512xf32>
    %311 = vector.extract_strided_slice %310 {offsets = [0, 0], sizes = [4, 256], strides = [1, 1]} : vector<4x512xf32> to vector<4x256xf32>
    %312 = vector.broadcast %309 : vector<4x1xf32> to vector<4x256xf32>
    %313 = arith.mulf %312, %311 : vector<4x256xf32>
    %314 = arith.addf %304, %313 : vector<4x256xf32>
    %c10 = arith.constant 10 : index
    %315 = memref.load %arg1[%c10] : memref<98xf32, #tpu.memory_space<smem>>
    %c59 = arith.constant 59 : index
    %316 = memref.load %arg1[%c59] : memref<98xf32, #tpu.memory_space<smem>>
    %317 = vector.broadcast %315 : f32 to vector<4x1xf32>
    %318 = vector.broadcast %316 : f32 to vector<4x1xf32>
    %319 = arith.select %77, %317, %318 : vector<4x1xi1>, vector<4x1xf32>
    %c416_i32 = arith.constant 416 : i32
    %320 = tpu.dynamic_rotate %74 by %c416_i32 dim 1 : vector<4x512xf32>, i32 -> vector<4x512xf32>
    %321 = vector.extract_strided_slice %320 {offsets = [0, 0], sizes = [4, 256], strides = [1, 1]} : vector<4x512xf32> to vector<4x256xf32>
    %322 = vector.broadcast %319 : vector<4x1xf32> to vector<4x256xf32>
    %323 = arith.mulf %322, %321 : vector<4x256xf32>
    %324 = arith.addf %314, %323 : vector<4x256xf32>
    %c17 = arith.constant 17 : index
    %325 = memref.load %arg1[%c17] : memref<98xf32, #tpu.memory_space<smem>>
    %c66 = arith.constant 66 : index
    %326 = memref.load %arg1[%c66] : memref<98xf32, #tpu.memory_space<smem>>
    %327 = vector.broadcast %325 : f32 to vector<4x1xf32>
    %328 = vector.broadcast %326 : f32 to vector<4x1xf32>
    %329 = arith.select %77, %327, %328 : vector<4x1xi1>, vector<4x1xf32>
    %c400_i32 = arith.constant 400 : i32
    %330 = tpu.dynamic_rotate %74 by %c400_i32 dim 1 : vector<4x512xf32>, i32 -> vector<4x512xf32>
    %331 = vector.extract_strided_slice %330 {offsets = [0, 0], sizes = [4, 256], strides = [1, 1]} : vector<4x512xf32> to vector<4x256xf32>
    %332 = vector.broadcast %329 : vector<4x1xf32> to vector<4x256xf32>
    %333 = arith.mulf %332, %331 : vector<4x256xf32>
    %334 = arith.addf %324, %333 : vector<4x256xf32>
    %c24 = arith.constant 24 : index
    %335 = memref.load %arg1[%c24] : memref<98xf32, #tpu.memory_space<smem>>
    %c73 = arith.constant 73 : index
    %336 = memref.load %arg1[%c73] : memref<98xf32, #tpu.memory_space<smem>>
    %337 = vector.broadcast %335 : f32 to vector<4x1xf32>
    %338 = vector.broadcast %336 : f32 to vector<4x1xf32>
    %339 = arith.select %77, %337, %338 : vector<4x1xi1>, vector<4x1xf32>
    %c384_i32 = arith.constant 384 : i32
    %340 = tpu.dynamic_rotate %74 by %c384_i32 dim 1 : vector<4x512xf32>, i32 -> vector<4x512xf32>
    %341 = vector.extract_strided_slice %340 {offsets = [0, 0], sizes = [4, 256], strides = [1, 1]} : vector<4x512xf32> to vector<4x256xf32>
    %342 = vector.broadcast %339 : vector<4x1xf32> to vector<4x256xf32>
    %343 = arith.mulf %342, %341 : vector<4x256xf32>
    %344 = arith.addf %334, %343 : vector<4x256xf32>
    %c31 = arith.constant 31 : index
    %345 = memref.load %arg1[%c31] : memref<98xf32, #tpu.memory_space<smem>>
    %c80 = arith.constant 80 : index
    %346 = memref.load %arg1[%c80] : memref<98xf32, #tpu.memory_space<smem>>
    %347 = vector.broadcast %345 : f32 to vector<4x1xf32>
    %348 = vector.broadcast %346 : f32 to vector<4x1xf32>
    %349 = arith.select %77, %347, %348 : vector<4x1xi1>, vector<4x1xf32>
    %c368_i32 = arith.constant 368 : i32
    %350 = tpu.dynamic_rotate %74 by %c368_i32 dim 1 : vector<4x512xf32>, i32 -> vector<4x512xf32>
    %351 = vector.extract_strided_slice %350 {offsets = [0, 0], sizes = [4, 256], strides = [1, 1]} : vector<4x512xf32> to vector<4x256xf32>
    %352 = vector.broadcast %349 : vector<4x1xf32> to vector<4x256xf32>
    %353 = arith.mulf %352, %351 : vector<4x256xf32>
    %354 = arith.addf %344, %353 : vector<4x256xf32>
    %c38 = arith.constant 38 : index
    %355 = memref.load %arg1[%c38] : memref<98xf32, #tpu.memory_space<smem>>
    %c87 = arith.constant 87 : index
    %356 = memref.load %arg1[%c87] : memref<98xf32, #tpu.memory_space<smem>>
    %357 = vector.broadcast %355 : f32 to vector<4x1xf32>
    %358 = vector.broadcast %356 : f32 to vector<4x1xf32>
    %359 = arith.select %77, %357, %358 : vector<4x1xi1>, vector<4x1xf32>
    %c352_i32 = arith.constant 352 : i32
    %360 = tpu.dynamic_rotate %74 by %c352_i32 dim 1 : vector<4x512xf32>, i32 -> vector<4x512xf32>
    %361 = vector.extract_strided_slice %360 {offsets = [0, 0], sizes = [4, 256], strides = [1, 1]} : vector<4x512xf32> to vector<4x256xf32>
    %362 = vector.broadcast %359 : vector<4x1xf32> to vector<4x256xf32>
    %363 = arith.mulf %362, %361 : vector<4x256xf32>
    %364 = arith.addf %354, %363 : vector<4x256xf32>
    %c45 = arith.constant 45 : index
    %365 = memref.load %arg1[%c45] : memref<98xf32, #tpu.memory_space<smem>>
    %c94 = arith.constant 94 : index
    %366 = memref.load %arg1[%c94] : memref<98xf32, #tpu.memory_space<smem>>
    %367 = vector.broadcast %365 : f32 to vector<4x1xf32>
    %368 = vector.broadcast %366 : f32 to vector<4x1xf32>
    %369 = arith.select %77, %367, %368 : vector<4x1xi1>, vector<4x1xf32>
    %c336_i32 = arith.constant 336 : i32
    %370 = tpu.dynamic_rotate %74 by %c336_i32 dim 1 : vector<4x512xf32>, i32 -> vector<4x512xf32>
    %371 = vector.extract_strided_slice %370 {offsets = [0, 0], sizes = [4, 256], strides = [1, 1]} : vector<4x512xf32> to vector<4x256xf32>
    %372 = vector.broadcast %369 : vector<4x1xf32> to vector<4x256xf32>
    %373 = arith.mulf %372, %371 : vector<4x256xf32>
    %374 = arith.addf %364, %373 : vector<4x256xf32>
    %375 = arith.addf %303, %374 : vector<4x256xf32>
    %cst_56 = arith.constant 0.000000e+00 : f32
    %376 = vector.broadcast %cst_56 : f32 to vector<4x256xf32>
    %c4 = arith.constant 4 : index
    %377 = memref.load %arg1[%c4] : memref<98xf32, #tpu.memory_space<smem>>
    %c53 = arith.constant 53 : index
    %378 = memref.load %arg1[%c53] : memref<98xf32, #tpu.memory_space<smem>>
    %379 = vector.broadcast %377 : f32 to vector<4x1xf32>
    %380 = vector.broadcast %378 : f32 to vector<4x1xf32>
    %381 = arith.select %77, %379, %380 : vector<4x1xi1>, vector<4x1xf32>
    %c431_i32 = arith.constant 431 : i32
    %382 = tpu.dynamic_rotate %74 by %c431_i32 dim 1 : vector<4x512xf32>, i32 -> vector<4x512xf32>
    %383 = vector.extract_strided_slice %382 {offsets = [0, 0], sizes = [4, 256], strides = [1, 1]} : vector<4x512xf32> to vector<4x256xf32>
    %384 = vector.broadcast %381 : vector<4x1xf32> to vector<4x256xf32>
    %385 = arith.mulf %384, %383 : vector<4x256xf32>
    %386 = arith.addf %376, %385 : vector<4x256xf32>
    %c11 = arith.constant 11 : index
    %387 = memref.load %arg1[%c11] : memref<98xf32, #tpu.memory_space<smem>>
    %c60 = arith.constant 60 : index
    %388 = memref.load %arg1[%c60] : memref<98xf32, #tpu.memory_space<smem>>
    %389 = vector.broadcast %387 : f32 to vector<4x1xf32>
    %390 = vector.broadcast %388 : f32 to vector<4x1xf32>
    %391 = arith.select %77, %389, %390 : vector<4x1xi1>, vector<4x1xf32>
    %c415_i32 = arith.constant 415 : i32
    %392 = tpu.dynamic_rotate %74 by %c415_i32 dim 1 : vector<4x512xf32>, i32 -> vector<4x512xf32>
    %393 = vector.extract_strided_slice %392 {offsets = [0, 0], sizes = [4, 256], strides = [1, 1]} : vector<4x512xf32> to vector<4x256xf32>
    %394 = vector.broadcast %391 : vector<4x1xf32> to vector<4x256xf32>
    %395 = arith.mulf %394, %393 : vector<4x256xf32>
    %396 = arith.addf %386, %395 : vector<4x256xf32>
    %c18 = arith.constant 18 : index
    %397 = memref.load %arg1[%c18] : memref<98xf32, #tpu.memory_space<smem>>
    %c67 = arith.constant 67 : index
    %398 = memref.load %arg1[%c67] : memref<98xf32, #tpu.memory_space<smem>>
    %399 = vector.broadcast %397 : f32 to vector<4x1xf32>
    %400 = vector.broadcast %398 : f32 to vector<4x1xf32>
    %401 = arith.select %77, %399, %400 : vector<4x1xi1>, vector<4x1xf32>
    %c399_i32 = arith.constant 399 : i32
    %402 = tpu.dynamic_rotate %74 by %c399_i32 dim 1 : vector<4x512xf32>, i32 -> vector<4x512xf32>
    %403 = vector.extract_strided_slice %402 {offsets = [0, 0], sizes = [4, 256], strides = [1, 1]} : vector<4x512xf32> to vector<4x256xf32>
    %404 = vector.broadcast %401 : vector<4x1xf32> to vector<4x256xf32>
    %405 = arith.mulf %404, %403 : vector<4x256xf32>
    %406 = arith.addf %396, %405 : vector<4x256xf32>
    %c25 = arith.constant 25 : index
    %407 = memref.load %arg1[%c25] : memref<98xf32, #tpu.memory_space<smem>>
    %c74 = arith.constant 74 : index
    %408 = memref.load %arg1[%c74] : memref<98xf32, #tpu.memory_space<smem>>
    %409 = vector.broadcast %407 : f32 to vector<4x1xf32>
    %410 = vector.broadcast %408 : f32 to vector<4x1xf32>
    %411 = arith.select %77, %409, %410 : vector<4x1xi1>, vector<4x1xf32>
    %c383_i32 = arith.constant 383 : i32
    %412 = tpu.dynamic_rotate %74 by %c383_i32 dim 1 : vector<4x512xf32>, i32 -> vector<4x512xf32>
    %413 = vector.extract_strided_slice %412 {offsets = [0, 0], sizes = [4, 256], strides = [1, 1]} : vector<4x512xf32> to vector<4x256xf32>
    %414 = vector.broadcast %411 : vector<4x1xf32> to vector<4x256xf32>
    %415 = arith.mulf %414, %413 : vector<4x256xf32>
    %416 = arith.addf %406, %415 : vector<4x256xf32>
    %c32 = arith.constant 32 : index
    %417 = memref.load %arg1[%c32] : memref<98xf32, #tpu.memory_space<smem>>
    %c81 = arith.constant 81 : index
    %418 = memref.load %arg1[%c81] : memref<98xf32, #tpu.memory_space<smem>>
    %419 = vector.broadcast %417 : f32 to vector<4x1xf32>
    %420 = vector.broadcast %418 : f32 to vector<4x1xf32>
    %421 = arith.select %77, %419, %420 : vector<4x1xi1>, vector<4x1xf32>
    %c367_i32 = arith.constant 367 : i32
    %422 = tpu.dynamic_rotate %74 by %c367_i32 dim 1 : vector<4x512xf32>, i32 -> vector<4x512xf32>
    %423 = vector.extract_strided_slice %422 {offsets = [0, 0], sizes = [4, 256], strides = [1, 1]} : vector<4x512xf32> to vector<4x256xf32>
    %424 = vector.broadcast %421 : vector<4x1xf32> to vector<4x256xf32>
    %425 = arith.mulf %424, %423 : vector<4x256xf32>
    %426 = arith.addf %416, %425 : vector<4x256xf32>
    %c39 = arith.constant 39 : index
    %427 = memref.load %arg1[%c39] : memref<98xf32, #tpu.memory_space<smem>>
    %c88 = arith.constant 88 : index
    %428 = memref.load %arg1[%c88] : memref<98xf32, #tpu.memory_space<smem>>
    %429 = vector.broadcast %427 : f32 to vector<4x1xf32>
    %430 = vector.broadcast %428 : f32 to vector<4x1xf32>
    %431 = arith.select %77, %429, %430 : vector<4x1xi1>, vector<4x1xf32>
    %c351_i32 = arith.constant 351 : i32
    %432 = tpu.dynamic_rotate %74 by %c351_i32 dim 1 : vector<4x512xf32>, i32 -> vector<4x512xf32>
    %433 = vector.extract_strided_slice %432 {offsets = [0, 0], sizes = [4, 256], strides = [1, 1]} : vector<4x512xf32> to vector<4x256xf32>
    %434 = vector.broadcast %431 : vector<4x1xf32> to vector<4x256xf32>
    %435 = arith.mulf %434, %433 : vector<4x256xf32>
    %436 = arith.addf %426, %435 : vector<4x256xf32>
    %c46 = arith.constant 46 : index
    %437 = memref.load %arg1[%c46] : memref<98xf32, #tpu.memory_space<smem>>
    %c95 = arith.constant 95 : index
    %438 = memref.load %arg1[%c95] : memref<98xf32, #tpu.memory_space<smem>>
    %439 = vector.broadcast %437 : f32 to vector<4x1xf32>
    %440 = vector.broadcast %438 : f32 to vector<4x1xf32>
    %441 = arith.select %77, %439, %440 : vector<4x1xi1>, vector<4x1xf32>
    %c335_i32 = arith.constant 335 : i32
    %442 = tpu.dynamic_rotate %74 by %c335_i32 dim 1 : vector<4x512xf32>, i32 -> vector<4x512xf32>
    %443 = vector.extract_strided_slice %442 {offsets = [0, 0], sizes = [4, 256], strides = [1, 1]} : vector<4x512xf32> to vector<4x256xf32>
    %444 = vector.broadcast %441 : vector<4x1xf32> to vector<4x256xf32>
    %445 = arith.mulf %444, %443 : vector<4x256xf32>
    %446 = arith.addf %436, %445 : vector<4x256xf32>
    %c4_57 = arith.constant 4 : index
    %c0_58 = arith.constant 0 : index
    %447 = vector.load %arg5[%c4_57, %c0_58] : memref<7x256xf32, #tpu.memory_space<vmem>>, vector<1x256xf32>
    %448 = vector.broadcast %447 : vector<1x256xf32> to vector<4x256xf32>
    %449 = arith.mulf %446, %448 : vector<4x256xf32>
    %450 = arith.addf %375, %449 : vector<4x256xf32>
    %cst_59 = arith.constant 0.000000e+00 : f32
    %451 = vector.broadcast %cst_59 : f32 to vector<4x256xf32>
    %c5 = arith.constant 5 : index
    %452 = memref.load %arg1[%c5] : memref<98xf32, #tpu.memory_space<smem>>
    %c54 = arith.constant 54 : index
    %453 = memref.load %arg1[%c54] : memref<98xf32, #tpu.memory_space<smem>>
    %454 = vector.broadcast %452 : f32 to vector<4x1xf32>
    %455 = vector.broadcast %453 : f32 to vector<4x1xf32>
    %456 = arith.select %77, %454, %455 : vector<4x1xi1>, vector<4x1xf32>
    %c430_i32 = arith.constant 430 : i32
    %457 = tpu.dynamic_rotate %74 by %c430_i32 dim 1 : vector<4x512xf32>, i32 -> vector<4x512xf32>
    %458 = vector.extract_strided_slice %457 {offsets = [0, 0], sizes = [4, 256], strides = [1, 1]} : vector<4x512xf32> to vector<4x256xf32>
    %459 = vector.broadcast %456 : vector<4x1xf32> to vector<4x256xf32>
    %460 = arith.mulf %459, %458 : vector<4x256xf32>
    %461 = arith.addf %451, %460 : vector<4x256xf32>
    %c12 = arith.constant 12 : index
    %462 = memref.load %arg1[%c12] : memref<98xf32, #tpu.memory_space<smem>>
    %c61 = arith.constant 61 : index
    %463 = memref.load %arg1[%c61] : memref<98xf32, #tpu.memory_space<smem>>
    %464 = vector.broadcast %462 : f32 to vector<4x1xf32>
    %465 = vector.broadcast %463 : f32 to vector<4x1xf32>
    %466 = arith.select %77, %464, %465 : vector<4x1xi1>, vector<4x1xf32>
    %c414_i32 = arith.constant 414 : i32
    %467 = tpu.dynamic_rotate %74 by %c414_i32 dim 1 : vector<4x512xf32>, i32 -> vector<4x512xf32>
    %468 = vector.extract_strided_slice %467 {offsets = [0, 0], sizes = [4, 256], strides = [1, 1]} : vector<4x512xf32> to vector<4x256xf32>
    %469 = vector.broadcast %466 : vector<4x1xf32> to vector<4x256xf32>
    %470 = arith.mulf %469, %468 : vector<4x256xf32>
    %471 = arith.addf %461, %470 : vector<4x256xf32>
    %c19 = arith.constant 19 : index
    %472 = memref.load %arg1[%c19] : memref<98xf32, #tpu.memory_space<smem>>
    %c68 = arith.constant 68 : index
    %473 = memref.load %arg1[%c68] : memref<98xf32, #tpu.memory_space<smem>>
    %474 = vector.broadcast %472 : f32 to vector<4x1xf32>
    %475 = vector.broadcast %473 : f32 to vector<4x1xf32>
    %476 = arith.select %77, %474, %475 : vector<4x1xi1>, vector<4x1xf32>
    %c398_i32 = arith.constant 398 : i32
    %477 = tpu.dynamic_rotate %74 by %c398_i32 dim 1 : vector<4x512xf32>, i32 -> vector<4x512xf32>
    %478 = vector.extract_strided_slice %477 {offsets = [0, 0], sizes = [4, 256], strides = [1, 1]} : vector<4x512xf32> to vector<4x256xf32>
    %479 = vector.broadcast %476 : vector<4x1xf32> to vector<4x256xf32>
    %480 = arith.mulf %479, %478 : vector<4x256xf32>
    %481 = arith.addf %471, %480 : vector<4x256xf32>
    %c26 = arith.constant 26 : index
    %482 = memref.load %arg1[%c26] : memref<98xf32, #tpu.memory_space<smem>>
    %c75 = arith.constant 75 : index
    %483 = memref.load %arg1[%c75] : memref<98xf32, #tpu.memory_space<smem>>
    %484 = vector.broadcast %482 : f32 to vector<4x1xf32>
    %485 = vector.broadcast %483 : f32 to vector<4x1xf32>
    %486 = arith.select %77, %484, %485 : vector<4x1xi1>, vector<4x1xf32>
    %c382_i32 = arith.constant 382 : i32
    %487 = tpu.dynamic_rotate %74 by %c382_i32 dim 1 : vector<4x512xf32>, i32 -> vector<4x512xf32>
    %488 = vector.extract_strided_slice %487 {offsets = [0, 0], sizes = [4, 256], strides = [1, 1]} : vector<4x512xf32> to vector<4x256xf32>
    %489 = vector.broadcast %486 : vector<4x1xf32> to vector<4x256xf32>
    %490 = arith.mulf %489, %488 : vector<4x256xf32>
    %491 = arith.addf %481, %490 : vector<4x256xf32>
    %c33 = arith.constant 33 : index
    %492 = memref.load %arg1[%c33] : memref<98xf32, #tpu.memory_space<smem>>
    %c82 = arith.constant 82 : index
    %493 = memref.load %arg1[%c82] : memref<98xf32, #tpu.memory_space<smem>>
    %494 = vector.broadcast %492 : f32 to vector<4x1xf32>
    %495 = vector.broadcast %493 : f32 to vector<4x1xf32>
    %496 = arith.select %77, %494, %495 : vector<4x1xi1>, vector<4x1xf32>
    %c366_i32 = arith.constant 366 : i32
    %497 = tpu.dynamic_rotate %74 by %c366_i32 dim 1 : vector<4x512xf32>, i32 -> vector<4x512xf32>
    %498 = vector.extract_strided_slice %497 {offsets = [0, 0], sizes = [4, 256], strides = [1, 1]} : vector<4x512xf32> to vector<4x256xf32>
    %499 = vector.broadcast %496 : vector<4x1xf32> to vector<4x256xf32>
    %500 = arith.mulf %499, %498 : vector<4x256xf32>
    %501 = arith.addf %491, %500 : vector<4x256xf32>
    %c40 = arith.constant 40 : index
    %502 = memref.load %arg1[%c40] : memref<98xf32, #tpu.memory_space<smem>>
    %c89 = arith.constant 89 : index
    %503 = memref.load %arg1[%c89] : memref<98xf32, #tpu.memory_space<smem>>
    %504 = vector.broadcast %502 : f32 to vector<4x1xf32>
    %505 = vector.broadcast %503 : f32 to vector<4x1xf32>
    %506 = arith.select %77, %504, %505 : vector<4x1xi1>, vector<4x1xf32>
    %c350_i32 = arith.constant 350 : i32
    %507 = tpu.dynamic_rotate %74 by %c350_i32 dim 1 : vector<4x512xf32>, i32 -> vector<4x512xf32>
    %508 = vector.extract_strided_slice %507 {offsets = [0, 0], sizes = [4, 256], strides = [1, 1]} : vector<4x512xf32> to vector<4x256xf32>
    %509 = vector.broadcast %506 : vector<4x1xf32> to vector<4x256xf32>
    %510 = arith.mulf %509, %508 : vector<4x256xf32>
    %511 = arith.addf %501, %510 : vector<4x256xf32>
    %c47 = arith.constant 47 : index
    %512 = memref.load %arg1[%c47] : memref<98xf32, #tpu.memory_space<smem>>
    %c96 = arith.constant 96 : index
    %513 = memref.load %arg1[%c96] : memref<98xf32, #tpu.memory_space<smem>>
    %514 = vector.broadcast %512 : f32 to vector<4x1xf32>
    %515 = vector.broadcast %513 : f32 to vector<4x1xf32>
    %516 = arith.select %77, %514, %515 : vector<4x1xi1>, vector<4x1xf32>
    %c334_i32 = arith.constant 334 : i32
    %517 = tpu.dynamic_rotate %74 by %c334_i32 dim 1 : vector<4x512xf32>, i32 -> vector<4x512xf32>
    %518 = vector.extract_strided_slice %517 {offsets = [0, 0], sizes = [4, 256], strides = [1, 1]} : vector<4x512xf32> to vector<4x256xf32>
    %519 = vector.broadcast %516 : vector<4x1xf32> to vector<4x256xf32>
    %520 = arith.mulf %519, %518 : vector<4x256xf32>
    %521 = arith.addf %511, %520 : vector<4x256xf32>
    %c5_60 = arith.constant 5 : index
    %c0_61 = arith.constant 0 : index
    %522 = vector.load %arg5[%c5_60, %c0_61] : memref<7x256xf32, #tpu.memory_space<vmem>>, vector<1x256xf32>
    %523 = vector.broadcast %522 : vector<1x256xf32> to vector<4x256xf32>
    %524 = arith.mulf %521, %523 : vector<4x256xf32>
    %525 = arith.addf %450, %524 : vector<4x256xf32>
    %cst_62 = arith.constant 0.000000e+00 : f32
    %526 = vector.broadcast %cst_62 : f32 to vector<4x256xf32>
    %c6 = arith.constant 6 : index
    %527 = memref.load %arg1[%c6] : memref<98xf32, #tpu.memory_space<smem>>
    %c55 = arith.constant 55 : index
    %528 = memref.load %arg1[%c55] : memref<98xf32, #tpu.memory_space<smem>>
    %529 = vector.broadcast %527 : f32 to vector<4x1xf32>
    %530 = vector.broadcast %528 : f32 to vector<4x1xf32>
    %531 = arith.select %77, %529, %530 : vector<4x1xi1>, vector<4x1xf32>
    %c429_i32 = arith.constant 429 : i32
    %532 = tpu.dynamic_rotate %74 by %c429_i32 dim 1 : vector<4x512xf32>, i32 -> vector<4x512xf32>
    %533 = vector.extract_strided_slice %532 {offsets = [0, 0], sizes = [4, 256], strides = [1, 1]} : vector<4x512xf32> to vector<4x256xf32>
    %534 = vector.broadcast %531 : vector<4x1xf32> to vector<4x256xf32>
    %535 = arith.mulf %534, %533 : vector<4x256xf32>
    %536 = arith.addf %526, %535 : vector<4x256xf32>
    %c13 = arith.constant 13 : index
    %537 = memref.load %arg1[%c13] : memref<98xf32, #tpu.memory_space<smem>>
    %c62 = arith.constant 62 : index
    %538 = memref.load %arg1[%c62] : memref<98xf32, #tpu.memory_space<smem>>
    %539 = vector.broadcast %537 : f32 to vector<4x1xf32>
    %540 = vector.broadcast %538 : f32 to vector<4x1xf32>
    %541 = arith.select %77, %539, %540 : vector<4x1xi1>, vector<4x1xf32>
    %c413_i32 = arith.constant 413 : i32
    %542 = tpu.dynamic_rotate %74 by %c413_i32 dim 1 : vector<4x512xf32>, i32 -> vector<4x512xf32>
    %543 = vector.extract_strided_slice %542 {offsets = [0, 0], sizes = [4, 256], strides = [1, 1]} : vector<4x512xf32> to vector<4x256xf32>
    %544 = vector.broadcast %541 : vector<4x1xf32> to vector<4x256xf32>
    %545 = arith.mulf %544, %543 : vector<4x256xf32>
    %546 = arith.addf %536, %545 : vector<4x256xf32>
    %c20 = arith.constant 20 : index
    %547 = memref.load %arg1[%c20] : memref<98xf32, #tpu.memory_space<smem>>
    %c69 = arith.constant 69 : index
    %548 = memref.load %arg1[%c69] : memref<98xf32, #tpu.memory_space<smem>>
    %549 = vector.broadcast %547 : f32 to vector<4x1xf32>
    %550 = vector.broadcast %548 : f32 to vector<4x1xf32>
    %551 = arith.select %77, %549, %550 : vector<4x1xi1>, vector<4x1xf32>
    %c397_i32 = arith.constant 397 : i32
    %552 = tpu.dynamic_rotate %74 by %c397_i32 dim 1 : vector<4x512xf32>, i32 -> vector<4x512xf32>
    %553 = vector.extract_strided_slice %552 {offsets = [0, 0], sizes = [4, 256], strides = [1, 1]} : vector<4x512xf32> to vector<4x256xf32>
    %554 = vector.broadcast %551 : vector<4x1xf32> to vector<4x256xf32>
    %555 = arith.mulf %554, %553 : vector<4x256xf32>
    %556 = arith.addf %546, %555 : vector<4x256xf32>
    %c27 = arith.constant 27 : index
    %557 = memref.load %arg1[%c27] : memref<98xf32, #tpu.memory_space<smem>>
    %c76 = arith.constant 76 : index
    %558 = memref.load %arg1[%c76] : memref<98xf32, #tpu.memory_space<smem>>
    %559 = vector.broadcast %557 : f32 to vector<4x1xf32>
    %560 = vector.broadcast %558 : f32 to vector<4x1xf32>
    %561 = arith.select %77, %559, %560 : vector<4x1xi1>, vector<4x1xf32>
    %c381_i32 = arith.constant 381 : i32
    %562 = tpu.dynamic_rotate %74 by %c381_i32 dim 1 : vector<4x512xf32>, i32 -> vector<4x512xf32>
    %563 = vector.extract_strided_slice %562 {offsets = [0, 0], sizes = [4, 256], strides = [1, 1]} : vector<4x512xf32> to vector<4x256xf32>
    %564 = vector.broadcast %561 : vector<4x1xf32> to vector<4x256xf32>
    %565 = arith.mulf %564, %563 : vector<4x256xf32>
    %566 = arith.addf %556, %565 : vector<4x256xf32>
    %c34 = arith.constant 34 : index
    %567 = memref.load %arg1[%c34] : memref<98xf32, #tpu.memory_space<smem>>
    %c83 = arith.constant 83 : index
    %568 = memref.load %arg1[%c83] : memref<98xf32, #tpu.memory_space<smem>>
    %569 = vector.broadcast %567 : f32 to vector<4x1xf32>
    %570 = vector.broadcast %568 : f32 to vector<4x1xf32>
    %571 = arith.select %77, %569, %570 : vector<4x1xi1>, vector<4x1xf32>
    %c365_i32 = arith.constant 365 : i32
    %572 = tpu.dynamic_rotate %74 by %c365_i32 dim 1 : vector<4x512xf32>, i32 -> vector<4x512xf32>
    %573 = vector.extract_strided_slice %572 {offsets = [0, 0], sizes = [4, 256], strides = [1, 1]} : vector<4x512xf32> to vector<4x256xf32>
    %574 = vector.broadcast %571 : vector<4x1xf32> to vector<4x256xf32>
    %575 = arith.mulf %574, %573 : vector<4x256xf32>
    %576 = arith.addf %566, %575 : vector<4x256xf32>
    %c41 = arith.constant 41 : index
    %577 = memref.load %arg1[%c41] : memref<98xf32, #tpu.memory_space<smem>>
    %c90 = arith.constant 90 : index
    %578 = memref.load %arg1[%c90] : memref<98xf32, #tpu.memory_space<smem>>
    %579 = vector.broadcast %577 : f32 to vector<4x1xf32>
    %580 = vector.broadcast %578 : f32 to vector<4x1xf32>
    %581 = arith.select %77, %579, %580 : vector<4x1xi1>, vector<4x1xf32>
    %c349_i32 = arith.constant 349 : i32
    %582 = tpu.dynamic_rotate %74 by %c349_i32 dim 1 : vector<4x512xf32>, i32 -> vector<4x512xf32>
    %583 = vector.extract_strided_slice %582 {offsets = [0, 0], sizes = [4, 256], strides = [1, 1]} : vector<4x512xf32> to vector<4x256xf32>
    %584 = vector.broadcast %581 : vector<4x1xf32> to vector<4x256xf32>
    %585 = arith.mulf %584, %583 : vector<4x256xf32>
    %586 = arith.addf %576, %585 : vector<4x256xf32>
    %c48 = arith.constant 48 : index
    %587 = memref.load %arg1[%c48] : memref<98xf32, #tpu.memory_space<smem>>
    %c97 = arith.constant 97 : index
    %588 = memref.load %arg1[%c97] : memref<98xf32, #tpu.memory_space<smem>>
    %589 = vector.broadcast %587 : f32 to vector<4x1xf32>
    %590 = vector.broadcast %588 : f32 to vector<4x1xf32>
    %591 = arith.select %77, %589, %590 : vector<4x1xi1>, vector<4x1xf32>
    %c333_i32 = arith.constant 333 : i32
    %592 = tpu.dynamic_rotate %74 by %c333_i32 dim 1 : vector<4x512xf32>, i32 -> vector<4x512xf32>
    %593 = vector.extract_strided_slice %592 {offsets = [0, 0], sizes = [4, 256], strides = [1, 1]} : vector<4x512xf32> to vector<4x256xf32>
    %594 = vector.broadcast %591 : vector<4x1xf32> to vector<4x256xf32>
    %595 = arith.mulf %594, %593 : vector<4x256xf32>
    %596 = arith.addf %586, %595 : vector<4x256xf32>
    %c6_63 = arith.constant 6 : index
    %c0_64 = arith.constant 0 : index
    %597 = vector.load %arg5[%c6_63, %c0_64] : memref<7x256xf32, #tpu.memory_space<vmem>>, vector<1x256xf32>
    %598 = vector.broadcast %597 : vector<1x256xf32> to vector<4x256xf32>
    %599 = arith.mulf %596, %598 : vector<4x256xf32>
    %600 = arith.addf %525, %599 : vector<4x256xf32>
    %601 = vector.extract_strided_slice %600 {offsets = [0, 0], sizes = [2, 256], strides = [1, 1]} : vector<4x256xf32> to vector<2x256xf32>
    %602 = vector.extract_strided_slice %600 {offsets = [2, 0], sizes = [2, 256], strides = [1, 1]} : vector<4x256xf32> to vector<2x256xf32>
    %603 = arith.addf %601, %602 : vector<2x256xf32>
    %cst_65 = arith.constant 0.000000e+00 : f32
    %604 = vector.broadcast %cst_65 : f32 to vector<2x256xf32>
    %605 = arith.subf %604, %603 : vector<2x256xf32>
    %606 = math.exp %605 : vector<2x256xf32>
    %cst_66 = arith.constant 1.000000e+00 : f32
    %607 = vector.broadcast %cst_66 : f32 to vector<2x256xf32>
    %608 = arith.addf %607, %606 : vector<2x256xf32>
    %609 = tpu.reciprocal %608 {approx = true} : vector<2x256xf32> -> vector<2x256xf32>
    %c0_67 = arith.constant 0 : index
    %c0_68 = arith.constant 0 : index
    %c0_69 = arith.constant 0 : index
    %610 = vector.load %arg2[%c0_67, %c0_68, %c0_69] : memref<2x32x256xf32, #tpu.memory_space<vmem>>, vector<1x32x256xf32>
    %611 = vector.shape_cast %610 : vector<1x32x256xf32> to vector<32x256xf32>
    %612 = vector.broadcast %22 : vector<32x1xf32> to vector<32x256xf32>
    %613 = arith.mulf %611, %612 : vector<32x256xf32>
    %614 = vector.extract_strided_slice %609 {offsets = [0, 0], sizes = [1, 256], strides = [1, 1]} : vector<2x256xf32> to vector<1x256xf32>
    %615 = vector.shape_cast %614 : vector<1x256xf32> to vector<256xf32>
    %616 = vector.shape_cast %615 : vector<256xf32> to vector<1x256xf32>
    %617 = vector.broadcast %616 : vector<1x256xf32> to vector<32x256xf32>
    %618 = arith.mulf %613, %617 : vector<32x256xf32>
    %c0_70 = arith.constant 0 : index
    %c0_71 = arith.constant 0 : index
    %c0_72 = arith.constant 0 : index
    %619 = vector.load %arg6[%c0_70, %c0_71, %c0_72] : memref<2x32x256xf32, #tpu.memory_space<vmem>>, vector<1x32x256xf32>
    %620 = vector.shape_cast %619 : vector<1x32x256xf32> to vector<32x256xf32>
    %621 = vector.shape_cast %618 : vector<32x256xf32> to vector<1x32x256xf32>
    tpu.vector_store %arg6[%c0_70, %c0_71, %c0_72], %621 {strides = array<i32>} : memref<2x32x256xf32, #tpu.memory_space<vmem>>, vector<1x32x256xf32>,
    %c1_73 = arith.constant 1 : index
    %c0_74 = arith.constant 0 : index
    %c0_75 = arith.constant 0 : index
    %622 = vector.load %arg2[%c1_73, %c0_74, %c0_75] : memref<2x32x256xf32, #tpu.memory_space<vmem>>, vector<1x32x256xf32>
    %623 = vector.shape_cast %622 : vector<1x32x256xf32> to vector<32x256xf32>
    %624 = vector.broadcast %57 : vector<32x1xf32> to vector<32x256xf32>
    %625 = arith.mulf %623, %624 : vector<32x256xf32>
    %626 = vector.extract_strided_slice %609 {offsets = [1, 0], sizes = [1, 256], strides = [1, 1]} : vector<2x256xf32> to vector<1x256xf32>
    %627 = vector.shape_cast %626 : vector<1x256xf32> to vector<256xf32>
    %628 = vector.shape_cast %627 : vector<256xf32> to vector<1x256xf32>
    %629 = vector.broadcast %628 : vector<1x256xf32> to vector<32x256xf32>
    %630 = arith.mulf %625, %629 : vector<32x256xf32>
    %c1_76 = arith.constant 1 : index
    %c0_77 = arith.constant 0 : index
    %c0_78 = arith.constant 0 : index
    %631 = vector.load %arg6[%c1_76, %c0_77, %c0_78] : memref<2x32x256xf32, #tpu.memory_space<vmem>>, vector<1x32x256xf32>
    %632 = vector.shape_cast %631 : vector<1x32x256xf32> to vector<32x256xf32>
    %633 = vector.shape_cast %630 : vector<32x256xf32> to vector<1x32x256xf32>
    tpu.vector_store %arg6[%c1_76, %c0_77, %c0_78], %633 {strides = array<i32>} : memref<2x32x256xf32, #tpu.memory_space<vmem>>, vector<1x32x256xf32>,
    return
  }
  func.func @transform_0(%arg0: i32) -> i32 {
    %c0_i32 = arith.constant 0 : i32
    %c0_i32_0 = arith.constant 0 : i32
    return %c0_i32 : i32
  }
  func.func @transform_1(%arg0: i32) -> (i32, i32, i32) {
    %c0_i32 = arith.constant 0 : i32
    %c0_i32_0 = arith.constant 0 : i32
    %c0_i32_1 = arith.constant 0 : i32
    return %arg0, %c0_i32, %c0_i32_0 : i32, i32, i32
  }
  func.func @transform_2(%arg0: i32) -> (i32, i32) {
    %c0_i32 = arith.constant 0 : i32
    %c0_i32_0 = arith.constant 0 : i32
    %c0_i32_1 = arith.constant 0 : i32
    return %c0_i32, %c0_i32_0 : i32, i32
  }
  func.func @transform_3(%arg0: i32) -> (i32, i32) {
    %c0_i32 = arith.constant 0 : i32
    %c0_i32_0 = arith.constant 0 : i32
    %c0_i32_1 = arith.constant 0 : i32
    return %c0_i32, %c0_i32_0 : i32, i32
  }
  func.func @transform_4(%arg0: i32) -> (i32, i32) {
    %c0_i32 = arith.constant 0 : i32
    %c0_i32_0 = arith.constant 0 : i32
    %c0_i32_1 = arith.constant 0 : i32
    return %c0_i32, %c0_i32_0 : i32, i32
  }
  func.func @transform_5(%arg0: i32) -> (i32, i32, i32) {
    %c0_i32 = arith.constant 0 : i32
    %c0_i32_0 = arith.constant 0 : i32
    %c0_i32_1 = arith.constant 0 : i32
    return %arg0, %c0_i32, %c0_i32_0 : i32, i32, i32
  }
}

</mosaic_0001>

<llo_original>
// kernel: tpu_custom_call.1
$region0: #{tpu_custom_call.1}
  #allocation0 [shape = 'u32[]', space=smem, size = 0x4, offset = 0x4, fixed_abs, tag = 'smem constant byte address 0x4 - core index']
  #allocation1 [shape = 'u32[72,128]{1,0:T(1,128)}', space=vmem, size = 0x9000, scoped, tag = 'internal scratch']
  #allocation2 [shape = 'f32[4,512]{1,0:T(4,128)}', space=vmem, size = 0x2000, scoped, tag = 'scratch operand']
  %s0 = inlined_call_operand.vmem [shape: f32[98], index: 0, kind: input, shape index: {}]
  %s1 = inlined_call_operand.hbm [shape: f32[2,32,256], index: 1, kind: input, shape index: {}]
  %s2 = inlined_call_operand.vmem [shape: f32[32,2], index: 2, kind: input, shape index: {}]
  %s3 = inlined_call_operand.vmem [shape: f32[32,2], index: 3, kind: input, shape index: {}]
  %s4 = inlined_call_operand.vmem [shape: f32[7,256], index: 4, kind: input, shape index: {}]
  %s5 = inlined_call_operand.hbm [shape: f32[2,32,256], index: 5, kind: output, shape index: {}]
  %s6 = sld [smem:[#allocation0]]
  $region38: #{tpu_custom_call.1} parent=0
    _
  %s8 = ssub.s32 1, %s6
  %s9 = scalar_select 0, %s8, %s6
  $region1: #{tpu_custom_call.1} parent=0
    #allocation3 [shape = 'u8[512]{0}', space=smem, size = 0x200, scoped, tag = 'input window, operand 0, single buffered']
    #allocation4 [shape = 's32[1]{0}', space=sflag, size = 0x4, scoped, tag = 'scoped memory for tpu_custom_call.1']
    #allocation5 [shape = 's32[1]{0}', space=sflag, size = 0x4, scoped, tag = 'scoped memory for tpu_custom_call.1']
    #allocation6 [shape = 's32[1]{0}', space=sflag, size = 0x4, scoped, tag = 'scoped memory for tpu_custom_call.1']
    #allocation7 [shape = 'u8[65536]{0}', space=vmem, size = 0x10000, scoped, tag = 'input window, operand 1, single buffered']
    #allocation8 [shape = 'u8[65536]{0}', space=vmem, size = 0x10000, scoped, tag = 'output window, operand 0, single buffered']
    %10 = vsyncpa [#allocation6], 0
    %11 = vsyncpa [#allocation4], 0
    %12 = vsyncpa [#allocation5], 0
    // Predicated region
    $region2: #{tpu_custom_call.1} parent=1 // pred_check
      _
    $region3: #{tpu_custom_call.1} parent=1 // pred_check_branch
      %14 = sbr.rel (0) target = $region5
    $region4: #{tpu_custom_call.1} parent=1 // pred_region
      %16 = vsyncadd [#allocation6], 0
      %s18 = sshll.u32 %s0, 4
      %s19 = int_to_ptr.vmem [resolvable:$true] %s18
      %21 = dma.vmem_to_smem %s19, 16, [#allocation3], [#allocation6]
    $region5: #{tpu_custom_call.1} parent=1 // pred_fallthru
      _
    // Predicated region
    $region6: #{tpu_custom_call.1} parent=1 // pred_check
      _
    $region7: #{tpu_custom_call.1} parent=1 // pred_check_branch
      %23 = sbr.rel (0) target = $region9
    $region8: #{tpu_custom_call.1} parent=1 // pred_region
      %25 = vsyncadd [#allocation4], 0
      %s26 = sshll.u32 %s1, 4
      %s27 = int_to_ptr.hbm [resolvable:$true] %s26
      %s28 = sshll.u32 [#allocation7], 4
      %s29 = int_to_ptr.vmem [resolvable:$true] %s28
      %34 = dma.hbm_to_vmem [thread:$0]  %s27, 2048, %s29, [#allocation4], 256, 256, 16
    $region9: #{tpu_custom_call.1} parent=1 // pred_fallthru
      _
    // Predicated region
    $region10: #{tpu_custom_call.1} parent=1 // pred_check
      _
    $region11: #{tpu_custom_call.1} parent=1 // pred_check_branch
      %36 = sbr.rel (0) target = $region13
    $region12: #{tpu_custom_call.1} parent=1 // pred_region
      _
    $region13: #{tpu_custom_call.1} parent=1 // pred_fallthru
      _
    // Predicated region
    $region14: #{tpu_custom_call.1} parent=1 // pred_check
      _
    $region15: #{tpu_custom_call.1} parent=1 // pred_check_branch
      %38 = sbr.rel (0) target = $region17
    $region16: #{tpu_custom_call.1} parent=1 // pred_region
      _
    $region17: #{tpu_custom_call.1} parent=1 // pred_fallthru
      _
    // Predicated region
    $region18: #{tpu_custom_call.1} parent=1 // pred_check
      _
    $region19: #{tpu_custom_call.1} parent=1 // pred_check_branch
      %40 = sbr.rel (0) target = $region21
    $region20: #{tpu_custom_call.1} parent=1 // pred_region
      _
    $region21: #{tpu_custom_call.1} parent=1 // pred_fallthru
      _
    // Predicated region
    $region22: #{tpu_custom_call.1} parent=1 // pred_check
      _
    $region23: #{tpu_custom_call.1} parent=1 // pred_check_branch
      %42 = sbr.rel (0) target = $region25
    $region24: #{tpu_custom_call.1} parent=1 // pred_region
      %44 = dma.done [#allocation6], 16
    $region25: #{tpu_custom_call.1} parent=1 // pred_fallthru
      _
    // Predicated region
    $region26: #{tpu_custom_call.1} parent=1 // pred_check
      _
    $region27: #{tpu_custom_call.1} parent=1 // pred_check_branch
      %46 = sbr.rel (0) target = $region29
    $region28: #{tpu_custom_call.1} parent=1 // pred_region
      %48 = dma.done [#allocation4], 2048
    $region29: #{tpu_custom_call.1} parent=1 // pred_fallthru
      _
    %49 = sfence
    %v50 = vld [vmem:[#allocation7] sm:$0xff]
    %v51 = vld [vmem:[#allocation7 + $0x8] sm:$0xff]
    %v52 = vld [vmem:[#allocation7 + $0x10] sm:$0xff]
    %v53 = vld [vmem:[#allocation7 + $0x18] sm:$0xff]
    %v54 = vld [vmem:[#allocation7 + $0x20] sm:$0xff]
    %v55 = vld [vmem:[#allocation7 + $0x28] sm:$0xff]
    %v56 = vld [vmem:[#allocation7 + $0x30] sm:$0xff]
    %v57 = vld [vmem:[#allocation7 + $0x38] sm:$0xff]
    %v58 = vadd.f32 %v50, %v51
    %59 = vadd.xlane.f32.xlu0 %v58
    %v60 = vpop.xlane.xlu0 %59
    %v61 = vadd.f32 %v52, %v53
    %62 = vadd.xlane.f32.xlu0 %v61
    %v63 = vpop.xlane.xlu0 %62
    %v64 = vadd.f32 %v54, %v55
    %65 = vadd.xlane.f32.xlu0 %v64
    %v66 = vpop.xlane.xlu0 %65
    %v67 = vadd.f32 %v56, %v57
    %68 = vadd.xlane.f32.xlu0 %v67
    %v69 = vpop.xlane.xlu0 %68
    %v70 = vrcp.pop 256.0
    %v71 = vmul.f32 256.0, %v70
    %v72 = vsub.f32 1.0, %v71
    %v73 = vmul.f32 %v70, %v72
    %v74 = vadd.f32 %v70, %v73
    %vm75 = vweird.f32 %v70
    %v76 = vsel %vm75, %v70, %v74
    %v77 = vmul.f32 %v60, %v76
    %v78 = vmul.f32 %v63, %v76
    %v79 = vmul.f32 %v66, %v76
    %v80 = vmul.f32 %v69, %v76
    %v81 = vld [vmem:[%s2] sm:$0xff]
    %v82 = vld [vmem:[%s2 + $0x8] sm:$0xff]
    %v83 = vld [vmem:[%s2 + $0x10] sm:$0xff]
    %v84 = vld [vmem:[%s2 + $0x18] sm:$0xff]
    %v85 = vmul.f32 %v77, %v81
    %v86 = vmul.f32 %v78, %v82
    %v87 = vmul.f32 %v79, %v83
    %v88 = vmul.f32 %v80, %v84
    %vm89 = vcmask 15360
    %v90 = vsel %vm89, %v85, 0.0
    %v91 = vsel %vm89, %v86, 0.0
    %v92 = vadd.f32 %v90, %v91
    %v93 = vsel %vm89, %v87, 0.0
    %v94 = vadd.f32 %v92, %v93
    %v95 = vsel %vm89, %v88, 0.0
    %v96 = vadd.f32 %v94, %v95
    %v97 = vrot.slane %v96, 4
    %v98 = vadd.f32 %v96, %v97
    %v99 = vrot.slane %v98, 2
    %v100 = vadd.f32 %v98, %v99
    %v101 = vrot.slane %v100, 1
    %v102 = vadd.f32 %v100, %v101
    %v103 = vmax.f32 %v102, 0.0
    %v104 = vld [vmem:[%s3] sm:$0xff]
    %v105 = vld [vmem:[%s3 + $0x8] sm:$0xff]
    %v106 = vld [vmem:[%s3 + $0x10] sm:$0xff]
    %v107 = vld [vmem:[%s3 + $0x18] sm:$0xff]
    %v108 = vmul.f32 %v103, %v104
    %v109 = vmul.f32 %v103, %v105
    %v110 = vmul.f32 %v103, %v106
    %v111 = vmul.f32 %v103, %v107
    %v112 = vsel %vm89, %v108, 0.0
    %113 = vadd.xlane.f32.xlu0 %v112
    %v114 = vpop.xlane.xlu0 %113
    %v115 = vsel %vm89, %v109, 0.0
    %116 = vadd.xlane.f32.xlu0 %v115
    %v117 = vpop.xlane.xlu0 %116
    %v118 = vsel %vm89, %v110, 0.0
    %119 = vadd.xlane.f32.xlu0 %v118
    %v120 = vpop.xlane.xlu0 %119
    %v121 = vsel %vm89, %v111, 0.0
    %122 = vadd.xlane.f32.xlu0 %v121
    %v123 = vpop.xlane.xlu0 %122
    %v124 = vxor.u32 %v114, 2147483648
    %v125 = vxor.u32 %v117, 2147483648
    %v126 = vxor.u32 %v120, 2147483648
    %v127 = vxor.u32 %v123, 2147483648
    %v128 = vmul.f32 %v124, 1.442695
    %v129 = vpow.pop %v128
    %v130 = vmul.f32 %v125, 1.442695
    %v131 = vpow.pop %v130
    %v132 = vmul.f32 %v126, 1.442695
    %v133 = vpow.pop %v132
    %v134 = vmul.f32 %v127, 1.442695
    %v135 = vpow.pop %v134
    %v136 = vadd.f32 %v129, 1.0
    %v137 = vadd.f32 %v131, 1.0
    %v138 = vadd.f32 %v133, 1.0
    %v139 = vadd.f32 %v135, 1.0
    %v140 = vrcp.pop %v136
    %v141 = vmul.f32 %v136, %v140
    %v142 = vsub.f32 1.0, %v141
    %v143 = vmul.f32 %v140, %v142
    %v144 = vadd.f32 %v140, %v143
    %vm145 = vweird.f32 %v136
    %vm146 = vweird.f32 %v140
    %vm147 = vmor %vm145, %vm146
    %v148 = vsel %vm147, %v140, %v144
    %v149 = vand.u32 2147483647, %v136
    %vm150 = vcmp.eq.f32.partialorder %v149, 8.507059e+37
    %v151 = vand.u32 %v136, 2147483648
    %v152 = vor.u32 1.1754944e-38, %v151
    %v153 = vsel %vm150, %v152, %v148
    %v154 = vmul.f32 1.0, %v153
    %v155 = vrcp.pop %v137
    %v156 = vmul.f32 %v137, %v155
    %v157 = vsub.f32 1.0, %v156
    %v158 = vmul.f32 %v155, %v157
    %v159 = vadd.f32 %v155, %v158
    %vm160 = vweird.f32 %v137
    %vm161 = vweird.f32 %v155
    %vm162 = vmor %vm160, %vm161
    %v163 = vsel %vm162, %v155, %v159
    %v164 = vand.u32 2147483647, %v137
    %vm165 = vcmp.eq.f32.partialorder %v164, 8.507059e+37
    %v166 = vand.u32 %v137, 2147483648
    %v167 = vor.u32 1.1754944e-38, %v166
    %v168 = vsel %vm165, %v167, %v163
    %v169 = vmul.f32 1.0, %v168
    %v170 = vrcp.pop %v138
    %v171 = vmul.f32 %v138, %v170
    %v172 = vsub.f32 1.0, %v171
    %v173 = vmul.f32 %v170, %v172
    %v174 = vadd.f32 %v170, %v173
    %vm175 = vweird.f32 %v138
    %vm176 = vweird.f32 %v170
    %vm177 = vmor %vm175, %vm176
    %v178 = vsel %vm177, %v170, %v174
    %v179 = vand.u32 2147483647, %v138
    %vm180 = vcmp.eq.f32.partialorder %v179, 8.507059e+37
    %v181 = vand.u32 %v138, 2147483648
    %v182 = vor.u32 1.1754944e-38, %v181
    %v183 = vsel %vm180, %v182, %v178
    %v184 = vmul.f32 1.0, %v183
    %v185 = vrcp.pop %v139
    %v186 = vmul.f32 %v139, %v185
    %v187 = vsub.f32 1.0, %v186
    %v188 = vmul.f32 %v185, %v187
    %v189 = vadd.f32 %v185, %v188
    %vm190 = vweird.f32 %v139
    %vm191 = vweird.f32 %v185
    %vm192 = vmor %vm190, %vm191
    %v193 = vsel %vm192, %v185, %v189
    %v194 = vand.u32 2147483647, %v139
    %vm195 = vcmp.eq.f32.partialorder %v194, 8.507059e+37
    %v196 = vand.u32 %v139, 2147483648
    %v197 = vor.u32 1.1754944e-38, %v196
    %v198 = vsel %vm195, %v197, %v193
    %v199 = vmul.f32 1.0, %v198
    %v200 = vmul.f32 %v50, %v154
    %v201 = vmul.f32 %v51, %v154
    %v202 = vmul.f32 %v52, %v169
    %v203 = vmul.f32 %v53, %v169
    %v204 = vmul.f32 %v54, %v184
    %v205 = vmul.f32 %v55, %v184
    %v206 = vmul.f32 %v56, %v199
    %v207 = vmul.f32 %v57, %v199
    %v208 = vadd.f32 %v200, %v202
    %v209 = vadd.f32 %v208, %v204
    %v210 = vadd.f32 %v209, %v206
    %v211 = vrot.slane %v210, 4
    %v212 = vadd.f32 %v210, %v211
    %v213 = vrot.slane %v212, 2
    %v214 = vadd.f32 %v212, %v213
    %v215 = vrot.slane %v214, 1
    %v216 = vadd.f32 %v214, %v215
    %v217 = vadd.f32 %v201, %v203
    %v218 = vadd.f32 %v217, %v205
    %v219 = vadd.f32 %v218, %v207
    %v220 = vrot.slane %v219, 4
    %v221 = vadd.f32 %v219, %v220
    %v222 = vrot.slane %v221, 2
    %v223 = vadd.f32 %v221, %v222
    %v224 = vrot.slane %v223, 1
    %v225 = vadd.f32 %v223, %v224
    %v226 = vrcp.pop 32.0
    %v227 = vmul.f32 32.0, %v226
    %v228 = vsub.f32 1.0, %v227
    %v229 = vmul.f32 %v226, %v228
    %v230 = vadd.f32 %v226, %v229
    %vm231 = vweird.f32 %v226
    %v232 = vsel %vm231, %v226, %v230
    %v233 = vmul.f32 %v216, %v232
    %v234 = vmul.f32 %v225, %v232
    %v237 = vrot.slane %v234, 7
    %vm238 = vcmask 1040384
    %v239 = vsel %vm238, %v233, %v237
    %v241 = vlaneseq
    %vm242 = vcmp.ge.s32.totalorder %v241, 0
    %vm243 = vcmp.lt.s32.totalorder %v241, 256
    %vm244 = vmand %vm242, %vm243
    %s245 = scalar_lea.vmem [#allocation2], 4
    %246 = vst.msk [vmem:[%s245] ss:$4 sm:$0x3] %vm244, %v239
    %v247 = vmax.f32 %v200, %v204
    %v248 = vmax.f32 %v202, %v206
    %v249 = vmax.f32 %v247, %v248
    %v250 = vrot.slane %v249, 4
    %v251 = vmax.f32 %v249, %v250
    %v252 = vrot.slane %v251, 2
    %v253 = vmax.f32 %v251, %v252
    %v254 = vrot.slane %v253, 1
    %v255 = vmax.f32 %v253, %v254
    %v256 = vmax.f32 %v201, %v205
    %v257 = vmax.f32 %v203, %v207
    %v258 = vmax.f32 %v256, %v257
    %v259 = vrot.slane %v258, 4
    %v260 = vmax.f32 %v258, %v259
    %v261 = vrot.slane %v260, 2
    %v262 = vmax.f32 %v260, %v261
    %v263 = vrot.slane %v262, 1
    %v264 = vmax.f32 %v262, %v263
    %v267 = vrot.slane %v264, 7
    %v268 = vsel %vm238, %v255, %v267
    %s270 = scalar_lea.vmem [#allocation2], 6
    %271 = vst.msk [vmem:[%s270] ss:$4 sm:$0x3] %vm244, %v268
    %s272 = scalar_lea.vmem [#allocation7], 64
    %v273 = vld [vmem:[%s272] sm:$0xff]
    %v274 = vld [vmem:[%s272 + $0x8] sm:$0xff]
    %v275 = vld [vmem:[%s272 + $0x10] sm:$0xff]
    %v276 = vld [vmem:[%s272 + $0x18] sm:$0xff]
    %v277 = vld [vmem:[%s272 + $0x20] sm:$0xff]
    %v278 = vld [vmem:[%s272 + $0x28] sm:$0xff]
    %v279 = vld [vmem:[%s272 + $0x30] sm:$0xff]
    %v280 = vld [vmem:[%s272 + $0x38] sm:$0xff]
    %v281 = vadd.f32 %v273, %v274
    %282 = vadd.xlane.f32.xlu0 %v281
    %v283 = vpop.xlane.xlu0 %282
    %v284 = vadd.f32 %v275, %v276
    %285 = vadd.xlane.f32.xlu0 %v284
    %v286 = vpop.xlane.xlu0 %285
    %v287 = vadd.f32 %v277, %v278
    %288 = vadd.xlane.f32.xlu0 %v287
    %v289 = vpop.xlane.xlu0 %288
    %v290 = vadd.f32 %v279, %v280
    %291 = vadd.xlane.f32.xlu0 %v290
    %v292 = vpop.xlane.xlu0 %291
    %v293 = vmul.f32 %v283, %v76
    %v294 = vmul.f32 %v286, %v76
    %v295 = vmul.f32 %v289, %v76
    %v296 = vmul.f32 %v292, %v76
    %v297 = vld [vmem:[%s2] sm:$0xff]
    %v298 = vld [vmem:[%s2 + $0x8] sm:$0xff]
    %v299 = vld [vmem:[%s2 + $0x10] sm:$0xff]
    %v300 = vld [vmem:[%s2 + $0x18] sm:$0xff]
    %v301 = vmul.f32 %v293, %v297
    %v302 = vmul.f32 %v294, %v298
    %v303 = vmul.f32 %v295, %v299
    %v304 = vmul.f32 %v296, %v300
    %v305 = vsel %vm89, %v301, 0.0
    %v306 = vsel %vm89, %v302, 0.0
    %v307 = vadd.f32 %v305, %v306
    %v308 = vsel %vm89, %v303, 0.0
    %v309 = vadd.f32 %v307, %v308
    %v310 = vsel %vm89, %v304, 0.0
    %v311 = vadd.f32 %v309, %v310
    %v312 = vrot.slane %v311, 4
    %v313 = vadd.f32 %v311, %v312
    %v314 = vrot.slane %v313, 2
    %v315 = vadd.f32 %v313, %v314
    %v316 = vrot.slane %v315, 1
    %v317 = vadd.f32 %v315, %v316
    %v318 = vmax.f32 %v317, 0.0
    %v319 = vld [vmem:[%s3] sm:$0xff]
    %v320 = vld [vmem:[%s3 + $0x8] sm:$0xff]
    %v321 = vld [vmem:[%s3 + $0x10] sm:$0xff]
    %v322 = vld [vmem:[%s3 + $0x18] sm:$0xff]
    %v323 = vmul.f32 %v318, %v319
    %v324 = vmul.f32 %v318, %v320
    %v325 = vmul.f32 %v318, %v321
    %v326 = vmul.f32 %v318, %v322
    %v327 = vsel %vm89, %v323, 0.0
    %328 = vadd.xlane.f32.xlu0 %v327
    %v329 = vpop.xlane.xlu0 %328
    %v330 = vsel %vm89, %v324, 0.0
    %331 = vadd.xlane.f32.xlu0 %v330
    %v332 = vpop.xlane.xlu0 %331
    %v333 = vsel %vm89, %v325, 0.0
    %334 = vadd.xlane.f32.xlu0 %v333
    %v335 = vpop.xlane.xlu0 %334
    %v336 = vsel %vm89, %v326, 0.0
    %337 = vadd.xlane.f32.xlu0 %v336
    %v338 = vpop.xlane.xlu0 %337
    %v339 = vxor.u32 %v329, 2147483648
    %v340 = vxor.u32 %v332, 2147483648
    %v341 = vxor.u32 %v335, 2147483648
    %v342 = vxor.u32 %v338, 2147483648
    %v343 = vmul.f32 %v339, 1.442695
    %v344 = vpow.pop %v343
    %v345 = vmul.f32 %v340, 1.442695
    %v346 = vpow.pop %v345
    %v347 = vmul.f32 %v341, 1.442695
    %v348 = vpow.pop %v347
    %v349 = vmul.f32 %v342, 1.442695
    %v350 = vpow.pop %v349
    %v351 = vadd.f32 %v344, 1.0
    %v352 = vadd.f32 %v346, 1.0
    %v353 = vadd.f32 %v348, 1.0
    %v354 = vadd.f32 %v350, 1.0
    %v355 = vrcp.pop %v351
    %v356 = vmul.f32 %v351, %v355
    %v357 = vsub.f32 1.0, %v356
    %v358 = vmul.f32 %v355, %v357
    %v359 = vadd.f32 %v355, %v358
    %vm360 = vweird.f32 %v351
    %vm361 = vweird.f32 %v355
    %vm362 = vmor %vm360, %vm361
    %v363 = vsel %vm362, %v355, %v359
    %v364 = vand.u32 2147483647, %v351
    %vm365 = vcmp.eq.f32.partialorder %v364, 8.507059e+37
    %v366 = vand.u32 %v351, 2147483648
    %v367 = vor.u32 1.1754944e-38, %v366
    %v368 = vsel %vm365, %v367, %v363
    %v369 = vmul.f32 1.0, %v368
    %v370 = vrcp.pop %v352
    %v371 = vmul.f32 %v352, %v370
    %v372 = vsub.f32 1.0, %v371
    %v373 = vmul.f32 %v370, %v372
    %v374 = vadd.f32 %v370, %v373
    %vm375 = vweird.f32 %v352
    %vm376 = vweird.f32 %v370
    %vm377 = vmor %vm375, %vm376
    %v378 = vsel %vm377, %v370, %v374
    %v379 = vand.u32 2147483647, %v352
    %vm380 = vcmp.eq.f32.partialorder %v379, 8.507059e+37
    %v381 = vand.u32 %v352, 2147483648
    %v382 = vor.u32 1.1754944e-38, %v381
    %v383 = vsel %vm380, %v382, %v378
    %v384 = vmul.f32 1.0, %v383
    %v385 = vrcp.pop %v353
    %v386 = vmul.f32 %v353, %v385
    %v387 = vsub.f32 1.0, %v386
    %v388 = vmul.f32 %v385, %v387
    %v389 = vadd.f32 %v385, %v388
    %vm390 = vweird.f32 %v353
    %vm391 = vweird.f32 %v385
    %vm392 = vmor %vm390, %vm391
    %v393 = vsel %vm392, %v385, %v389
    %v394 = vand.u32 2147483647, %v353
    %vm395 = vcmp.eq.f32.partialorder %v394, 8.507059e+37
    %v396 = vand.u32 %v353, 2147483648
    %v397 = vor.u32 1.1754944e-38, %v396
    %v398 = vsel %vm395, %v397, %v393
    %v399 = vmul.f32 1.0, %v398
    %v400 = vrcp.pop %v354
    %v401 = vmul.f32 %v354, %v400
    %v402 = vsub.f32 1.0, %v401
    %v403 = vmul.f32 %v400, %v402
    %v404 = vadd.f32 %v400, %v403
    %vm405 = vweird.f32 %v354
    %vm406 = vweird.f32 %v400
    %vm407 = vmor %vm405, %vm406
    %v408 = vsel %vm407, %v400, %v404
    %v409 = vand.u32 2147483647, %v354
    %vm410 = vcmp.eq.f32.partialorder %v409, 8.507059e+37
    %v411 = vand.u32 %v354, 2147483648
    %v412 = vor.u32 1.1754944e-38, %v411
    %v413 = vsel %vm410, %v412, %v408
    %v414 = vmul.f32 1.0, %v413
    %v415 = vmul.f32 %v273, %v369
    %v416 = vmul.f32 %v274, %v369
    %v417 = vmul.f32 %v275, %v384
    %v418 = vmul.f32 %v276, %v384
    %v419 = vmul.f32 %v277, %v399
    %v420 = vmul.f32 %v278, %v399
    %v421 = vmul.f32 %v279, %v414
    %v422 = vmul.f32 %v280, %v414
    %v423 = vadd.f32 %v415, %v417
    %v424 = vadd.f32 %v423, %v419
    %v425 = vadd.f32 %v424, %v421
    %v426 = vrot.slane %v425, 4
    %v427 = vadd.f32 %v425, %v426
    %v428 = vrot.slane %v427, 2
    %v429 = vadd.f32 %v427, %v428
    %v430 = vrot.slane %v429, 1
    %v431 = vadd.f32 %v429, %v430
    %v432 = vadd.f32 %v416, %v418
    %v433 = vadd.f32 %v432, %v420
    %v434 = vadd.f32 %v433, %v422
    %v435 = vrot.slane %v434, 4
    %v436 = vadd.f32 %v434, %v435
    %v437 = vrot.slane %v436, 2
    %v438 = vadd.f32 %v436, %v437
    %v439 = vrot.slane %v438, 1
    %v440 = vadd.f32 %v438, %v439
    %v441 = vmul.f32 %v431, %v232
    %v442 = vmul.f32 %v440, %v232
    %v445 = vrot.slane %v442, 7
    %v446 = vsel %vm238, %v441, %v445
    %s448 = scalar_lea.vmem [#allocation2], 5
    %449 = vst.msk [vmem:[%s448] ss:$4 sm:$0x3] %vm244, %v446
    %v450 = vmax.f32 %v415, %v419
    %v451 = vmax.f32 %v417, %v421
    %v452 = vmax.f32 %v450, %v451
    %v453 = vrot.slane %v452, 4
    %v454 = vmax.f32 %v452, %v453
    %v455 = vrot.slane %v454, 2
    %v456 = vmax.f32 %v454, %v455
    %v457 = vrot.slane %v456, 1
    %v458 = vmax.f32 %v456, %v457
    %v459 = vmax.f32 %v416, %v420
    %v460 = vmax.f32 %v418, %v422
    %v461 = vmax.f32 %v459, %v460
    %v462 = vrot.slane %v461, 4
    %v463 = vmax.f32 %v461, %v462
    %v464 = vrot.slane %v463, 2
    %v465 = vmax.f32 %v463, %v464
    %v466 = vrot.slane %v465, 1
    %v467 = vmax.f32 %v465, %v466
    %v470 = vrot.slane %v467, 7
    %v471 = vsel %vm238, %v458, %v470
    %s473 = scalar_lea.vmem [#allocation2], 7
    %474 = vst.msk [vmem:[%s473] ss:$4 sm:$0x3] %vm244, %v471
    %475 = vst [vmem:[#allocation2] sm:$0xf] 0.0
    %476 = vst [vmem:[#allocation2 + $0xc] sm:$0xf] 0.0
    %v477 = vld [vmem:[#allocation2] sm:$0xff]
    %v478 = vld [vmem:[#allocation2 + $0x8] sm:$0xff]
    %v479 = vlaneseq
    %v480 = vshrl.u32 %v479, 7
    %vm481 = vcmp.lt.s32.totalorder %v480, 2
    %s482 = sld [smem:[#allocation3]]
    %s483 = sld [smem:[#allocation3 + $0x31]]
    %v484 = vstv %s482
    %v485 = vstv %s483
    %v486 = vsel %vm481, %v484, %v485
    %489 = vst [vmem:[#allocation1] ss:$2 sm:$0xff] %v477
    %s490 = scalar_lea.vmem [#allocation1], 16
    %491 = vst [vmem:[%s490] ss:$2 sm:$0xff] %v478
    %v492 = vld.sshfl [vmem:[#allocation1] sm:$0xff pattern:$0x75316420]
    %v493 = vld.sshfl [vmem:[#allocation1 + $0x8] sm:$0xff pattern:$0x75316420]
    %v494 = vld.sshfl [vmem:[#allocation1 + $0x10] sm:$0xff pattern:$0x75316420]
    %498 = vrot.lane.b32.xlu0 %v492, 51
    %v499 = vpop.permute.xlu0 %498
    %500 = vrot.lane.b32.xlu0 %v493, 51
    %v501 = vpop.permute.xlu0 %500
    %502 = vrot.lane.b32.xlu0 %v494, 51
    %v503 = vpop.permute.xlu0 %502
    %v504 = vlaneseq
    %v505 = vand.u32 %v504, 127
    %vm506 = vcmp.lt.s32.totalorder %v505, 51
    %v507 = vsel %vm506, %v501, %v503
    %v508 = vsel %vm506, %v499, %v501
    %v509 = vmul.f32 %v486, %v508
    %v510 = vmul.f32 %v486, %v507
    %v511 = vadd.f32 %v509, 0.0
    %v512 = vadd.f32 %v510, 0.0
    %s513 = sld [smem:[#allocation3 + $0x7]]
    %s514 = sld [smem:[#allocation3 + $0x38]]
    %v515 = vstv %s513
    %v516 = vstv %s514
    %v517 = vsel %vm481, %v515, %v516
    %518 = vst [vmem:[#allocation1] ss:$2 sm:$0xff] %v477
    %s519 = scalar_lea.vmem [#allocation1], 16
    %520 = vst [vmem:[%s519] ss:$2 sm:$0xff] %v478
    %v521 = vld.sshfl [vmem:[#allocation1] sm:$0xff pattern:$0x75316420]
    %v522 = vld.sshfl [vmem:[#allocation1 + $0x8] sm:$0xff pattern:$0x75316420]
    %v523 = vld.sshfl [vmem:[#allocation1 + $0x10] sm:$0xff pattern:$0x75316420]
    %527 = vrot.lane.b32.xlu0 %v521, 35
    %v528 = vpop.permute.xlu0 %527
    %529 = vrot.lane.b32.xlu0 %v522, 35
    %v530 = vpop.permute.xlu0 %529
    %531 = vrot.lane.b32.xlu0 %v523, 35
    %v532 = vpop.permute.xlu0 %531
    %vm533 = vcmp.lt.s32.totalorder %v505, 35
    %v534 = vsel %vm533, %v530, %v532
    %v535 = vsel %vm533, %v528, %v530
    %v536 = vmul.f32 %v517, %v535
    %v537 = vmul.f32 %v517, %v534
    %v538 = vadd.f32 %v511, %v536
    %v539 = vadd.f32 %v512, %v537
    %s540 = sld [smem:[#allocation3 + $0xe]]
    %s541 = sld [smem:[#allocation3 + $0x3f]]
    %v542 = vstv %s540
    %v543 = vstv %s541
    %v544 = vsel %vm481, %v542, %v543
    %545 = vst [vmem:[#allocation1] ss:$2 sm:$0xff] %v477
    %s546 = scalar_lea.vmem [#allocation1], 16
    %547 = vst [vmem:[%s546] ss:$2 sm:$0xff] %v478
    %v548 = vld.sshfl [vmem:[#allocation1] sm:$0xff pattern:$0x75316420]
    %v549 = vld.sshfl [vmem:[#allocation1 + $0x8] sm:$0xff pattern:$0x75316420]
    %v550 = vld.sshfl [vmem:[#allocation1 + $0x10] sm:$0xff pattern:$0x75316420]
    %554 = vrot.lane.b32.xlu0 %v548, 19
    %v555 = vpop.permute.xlu0 %554
    %556 = vrot.lane.b32.xlu0 %v549, 19
    %v557 = vpop.permute.xlu0 %556
    %558 = vrot.lane.b32.xlu0 %v550, 19
    %v559 = vpop.permute.xlu0 %558
    %vm560 = vcmp.lt.s32.totalorder %v505, 19
    %v561 = vsel %vm560, %v557, %v559
    %v562 = vsel %vm560, %v555, %v557
    %v563 = vmul.f32 %v544, %v562
    %v564 = vmul.f32 %v544, %v561
    %v565 = vadd.f32 %v538, %v563
    %v566 = vadd.f32 %v539, %v564
    %s567 = sld [smem:[#allocation3 + $0x15]]
    %s568 = sld [smem:[#allocation3 + $0x46]]
    %v569 = vstv %s567
    %v570 = vstv %s568
    %v571 = vsel %vm481, %v569, %v570
    %572 = vst [vmem:[#allocation1] ss:$2 sm:$0xff] %v477
    %s573 = scalar_lea.vmem [#allocation1], 16
    %574 = vst [vmem:[%s573] ss:$2 sm:$0xff] %v478
    %v575 = vld.sshfl [vmem:[#allocation1] sm:$0xff pattern:$0x75316420]
    %v576 = vld.sshfl [vmem:[#allocation1 + $0x8] sm:$0xff pattern:$0x75316420]
    %v577 = vld.sshfl [vmem:[#allocation1 + $0x10] sm:$0xff pattern:$0x75316420]
    %581 = vrot.lane.b32.xlu0 %v575, 3
    %v582 = vpop.permute.xlu0 %581
    %583 = vrot.lane.b32.xlu0 %v576, 3
    %v584 = vpop.permute.xlu0 %583
    %585 = vrot.lane.b32.xlu0 %v577, 3
    %v586 = vpop.permute.xlu0 %585
    %vm587 = vcmp.lt.s32.totalorder %v505, 3
    %v588 = vsel %vm587, %v584, %v586
    %v589 = vsel %vm587, %v582, %v584
    %v590 = vmul.f32 %v571, %v589
    %v591 = vmul.f32 %v571, %v588
    %v592 = vadd.f32 %v565, %v590
    %v593 = vadd.f32 %v566, %v591
    %s594 = sld [smem:[#allocation3 + $0x1c]]
    %s595 = sld [smem:[#allocation3 + $0x4d]]
    %v596 = vstv %s594
    %v597 = vstv %s595
    %v598 = vsel %vm481, %v596, %v597
    %599 = vst [vmem:[#allocation1] ss:$2 sm:$0xff] %v477
    %s600 = scalar_lea.vmem [#allocation1], 16
    %601 = vst [vmem:[%s600] ss:$2 sm:$0xff] %v478
    %v602 = vld.sshfl [vmem:[#allocation1 + $0x8] sm:$0xff pattern:$0x75316420]
    %v603 = vld.sshfl [vmem:[#allocation1 + $0x10] sm:$0xff pattern:$0x75316420]
    %v604 = vld.sshfl [vmem:[#allocation1 + $0x18] sm:$0xff pattern:$0x75316420]
    %608 = vrot.lane.b32.xlu0 %v602, 115
    %v609 = vpop.permute.xlu0 %608
    %610 = vrot.lane.b32.xlu0 %v603, 115
    %v611 = vpop.permute.xlu0 %610
    %612 = vrot.lane.b32.xlu0 %v604, 115
    %v613 = vpop.permute.xlu0 %612
    %vm614 = vcmp.lt.s32.totalorder %v505, 115
    %v615 = vsel %vm614, %v611, %v613
    %v616 = vsel %vm614, %v609, %v611
    %v617 = vmul.f32 %v598, %v616
    %v618 = vmul.f32 %v598, %v615
    %v619 = vadd.f32 %v592, %v617
    %v620 = vadd.f32 %v593, %v618
    %s621 = sld [smem:[#allocation3 + $0x23]]
    %s622 = sld [smem:[#allocation3 + $0x54]]
    %v623 = vstv %s621
    %v624 = vstv %s622
    %v625 = vsel %vm481, %v623, %v624
    %626 = vst [vmem:[#allocation1] ss:$2 sm:$0xff] %v477
    %s627 = scalar_lea.vmem [#allocation1], 16
    %628 = vst [vmem:[%s627] ss:$2 sm:$0xff] %v478
    %v629 = vld.sshfl [vmem:[#allocation1 + $0x8] sm:$0xff pattern:$0x75316420]
    %v630 = vld.sshfl [vmem:[#allocation1 + $0x10] sm:$0xff pattern:$0x75316420]
    %v631 = vld.sshfl [vmem:[#allocation1 + $0x18] sm:$0xff pattern:$0x75316420]
    %635 = vrot.lane.b32.xlu0 %v629, 99
    %v636 = vpop.permute.xlu0 %635
    %637 = vrot.lane.b32.xlu0 %v630, 99
    %v638 = vpop.permute.xlu0 %637
    %639 = vrot.lane.b32.xlu0 %v631, 99
    %v640 = vpop.permute.xlu0 %639
    %vm641 = vcmp.lt.s32.totalorder %v505, 99
    %v642 = vsel %vm641, %v638, %v640
    %v643 = vsel %vm641, %v636, %v638
    %v644 = vmul.f32 %v625, %v643
    %v645 = vmul.f32 %v625, %v642
    %v646 = vadd.f32 %v619, %v644
    %v647 = vadd.f32 %v620, %v645
    %s648 = sld [smem:[#allocation3 + $0x2a]]
    %s649 = sld [smem:[#allocation3 + $0x5b]]
    %v650 = vstv %s648
    %v651 = vstv %s649
    %v652 = vsel %vm481, %v650, %v651
    %653 = vst [vmem:[#allocation1] ss:$2 sm:$0xff] %v477
    %s654 = scalar_lea.vmem [#allocation1], 16
    %655 = vst [vmem:[%s654] ss:$2 sm:$0xff] %v478
    %v656 = vld.sshfl [vmem:[#allocation1 + $0x8] sm:$0xff pattern:$0x75316420]
    %v657 = vld.sshfl [vmem:[#allocation1 + $0x10] sm:$0xff pattern:$0x75316420]
    %v658 = vld.sshfl [vmem:[#allocation1 + $0x18] sm:$0xff pattern:$0x75316420]
    %662 = vrot.lane.b32.xlu0 %v656, 83
    %v663 = vpop.permute.xlu0 %662
    %664 = vrot.lane.b32.xlu0 %v657, 83
    %v665 = vpop.permute.xlu0 %664
    %666 = vrot.lane.b32.xlu0 %v658, 83
    %v667 = vpop.permute.xlu0 %666
    %vm668 = vcmp.lt.s32.totalorder %v505, 83
    %v669 = vsel %vm668, %v665, %v667
    %v670 = vsel %vm668, %v663, %v665
    %v671 = vmul.f32 %v652, %v670
    %v672 = vmul.f32 %v652, %v669
    %v673 = vadd.f32 %v646, %v671
    %v674 = vadd.f32 %v647, %v672
    %v675 = vld [vmem:[%s4] ss:$8 sm:$0x3]
    %v677 = vperm.slane %v675, 0
    %v678 = vperm.slane %v675, 1
    %v681 = vmul.f32 %v673, %v677
    %v682 = vmul.f32 %v674, %v678
    %v683 = vadd.f32 %v681, 0.0
    %v684 = vadd.f32 %v682, 0.0
    %s685 = sld [smem:[#allocation3 + $0x1]]
    %s686 = sld [smem:[#allocation3 + $0x32]]
    %v687 = vstv %s685
    %v688 = vstv %s686
    %v689 = vsel %vm481, %v687, %v688
    %690 = vst [vmem:[#allocation1] ss:$2 sm:$0xff] %v477
    %s691 = scalar_lea.vmem [#allocation1], 16
    %692 = vst [vmem:[%s691] ss:$2 sm:$0xff] %v478
    %v693 = vld.sshfl [vmem:[#allocation1] sm:$0xff pattern:$0x75316420]
    %v694 = vld.sshfl [vmem:[#allocation1 + $0x8] sm:$0xff pattern:$0x75316420]
    %v695 = vld.sshfl [vmem:[#allocation1 + $0x10] sm:$0xff pattern:$0x75316420]
    %699 = vrot.lane.b32.xlu0 %v693, 50
    %v700 = vpop.permute.xlu0 %699
    %701 = vrot.lane.b32.xlu0 %v694, 50
    %v702 = vpop.permute.xlu0 %701
    %703 = vrot.lane.b32.xlu0 %v695, 50
    %v704 = vpop.permute.xlu0 %703
    %vm705 = vcmp.lt.s32.totalorder %v505, 50
    %v706 = vsel %vm705, %v702, %v704
    %v707 = vsel %vm705, %v700, %v702
    %v708 = vmul.f32 %v689, %v707
    %v709 = vmul.f32 %v689, %v706
    %v710 = vadd.f32 %v708, 0.0
    %v711 = vadd.f32 %v709, 0.0
    %s712 = sld [smem:[#allocation3 + $0x8]]
    %s713 = sld [smem:[#allocation3 + $0x39]]
    %v714 = vstv %s712
    %v715 = vstv %s713
    %v716 = vsel %vm481, %v714, %v715
    %717 = vst [vmem:[#allocation1] ss:$2 sm:$0xff] %v477
    %s718 = scalar_lea.vmem [#allocation1], 16
    %719 = vst [vmem:[%s718] ss:$2 sm:$0xff] %v478
    %v720 = vld.sshfl [vmem:[#allocation1] sm:$0xff pattern:$0x75316420]
    %v721 = vld.sshfl [vmem:[#allocation1 + $0x8] sm:$0xff pattern:$0x75316420]
    %v722 = vld.sshfl [vmem:[#allocation1 + $0x10] sm:$0xff pattern:$0x75316420]
    %726 = vrot.lane.b32.xlu0 %v720, 34
    %v727 = vpop.permute.xlu0 %726
    %728 = vrot.lane.b32.xlu0 %v721, 34
    %v729 = vpop.permute.xlu0 %728
    %730 = vrot.lane.b32.xlu0 %v722, 34
    %v731 = vpop.permute.xlu0 %730
    %vm732 = vcmp.lt.s32.totalorder %v505, 34
    %v733 = vsel %vm732, %v729, %v731
    %v734 = vsel %vm732, %v727, %v729
    %v735 = vmul.f32 %v716, %v734
    %v736 = vmul.f32 %v716, %v733
    %v737 = vadd.f32 %v710, %v735
    %v738 = vadd.f32 %v711, %v736
    %s739 = sld [smem:[#allocation3 + $0xf]]
    %s740 = sld [smem:[#allocation3 + $0x40]]
    %v741 = vstv %s739
    %v742 = vstv %s740
    %v743 = vsel %vm481, %v741, %v742
    %744 = vst [vmem:[#allocation1] ss:$2 sm:$0xff] %v477
    %s745 = scalar_lea.vmem [#allocation1], 16
    %746 = vst [vmem:[%s745] ss:$2 sm:$0xff] %v478
    %v747 = vld.sshfl [vmem:[#allocation1] sm:$0xff pattern:$0x75316420]
    %v748 = vld.sshfl [vmem:[#allocation1 + $0x8] sm:$0xff pattern:$0x75316420]
    %v749 = vld.sshfl [vmem:[#allocation1 + $0x10] sm:$0xff pattern:$0x75316420]
    %753 = vrot.lane.b32.xlu0 %v747, 18
    %v754 = vpop.permute.xlu0 %753
    %755 = vrot.lane.b32.xlu0 %v748, 18
    %v756 = vpop.permute.xlu0 %755
    %757 = vrot.lane.b32.xlu0 %v749, 18
    %v758 = vpop.permute.xlu0 %757
    %vm759 = vcmp.lt.s32.totalorder %v505, 18
    %v760 = vsel %vm759, %v756, %v758
    %v761 = vsel %vm759, %v754, %v756
    %v762 = vmul.f32 %v743, %v761
    %v763 = vmul.f32 %v743, %v760
    %v764 = vadd.f32 %v737, %v762
    %v765 = vadd.f32 %v738, %v763
    %s766 = sld [smem:[#allocation3 + $0x16]]
    %s767 = sld [smem:[#allocation3 + $0x47]]
    %v768 = vstv %s766
    %v769 = vstv %s767
    %v770 = vsel %vm481, %v768, %v769
    %771 = vst [vmem:[#allocation1] ss:$2 sm:$0xff] %v477
    %s772 = scalar_lea.vmem [#allocation1], 16
    %773 = vst [vmem:[%s772] ss:$2 sm:$0xff] %v478
    %v774 = vld.sshfl [vmem:[#allocation1] sm:$0xff pattern:$0x75316420]
    %v775 = vld.sshfl [vmem:[#allocation1 + $0x8] sm:$0xff pattern:$0x75316420]
    %v776 = vld.sshfl [vmem:[#allocation1 + $0x10] sm:$0xff pattern:$0x75316420]
    %780 = vrot.lane.b32.xlu0 %v774, 2
    %v781 = vpop.permute.xlu0 %780
    %782 = vrot.lane.b32.xlu0 %v775, 2
    %v783 = vpop.permute.xlu0 %782
    %784 = vrot.lane.b32.xlu0 %v776, 2
    %v785 = vpop.permute.xlu0 %784
    %vm786 = vcmp.lt.s32.totalorder %v505, 2
    %v787 = vsel %vm786, %v783, %v785
    %v788 = vsel %vm786, %v781, %v783
    %v789 = vmul.f32 %v770, %v788
    %v790 = vmul.f32 %v770, %v787
    %v791 = vadd.f32 %v764, %v789
    %v792 = vadd.f32 %v765, %v790
    %s793 = sld [smem:[#allocation3 + $0x1d]]
    %s794 = sld [smem:[#allocation3 + $0x4e]]
    %v795 = vstv %s793
    %v796 = vstv %s794
    %v797 = vsel %vm481, %v795, %v796
    %798 = vst [vmem:[#allocation1] ss:$2 sm:$0xff] %v477
    %s799 = scalar_lea.vmem [#allocation1], 16
    %800 = vst [vmem:[%s799] ss:$2 sm:$0xff] %v478
    %v801 = vld.sshfl [vmem:[#allocation1 + $0x8] sm:$0xff pattern:$0x75316420]
    %v802 = vld.sshfl [vmem:[#allocation1 + $0x10] sm:$0xff pattern:$0x75316420]
    %v803 = vld.sshfl [vmem:[#allocation1 + $0x18] sm:$0xff pattern:$0x75316420]
    %807 = vrot.lane.b32.xlu0 %v801, 114
    %v808 = vpop.permute.xlu0 %807
    %809 = vrot.lane.b32.xlu0 %v802, 114
    %v810 = vpop.permute.xlu0 %809
    %811 = vrot.lane.b32.xlu0 %v803, 114
    %v812 = vpop.permute.xlu0 %811
    %vm813 = vcmp.lt.s32.totalorder %v505, 114
    %v814 = vsel %vm813, %v810, %v812
    %v815 = vsel %vm813, %v808, %v810
    %v816 = vmul.f32 %v797, %v815
    %v817 = vmul.f32 %v797, %v814
    %v818 = vadd.f32 %v791, %v816
    %v819 = vadd.f32 %v792, %v817
    %s820 = sld [smem:[#allocation3 + $0x24]]
    %s821 = sld [smem:[#allocation3 + $0x55]]
    %v822 = vstv %s820
    %v823 = vstv %s821
    %v824 = vsel %vm481, %v822, %v823
    %825 = vst [vmem:[#allocation1] ss:$2 sm:$0xff] %v477
    %s826 = scalar_lea.vmem [#allocation1], 16
    %827 = vst [vmem:[%s826] ss:$2 sm:$0xff] %v478
    %v828 = vld.sshfl [vmem:[#allocation1 + $0x8] sm:$0xff pattern:$0x75316420]
    %v829 = vld.sshfl [vmem:[#allocation1 + $0x10] sm:$0xff pattern:$0x75316420]
    %v830 = vld.sshfl [vmem:[#allocation1 + $0x18] sm:$0xff pattern:$0x75316420]
    %834 = vrot.lane.b32.xlu0 %v828, 98
    %v835 = vpop.permute.xlu0 %834
    %836 = vrot.lane.b32.xlu0 %v829, 98
    %v837 = vpop.permute.xlu0 %836
    %838 = vrot.lane.b32.xlu0 %v830, 98
    %v839 = vpop.permute.xlu0 %838
    %vm840 = vcmp.lt.s32.totalorder %v505, 98
    %v841 = vsel %vm840, %v837, %v839
    %v842 = vsel %vm840, %v835, %v837
    %v843 = vmul.f32 %v824, %v842
    %v844 = vmul.f32 %v824, %v841
    %v845 = vadd.f32 %v818, %v843
    %v846 = vadd.f32 %v819, %v844
    %s847 = sld [smem:[#allocation3 + $0x2b]]
    %s848 = sld [smem:[#allocation3 + $0x5c]]
    %v849 = vstv %s847
    %v850 = vstv %s848
    %v851 = vsel %vm481, %v849, %v850
    %852 = vst [vmem:[#allocation1] ss:$2 sm:$0xff] %v477
    %s853 = scalar_lea.vmem [#allocation1], 16
    %854 = vst [vmem:[%s853] ss:$2 sm:$0xff] %v478
    %v855 = vld.sshfl [vmem:[#allocation1 + $0x8] sm:$0xff pattern:$0x75316420]
    %v856 = vld.sshfl [vmem:[#allocation1 + $0x10] sm:$0xff pattern:$0x75316420]
    %v857 = vld.sshfl [vmem:[#allocation1 + $0x18] sm:$0xff pattern:$0x75316420]
    %861 = vrot.lane.b32.xlu0 %v855, 82
    %v862 = vpop.permute.xlu0 %861
    %863 = vrot.lane.b32.xlu0 %v856, 82
    %v864 = vpop.permute.xlu0 %863
    %865 = vrot.lane.b32.xlu0 %v857, 82
    %v866 = vpop.permute.xlu0 %865
    %vm867 = vcmp.lt.s32.totalorder %v505, 82
    %v868 = vsel %vm867, %v864, %v866
    %v869 = vsel %vm867, %v862, %v864
    %v870 = vmul.f32 %v851, %v869
    %v871 = vmul.f32 %v851, %v868
    %v872 = vadd.f32 %v845, %v870
    %v873 = vadd.f32 %v846, %v871
    %s874 = scalar_lea.vmem %s4, 1
    %v875 = vld [vmem:[%s874] ss:$8 sm:$0x3]
    %v877 = vperm.slane %v875, 0
    %v878 = vperm.slane %v875, 1
    %v881 = vmul.f32 %v872, %v877
    %v882 = vmul.f32 %v873, %v878
    %v883 = vadd.f32 %v683, %v881
    %v884 = vadd.f32 %v684, %v882
    %s885 = sld [smem:[#allocation3 + $0x2]]
    %s886 = sld [smem:[#allocation3 + $0x33]]
    %v887 = vstv %s885
    %v888 = vstv %s886
    %v889 = vsel %vm481, %v887, %v888
    %890 = vst [vmem:[#allocation1] ss:$2 sm:$0xff] %v477
    %s891 = scalar_lea.vmem [#allocation1], 16
    %892 = vst [vmem:[%s891] ss:$2 sm:$0xff] %v478
    %v893 = vld.sshfl [vmem:[#allocation1] sm:$0xff pattern:$0x75316420]
    %v894 = vld.sshfl [vmem:[#allocation1 + $0x8] sm:$0xff pattern:$0x75316420]
    %v895 = vld.sshfl [vmem:[#allocation1 + $0x10] sm:$0xff pattern:$0x75316420]
    %899 = vrot.lane.b32.xlu0 %v893, 49
    %v900 = vpop.permute.xlu0 %899
    %901 = vrot.lane.b32.xlu0 %v894, 49
    %v902 = vpop.permute.xlu0 %901
    %903 = vrot.lane.b32.xlu0 %v895, 49
    %v904 = vpop.permute.xlu0 %903
    %vm905 = vcmp.lt.s32.totalorder %v505, 49
    %v906 = vsel %vm905, %v902, %v904
    %v907 = vsel %vm905, %v900, %v902
    %v908 = vmul.f32 %v889, %v907
    %v909 = vmul.f32 %v889, %v906
    %v910 = vadd.f32 %v908, 0.0
    %v911 = vadd.f32 %v909, 0.0
    %s912 = sld [smem:[#allocation3 + $0x9]]
    %s913 = sld [smem:[#allocation3 + $0x3a]]
    %v914 = vstv %s912
    %v915 = vstv %s913
    %v916 = vsel %vm481, %v914, %v915
    %917 = vst [vmem:[#allocation1] ss:$2 sm:$0xff] %v477
    %s918 = scalar_lea.vmem [#allocation1], 16
    %919 = vst [vmem:[%s918] ss:$2 sm:$0xff] %v478
    %v920 = vld.sshfl [vmem:[#allocation1] sm:$0xff pattern:$0x75316420]
    %v921 = vld.sshfl [vmem:[#allocation1 + $0x8] sm:$0xff pattern:$0x75316420]
    %v922 = vld.sshfl [vmem:[#allocation1 + $0x10] sm:$0xff pattern:$0x75316420]
    %926 = vrot.lane.b32.xlu0 %v920, 33
    %v927 = vpop.permute.xlu0 %926
    %928 = vrot.lane.b32.xlu0 %v921, 33
    %v929 = vpop.permute.xlu0 %928
    %930 = vrot.lane.b32.xlu0 %v922, 33
    %v931 = vpop.permute.xlu0 %930
    %vm932 = vcmp.lt.s32.totalorder %v505, 33
    %v933 = vsel %vm932, %v929, %v931
    %v934 = vsel %vm932, %v927, %v929
    %v935 = vmul.f32 %v916, %v934
    %v936 = vmul.f32 %v916, %v933
    %v937 = vadd.f32 %v910, %v935
    %v938 = vadd.f32 %v911, %v936
    %s939 = sld [smem:[#allocation3 + $0x10]]
    %s940 = sld [smem:[#allocation3 + $0x41]]
    %v941 = vstv %s939
    %v942 = vstv %s940
    %v943 = vsel %vm481, %v941, %v942
    %944 = vst [vmem:[#allocation1] ss:$2 sm:$0xff] %v477
    %s945 = scalar_lea.vmem [#allocation1], 16
    %946 = vst [vmem:[%s945] ss:$2 sm:$0xff] %v478
    %v947 = vld.sshfl [vmem:[#allocation1] sm:$0xff pattern:$0x75316420]
    %v948 = vld.sshfl [vmem:[#allocation1 + $0x8] sm:$0xff pattern:$0x75316420]
    %v949 = vld.sshfl [vmem:[#allocation1 + $0x10] sm:$0xff pattern:$0x75316420]
    %953 = vrot.lane.b32.xlu0 %v947, 17
    %v954 = vpop.permute.xlu0 %953
    %955 = vrot.lane.b32.xlu0 %v948, 17
    %v956 = vpop.permute.xlu0 %955
    %957 = vrot.lane.b32.xlu0 %v949, 17
    %v958 = vpop.permute.xlu0 %957
    %vm959 = vcmp.lt.s32.totalorder %v505, 17
    %v960 = vsel %vm959, %v956, %v958
    %v961 = vsel %vm959, %v954, %v956
    %v962 = vmul.f32 %v943, %v961
    %v963 = vmul.f32 %v943, %v960
    %v964 = vadd.f32 %v937, %v962
    %v965 = vadd.f32 %v938, %v963
    %s966 = sld [smem:[#allocation3 + $0x17]]
    %s967 = sld [smem:[#allocation3 + $0x48]]
    %v968 = vstv %s966
    %v969 = vstv %s967
    %v970 = vsel %vm481, %v968, %v969
    %971 = vst [vmem:[#allocation1] ss:$2 sm:$0xff] %v477
    %s972 = scalar_lea.vmem [#allocation1], 16
    %973 = vst [vmem:[%s972] ss:$2 sm:$0xff] %v478
    %v974 = vld.sshfl [vmem:[#allocation1] sm:$0xff pattern:$0x75316420]
    %v975 = vld.sshfl [vmem:[#allocation1 + $0x8] sm:$0xff pattern:$0x75316420]
    %v976 = vld.sshfl [vmem:[#allocation1 + $0x10] sm:$0xff pattern:$0x75316420]
    %980 = vrot.lane.b32.xlu0 %v974, 1
    %v981 = vpop.permute.xlu0 %980
    %982 = vrot.lane.b32.xlu0 %v975, 1
    %v983 = vpop.permute.xlu0 %982
    %984 = vrot.lane.b32.xlu0 %v976, 1
    %v985 = vpop.permute.xlu0 %984
    %vm986 = vcmp.lt.s32.totalorder %v505, 1
    %v987 = vsel %vm986, %v983, %v985
    %v988 = vsel %vm986, %v981, %v983
    %v989 = vmul.f32 %v970, %v988
    %v990 = vmul.f32 %v970, %v987
    %v991 = vadd.f32 %v964, %v989
    %v992 = vadd.f32 %v965, %v990
    %s993 = sld [smem:[#allocation3 + $0x1e]]
    %s994 = sld [smem:[#allocation3 + $0x4f]]
    %v995 = vstv %s993
    %v996 = vstv %s994
    %v997 = vsel %vm481, %v995, %v996
    %998 = vst [vmem:[#allocation1] ss:$2 sm:$0xff] %v477
    %s999 = scalar_lea.vmem [#allocation1], 16
    %1000 = vst [vmem:[%s999] ss:$2 sm:$0xff] %v478
    %v1001 = vld.sshfl [vmem:[#allocation1 + $0x8] sm:$0xff pattern:$0x75316420]
    %v1002 = vld.sshfl [vmem:[#allocation1 + $0x10] sm:$0xff pattern:$0x75316420]
    %v1003 = vld.sshfl [vmem:[#allocation1 + $0x18] sm:$0xff pattern:$0x75316420]
    %1007 = vrot.lane.b32.xlu0 %v1001, 113
    %v1008 = vpop.permute.xlu0 %1007
    %1009 = vrot.lane.b32.xlu0 %v1002, 113
    %v1010 = vpop.permute.xlu0 %1009
    %1011 = vrot.lane.b32.xlu0 %v1003, 113
    %v1012 = vpop.permute.xlu0 %1011
    %vm1013 = vcmp.lt.s32.totalorder %v505, 113
    %v1014 = vsel %vm1013, %v1010, %v1012
    %v1015 = vsel %vm1013, %v1008, %v1010
    %v1016 = vmul.f32 %v997, %v1015
    %v1017 = vmul.f32 %v997, %v1014
    %v1018 = vadd.f32 %v991, %v1016
    %v1019 = vadd.f32 %v992, %v1017
    %s1020 = sld [smem:[#allocation3 + $0x25]]
    %s1021 = sld [smem:[#allocation3 + $0x56]]
    %v1022 = vstv %s1020
    %v1023 = vstv %s1021
    %v1024 = vsel %vm481, %v1022, %v1023
    %1025 = vst [vmem:[#allocation1] ss:$2 sm:$0xff] %v477
    %s1026 = scalar_lea.vmem [#allocation1], 16
    %1027 = vst [vmem:[%s1026] ss:$2 sm:$0xff] %v478
    %v1028 = vld.sshfl [vmem:[#allocation1 + $0x8] sm:$0xff pattern:$0x75316420]
    %v1029 = vld.sshfl [vmem:[#allocation1 + $0x10] sm:$0xff pattern:$0x75316420]
    %v1030 = vld.sshfl [vmem:[#allocation1 + $0x18] sm:$0xff pattern:$0x75316420]
    %1034 = vrot.lane.b32.xlu0 %v1028, 97
    %v1035 = vpop.permute.xlu0 %1034
    %1036 = vrot.lane.b32.xlu0 %v1029, 97
    %v1037 = vpop.permute.xlu0 %1036
    %1038 = vrot.lane.b32.xlu0 %v1030, 97
    %v1039 = vpop.permute.xlu0 %1038
    %vm1040 = vcmp.lt.s32.totalorder %v505, 97
    %v1041 = vsel %vm1040, %v1037, %v1039
    %v1042 = vsel %vm1040, %v1035, %v1037
    %v1043 = vmul.f32 %v1024, %v1042
    %v1044 = vmul.f32 %v1024, %v1041
    %v1045 = vadd.f32 %v1018, %v1043
    %v1046 = vadd.f32 %v1019, %v1044
    %s1047 = sld [smem:[#allocation3 + $0x2c]]
    %s1048 = sld [smem:[#allocation3 + $0x5d]]
    %v1049 = vstv %s1047
    %v1050 = vstv %s1048
    %v1051 = vsel %vm481, %v1049, %v1050
    %1052 = vst [vmem:[#allocation1] ss:$2 sm:$0xff] %v477
    %s1053 = scalar_lea.vmem [#allocation1], 16
    %1054 = vst [vmem:[%s1053] ss:$2 sm:$0xff] %v478
    %v1055 = vld.sshfl [vmem:[#allocation1 + $0x8] sm:$0xff pattern:$0x75316420]
    %v1056 = vld.sshfl [vmem:[#allocation1 + $0x10] sm:$0xff pattern:$0x75316420]
    %v1057 = vld.sshfl [vmem:[#allocation1 + $0x18] sm:$0xff pattern:$0x75316420]
    %1061 = vrot.lane.b32.xlu0 %v1055, 81
    %v1062 = vpop.permute.xlu0 %1061
    %1063 = vrot.lane.b32.xlu0 %v1056, 81
    %v1064 = vpop.permute.xlu0 %1063
    %1065 = vrot.lane.b32.xlu0 %v1057, 81
    %v1066 = vpop.permute.xlu0 %1065
    %vm1067 = vcmp.lt.s32.totalorder %v505, 81
    %v1068 = vsel %vm1067, %v1064, %v1066
    %v1069 = vsel %vm1067, %v1062, %v1064
    %v1070 = vmul.f32 %v1051, %v1069
    %v1071 = vmul.f32 %v1051, %v1068
    %v1072 = vadd.f32 %v1045, %v1070
    %v1073 = vadd.f32 %v1046, %v1071
    %s1074 = scalar_lea.vmem %s4, 2
    %v1075 = vld [vmem:[%s1074] ss:$8 sm:$0x3]
    %v1077 = vperm.slane %v1075, 0
    %v1078 = vperm.slane %v1075, 1
    %v1081 = vmul.f32 %v1072, %v1077
    %v1082 = vmul.f32 %v1073, %v1078
    %v1083 = vadd.f32 %v883, %v1081
    %v1084 = vadd.f32 %v884, %v1082
    %s1085 = sld [smem:[#allocation3 + $0x3]]
    %s1086 = sld [smem:[#allocation3 + $0x34]]
    %v1087 = vstv %s1085
    %v1088 = vstv %s1086
    %v1089 = vsel %vm481, %v1087, %v1088
    %1090 = vst [vmem:[#allocation1] ss:$2 sm:$0xff] %v477
    %s1091 = scalar_lea.vmem [#allocation1], 16
    %1092 = vst [vmem:[%s1091] ss:$2 sm:$0xff] %v478
    %v1093 = vld.sshfl [vmem:[#allocation1] sm:$0xff pattern:$0x75316420]
    %v1094 = vld.sshfl [vmem:[#allocation1 + $0x8] sm:$0xff pattern:$0x75316420]
    %v1095 = vld.sshfl [vmem:[#allocation1 + $0x10] sm:$0xff pattern:$0x75316420]
    %1099 = vrot.lane.b32.xlu0 %v1093, 48
    %v1100 = vpop.permute.xlu0 %1099
    %1101 = vrot.lane.b32.xlu0 %v1094, 48
    %v1102 = vpop.permute.xlu0 %1101
    %1103 = vrot.lane.b32.xlu0 %v1095, 48
    %v1104 = vpop.permute.xlu0 %1103
    %vm1105 = vcmp.lt.s32.totalorder %v505, 48
    %v1106 = vsel %vm1105, %v1102, %v1104
    %v1107 = vsel %vm1105, %v1100, %v1102
    %v1108 = vmul.f32 %v1089, %v1107
    %v1109 = vmul.f32 %v1089, %v1106
    %v1110 = vadd.f32 %v1108, 0.0
    %v1111 = vadd.f32 %v1109, 0.0
    %s1112 = sld [smem:[#allocation3 + $0xa]]
    %s1113 = sld [smem:[#allocation3 + $0x3b]]
    %v1114 = vstv %s1112
    %v1115 = vstv %s1113
    %v1116 = vsel %vm481, %v1114, %v1115
    %1117 = vst [vmem:[#allocation1] ss:$2 sm:$0xff] %v477
    %s1118 = scalar_lea.vmem [#allocation1], 16
    %1119 = vst [vmem:[%s1118] ss:$2 sm:$0xff] %v478
    %v1120 = vld.sshfl [vmem:[#allocation1] sm:$0xff pattern:$0x75316420]
    %v1121 = vld.sshfl [vmem:[#allocation1 + $0x8] sm:$0xff pattern:$0x75316420]
    %v1122 = vld.sshfl [vmem:[#allocation1 + $0x10] sm:$0xff pattern:$0x75316420]
    %1126 = vrot.lane.b32.xlu0 %v1120, 32
    %v1127 = vpop.permute.xlu0 %1126
    %1128 = vrot.lane.b32.xlu0 %v1121, 32
    %v1129 = vpop.permute.xlu0 %1128
    %1130 = vrot.lane.b32.xlu0 %v1122, 32
    %v1131 = vpop.permute.xlu0 %1130
    %vm1132 = vcmp.lt.s32.totalorder %v505, 32
    %v1133 = vsel %vm1132, %v1129, %v1131
    %v1134 = vsel %vm1132, %v1127, %v1129
    %v1135 = vmul.f32 %v1116, %v1134
    %v1136 = vmul.f32 %v1116, %v1133
    %v1137 = vadd.f32 %v1110, %v1135
    %v1138 = vadd.f32 %v1111, %v1136
    %s1139 = sld [smem:[#allocation3 + $0x11]]
    %s1140 = sld [smem:[#allocation3 + $0x42]]
    %v1141 = vstv %s1139
    %v1142 = vstv %s1140
    %v1143 = vsel %vm481, %v1141, %v1142
    %1144 = vst [vmem:[#allocation1] ss:$2 sm:$0xff] %v477
    %s1145 = scalar_lea.vmem [#allocation1], 16
    %1146 = vst [vmem:[%s1145] ss:$2 sm:$0xff] %v478
    %v1147 = vld.sshfl [vmem:[#allocation1] sm:$0xff pattern:$0x75316420]
    %v1148 = vld.sshfl [vmem:[#allocation1 + $0x8] sm:$0xff pattern:$0x75316420]
    %v1149 = vld.sshfl [vmem:[#allocation1 + $0x10] sm:$0xff pattern:$0x75316420]
    %1153 = vrot.lane.b32.xlu0 %v1147, 16
    %v1154 = vpop.permute.xlu0 %1153
    %1155 = vrot.lane.b32.xlu0 %v1148, 16
    %v1156 = vpop.permute.xlu0 %1155
    %1157 = vrot.lane.b32.xlu0 %v1149, 16
    %v1158 = vpop.permute.xlu0 %1157
    %vm1159 = vcmp.lt.s32.totalorder %v505, 16
    %v1160 = vsel %vm1159, %v1156, %v1158
    %v1161 = vsel %vm1159, %v1154, %v1156
    %v1162 = vmul.f32 %v1143, %v1161
    %v1163 = vmul.f32 %v1143, %v1160
    %v1164 = vadd.f32 %v1137, %v1162
    %v1165 = vadd.f32 %v1138, %v1163
    %s1166 = sld [smem:[#allocation3 + $0x18]]
    %s1167 = sld [smem:[#allocation3 + $0x49]]
    %v1168 = vstv %s1166
    %v1169 = vstv %s1167
    %v1170 = vsel %vm481, %v1168, %v1169
    %1171 = vst [vmem:[#allocation1] ss:$2 sm:$0xff] %v477
    %s1172 = scalar_lea.vmem [#allocation1], 16
    %1173 = vst [vmem:[%s1172] ss:$2 sm:$0xff] %v478
    %v1174 = vld.sshfl [vmem:[#allocation1 + $0x8] sm:$0xff pattern:$0x75316420]
    %v1175 = vld.sshfl [vmem:[#allocation1 + $0x10] sm:$0xff pattern:$0x75316420]
    %v1178 = vmul.f32 %v1170, %v1174
    %v1179 = vmul.f32 %v1170, %v1175
    %v1180 = vadd.f32 %v1164, %v1178
    %v1181 = vadd.f32 %v1165, %v1179
    %s1182 = sld [smem:[#allocation3 + $0x1f]]
    %s1183 = sld [smem:[#allocation3 + $0x50]]
    %v1184 = vstv %s1182
    %v1185 = vstv %s1183
    %v1186 = vsel %vm481, %v1184, %v1185
    %1187 = vst [vmem:[#allocation1] ss:$2 sm:$0xff] %v477
    %s1188 = scalar_lea.vmem [#allocation1], 16
    %1189 = vst [vmem:[%s1188] ss:$2 sm:$0xff] %v478
    %v1190 = vld.sshfl [vmem:[#allocation1 + $0x8] sm:$0xff pattern:$0x75316420]
    %v1191 = vld.sshfl [vmem:[#allocation1 + $0x10] sm:$0xff pattern:$0x75316420]
    %v1192 = vld.sshfl [vmem:[#allocation1 + $0x18] sm:$0xff pattern:$0x75316420]
    %1196 = vrot.lane.b32.xlu0 %v1190, 112
    %v1197 = vpop.permute.xlu0 %1196
    %1198 = vrot.lane.b32.xlu0 %v1191, 112
    %v1199 = vpop.permute.xlu0 %1198
    %1200 = vrot.lane.b32.xlu0 %v1192, 112
    %v1201 = vpop.permute.xlu0 %1200
    %vm1202 = vcmp.lt.s32.totalorder %v505, 112
    %v1203 = vsel %vm1202, %v1199, %v1201
    %v1204 = vsel %vm1202, %v1197, %v1199
    %v1205 = vmul.f32 %v1186, %v1204
    %v1206 = vmul.f32 %v1186, %v1203
    %v1207 = vadd.f32 %v1180, %v1205
    %v1208 = vadd.f32 %v1181, %v1206
    %s1209 = sld [smem:[#allocation3 + $0x26]]
    %s1210 = sld [smem:[#allocation3 + $0x57]]
    %v1211 = vstv %s1209
    %v1212 = vstv %s1210
    %v1213 = vsel %vm481, %v1211, %v1212
    %1214 = vst [vmem:[#allocation1] ss:$2 sm:$0xff] %v477
    %s1215 = scalar_lea.vmem [#allocation1], 16
    %1216 = vst [vmem:[%s1215] ss:$2 sm:$0xff] %v478
    %v1217 = vld.sshfl [vmem:[#allocation1 + $0x8] sm:$0xff pattern:$0x75316420]
    %v1218 = vld.sshfl [vmem:[#allocation1 + $0x10] sm:$0xff pattern:$0x75316420]
    %v1219 = vld.sshfl [vmem:[#allocation1 + $0x18] sm:$0xff pattern:$0x75316420]
    %1223 = vrot.lane.b32.xlu0 %v1217, 96
    %v1224 = vpop.permute.xlu0 %1223
    %1225 = vrot.lane.b32.xlu0 %v1218, 96
    %v1226 = vpop.permute.xlu0 %1225
    %1227 = vrot.lane.b32.xlu0 %v1219, 96
    %v1228 = vpop.permute.xlu0 %1227
    %vm1229 = vcmp.lt.s32.totalorder %v505, 96
    %v1230 = vsel %vm1229, %v1226, %v1228
    %v1231 = vsel %vm1229, %v1224, %v1226
    %v1232 = vmul.f32 %v1213, %v1231
    %v1233 = vmul.f32 %v1213, %v1230
    %v1234 = vadd.f32 %v1207, %v1232
    %v1235 = vadd.f32 %v1208, %v1233
    %s1236 = sld [smem:[#allocation3 + $0x2d]]
    %s1237 = sld [smem:[#allocation3 + $0x5e]]
    %v1238 = vstv %s1236
    %v1239 = vstv %s1237
    %v1240 = vsel %vm481, %v1238, %v1239
    %1241 = vst [vmem:[#allocation1] ss:$2 sm:$0xff] %v477
    %s1242 = scalar_lea.vmem [#allocation1], 16
    %1243 = vst [vmem:[%s1242] ss:$2 sm:$0xff] %v478
    %v1244 = vld.sshfl [vmem:[#allocation1 + $0x8] sm:$0xff pattern:$0x75316420]
    %v1245 = vld.sshfl [vmem:[#allocation1 + $0x10] sm:$0xff pattern:$0x75316420]
    %v1246 = vld.sshfl [vmem:[#allocation1 + $0x18] sm:$0xff pattern:$0x75316420]
    %1250 = vrot.lane.b32.xlu0 %v1244, 80
    %v1251 = vpop.permute.xlu0 %1250
    %1252 = vrot.lane.b32.xlu0 %v1245, 80
    %v1253 = vpop.permute.xlu0 %1252
    %1254 = vrot.lane.b32.xlu0 %v1246, 80
    %v1255 = vpop.permute.xlu0 %1254
    %vm1256 = vcmp.lt.s32.totalorder %v505, 80
    %v1257 = vsel %vm1256, %v1253, %v1255
    %v1258 = vsel %vm1256, %v1251, %v1253
    %v1259 = vmul.f32 %v1240, %v1258
    %v1260 = vmul.f32 %v1240, %v1257
    %v1261 = vadd.f32 %v1234, %v1259
    %v1262 = vadd.f32 %v1235, %v1260
    %v1263 = vadd.f32 %v1083, %v1261
    %v1264 = vadd.f32 %v1084, %v1262
    %s1265 = sld [smem:[#allocation3 + $0x4]]
    %s1266 = sld [smem:[#allocation3 + $0x35]]
    %v1267 = vstv %s1265
    %v1268 = vstv %s1266
    %v1269 = vsel %vm481, %v1267, %v1268
    %1270 = vst [vmem:[#allocation1] ss:$2 sm:$0xff] %v477
    %s1271 = scalar_lea.vmem [#allocation1], 16
    %1272 = vst [vmem:[%s1271] ss:$2 sm:$0xff] %v478
    %v1273 = vld.sshfl [vmem:[#allocation1] sm:$0xff pattern:$0x75316420]
    %v1274 = vld.sshfl [vmem:[#allocation1 + $0x8] sm:$0xff pattern:$0x75316420]
    %v1275 = vld.sshfl [vmem:[#allocation1 + $0x10] sm:$0xff pattern:$0x75316420]
    %1279 = vrot.lane.b32.xlu0 %v1273, 47
    %v1280 = vpop.permute.xlu0 %1279
    %1281 = vrot.lane.b32.xlu0 %v1274, 47
    %v1282 = vpop.permute.xlu0 %1281
    %1283 = vrot.lane.b32.xlu0 %v1275, 47
    %v1284 = vpop.permute.xlu0 %1283
    %vm1285 = vcmp.lt.s32.totalorder %v505, 47
    %v1286 = vsel %vm1285, %v1282, %v1284
    %v1287 = vsel %vm1285, %v1280, %v1282
    %v1288 = vmul.f32 %v1269, %v1287
    %v1289 = vmul.f32 %v1269, %v1286
    %v1290 = vadd.f32 %v1288, 0.0
    %v1291 = vadd.f32 %v1289, 0.0
    %s1292 = sld [smem:[#allocation3 + $0xb]]
    %s1293 = sld [smem:[#allocation3 + $0x3c]]
    %v1294 = vstv %s1292
    %v1295 = vstv %s1293
    %v1296 = vsel %vm481, %v1294, %v1295
    %1297 = vst [vmem:[#allocation1] ss:$2 sm:$0xff] %v477
    %s1298 = scalar_lea.vmem [#allocation1], 16
    %1299 = vst [vmem:[%s1298] ss:$2 sm:$0xff] %v478
    %v1300 = vld.sshfl [vmem:[#allocation1] sm:$0xff pattern:$0x75316420]
    %v1301 = vld.sshfl [vmem:[#allocation1 + $0x8] sm:$0xff pattern:$0x75316420]
    %v1302 = vld.sshfl [vmem:[#allocation1 + $0x10] sm:$0xff pattern:$0x75316420]
    %1306 = vrot.lane.b32.xlu0 %v1300, 31
    %v1307 = vpop.permute.xlu0 %1306
    %1308 = vrot.lane.b32.xlu0 %v1301, 31
    %v1309 = vpop.permute.xlu0 %1308
    %1310 = vrot.lane.b32.xlu0 %v1302, 31
    %v1311 = vpop.permute.xlu0 %1310
    %vm1312 = vcmp.lt.s32.totalorder %v505, 31
    %v1313 = vsel %vm1312, %v1309, %v1311
    %v1314 = vsel %vm1312, %v1307, %v1309
    %v1315 = vmul.f32 %v1296, %v1314
    %v1316 = vmul.f32 %v1296, %v1313
    %v1317 = vadd.f32 %v1290, %v1315
    %v1318 = vadd.f32 %v1291, %v1316
    %s1319 = sld [smem:[#allocation3 + $0x12]]
    %s1320 = sld [smem:[#allocation3 + $0x43]]
    %v1321 = vstv %s1319
    %v1322 = vstv %s1320
    %v1323 = vsel %vm481, %v1321, %v1322
    %1324 = vst [vmem:[#allocation1] ss:$2 sm:$0xff] %v477
    %s1325 = scalar_lea.vmem [#allocation1], 16
    %1326 = vst [vmem:[%s1325] ss:$2 sm:$0xff] %v478
    %v1327 = vld.sshfl [vmem:[#allocation1] sm:$0xff pattern:$0x75316420]
    %v1328 = vld.sshfl [vmem:[#allocation1 + $0x8] sm:$0xff pattern:$0x75316420]
    %v1329 = vld.sshfl [vmem:[#allocation1 + $0x10] sm:$0xff pattern:$0x75316420]
    %1333 = vrot.lane.b32.xlu0 %v1327, 15
    %v1334 = vpop.permute.xlu0 %1333
    %1335 = vrot.lane.b32.xlu0 %v1328, 15
    %v1336 = vpop.permute.xlu0 %1335
    %1337 = vrot.lane.b32.xlu0 %v1329, 15
    %v1338 = vpop.permute.xlu0 %1337
    %vm1339 = vcmp.lt.s32.totalorder %v505, 15
    %v1340 = vsel %vm1339, %v1336, %v1338
    %v1341 = vsel %vm1339, %v1334, %v1336
    %v1342 = vmul.f32 %v1323, %v1341
    %v1343 = vmul.f32 %v1323, %v1340
    %v1344 = vadd.f32 %v1317, %v1342
    %v1345 = vadd.f32 %v1318, %v1343
    %s1346 = sld [smem:[#allocation3 + $0x19]]
    %s1347 = sld [smem:[#allocation3 + $0x4a]]
    %v1348 = vstv %s1346
    %v1349 = vstv %s1347
    %v1350 = vsel %vm481, %v1348, %v1349
    %1351 = vst [vmem:[#allocation1] ss:$2 sm:$0xff] %v477
    %s1352 = scalar_lea.vmem [#allocation1], 16
    %1353 = vst [vmem:[%s1352] ss:$2 sm:$0xff] %v478
    %v1354 = vld.sshfl [vmem:[#allocation1 + $0x8] sm:$0xff pattern:$0x75316420]
    %v1355 = vld.sshfl [vmem:[#allocation1 + $0x10] sm:$0xff pattern:$0x75316420]
    %v1356 = vld.sshfl [vmem:[#allocation1 + $0x18] sm:$0xff pattern:$0x75316420]
    %1360 = vrot.lane.b32.xlu0 %v1354, 127
    %v1361 = vpop.permute.xlu0 %1360
    %1362 = vrot.lane.b32.xlu0 %v1355, 127
    %v1363 = vpop.permute.xlu0 %1362
    %1364 = vrot.lane.b32.xlu0 %v1356, 127
    %v1365 = vpop.permute.xlu0 %1364
    %vm1366 = vcmp.lt.s32.totalorder %v505, 127
    %v1367 = vsel %vm1366, %v1363, %v1365
    %v1368 = vsel %vm1366, %v1361, %v1363
    %v1369 = vmul.f32 %v1350, %v1368
    %v1370 = vmul.f32 %v1350, %v1367
    %v1371 = vadd.f32 %v1344, %v1369
    %v1372 = vadd.f32 %v1345, %v1370
    %s1373 = sld [smem:[#allocation3 + $0x20]]
    %s1374 = sld [smem:[#allocation3 + $0x51]]
    %v1375 = vstv %s1373
    %v1376 = vstv %s1374
    %v1377 = vsel %vm481, %v1375, %v1376
    %1378 = vst [vmem:[#allocation1] ss:$2 sm:$0xff] %v477
    %s1379 = scalar_lea.vmem [#allocation1], 16
    %1380 = vst [vmem:[%s1379] ss:$2 sm:$0xff] %v478
    %v1381 = vld.sshfl [vmem:[#allocation1 + $0x8] sm:$0xff pattern:$0x75316420]
    %v1382 = vld.sshfl [vmem:[#allocation1 + $0x10] sm:$0xff pattern:$0x75316420]
    %v1383 = vld.sshfl [vmem:[#allocation1 + $0x18] sm:$0xff pattern:$0x75316420]
    %1387 = vrot.lane.b32.xlu0 %v1381, 111
    %v1388 = vpop.permute.xlu0 %1387
    %1389 = vrot.lane.b32.xlu0 %v1382, 111
    %v1390 = vpop.permute.xlu0 %1389
    %1391 = vrot.lane.b32.xlu0 %v1383, 111
    %v1392 = vpop.permute.xlu0 %1391
    %vm1393 = vcmp.lt.s32.totalorder %v505, 111
    %v1394 = vsel %vm1393, %v1390, %v1392
    %v1395 = vsel %vm1393, %v1388, %v1390
    %v1396 = vmul.f32 %v1377, %v1395
    %v1397 = vmul.f32 %v1377, %v1394
    %v1398 = vadd.f32 %v1371, %v1396
    %v1399 = vadd.f32 %v1372, %v1397
    %s1400 = sld [smem:[#allocation3 + $0x27]]
    %s1401 = sld [smem:[#allocation3 + $0x58]]
    %v1402 = vstv %s1400
    %v1403 = vstv %s1401
    %v1404 = vsel %vm481, %v1402, %v1403
    %1405 = vst [vmem:[#allocation1] ss:$2 sm:$0xff] %v477
    %s1406 = scalar_lea.vmem [#allocation1], 16
    %1407 = vst [vmem:[%s1406] ss:$2 sm:$0xff] %v478
    %v1408 = vld.sshfl [vmem:[#allocation1 + $0x8] sm:$0xff pattern:$0x75316420]
    %v1409 = vld.sshfl [vmem:[#allocation1 + $0x10] sm:$0xff pattern:$0x75316420]
    %v1410 = vld.sshfl [vmem:[#allocation1 + $0x18] sm:$0xff pattern:$0x75316420]
    %1414 = vrot.lane.b32.xlu0 %v1408, 95
    %v1415 = vpop.permute.xlu0 %1414
    %1416 = vrot.lane.b32.xlu0 %v1409, 95
    %v1417 = vpop.permute.xlu0 %1416
    %1418 = vrot.lane.b32.xlu0 %v1410, 95
    %v1419 = vpop.permute.xlu0 %1418
    %vm1420 = vcmp.lt.s32.totalorder %v505, 95
    %v1421 = vsel %vm1420, %v1417, %v1419
    %v1422 = vsel %vm1420, %v1415, %v1417
    %v1423 = vmul.f32 %v1404, %v1422
    %v1424 = vmul.f32 %v1404, %v1421
    %v1425 = vadd.f32 %v1398, %v1423
    %v1426 = vadd.f32 %v1399, %v1424
    %s1427 = sld [smem:[#allocation3 + $0x2e]]
    %s1428 = sld [smem:[#allocation3 + $0x5f]]
    %v1429 = vstv %s1427
    %v1430 = vstv %s1428
    %v1431 = vsel %vm481, %v1429, %v1430
    %1432 = vst [vmem:[#allocation1] ss:$2 sm:$0xff] %v477
    %s1433 = scalar_lea.vmem [#allocation1], 16
    %1434 = vst [vmem:[%s1433] ss:$2 sm:$0xff] %v478
    %v1435 = vld.sshfl [vmem:[#allocation1 + $0x8] sm:$0xff pattern:$0x75316420]
    %v1436 = vld.sshfl [vmem:[#allocation1 + $0x10] sm:$0xff pattern:$0x75316420]
    %v1437 = vld.sshfl [vmem:[#allocation1 + $0x18] sm:$0xff pattern:$0x75316420]
    %1441 = vrot.lane.b32.xlu0 %v1435, 79
    %v1442 = vpop.permute.xlu0 %1441
    %1443 = vrot.lane.b32.xlu0 %v1436, 79
    %v1444 = vpop.permute.xlu0 %1443
    %1445 = vrot.lane.b32.xlu0 %v1437, 79
    %v1446 = vpop.permute.xlu0 %1445
    %vm1447 = vcmp.lt.s32.totalorder %v505, 79
    %v1448 = vsel %vm1447, %v1444, %v1446
    %v1449 = vsel %vm1447, %v1442, %v1444
    %v1450 = vmul.f32 %v1431, %v1449
    %v1451 = vmul.f32 %v1431, %v1448
    %v1452 = vadd.f32 %v1425, %v1450
    %v1453 = vadd.f32 %v1426, %v1451
    %s1454 = scalar_lea.vmem %s4, 4
    %v1455 = vld [vmem:[%s1454] ss:$8 sm:$0x3]
    %v1457 = vperm.slane %v1455, 0
    %v1458 = vperm.slane %v1455, 1
    %v1461 = vmul.f32 %v1452, %v1457
    %v1462 = vmul.f32 %v1453, %v1458
    %v1463 = vadd.f32 %v1263, %v1461
    %v1464 = vadd.f32 %v1264, %v1462
    %s1465 = sld [smem:[#allocation3 + $0x5]]
    %s1466 = sld [smem:[#allocation3 + $0x36]]
    %v1467 = vstv %s1465
    %v1468 = vstv %s1466
    %v1469 = vsel %vm481, %v1467, %v1468
    %1470 = vst [vmem:[#allocation1] ss:$2 sm:$0xff] %v477
    %s1471 = scalar_lea.vmem [#allocation1], 16
    %1472 = vst [vmem:[%s1471] ss:$2 sm:$0xff] %v478
    %v1473 = vld.sshfl [vmem:[#allocation1] sm:$0xff pattern:$0x75316420]
    %v1474 = vld.sshfl [vmem:[#allocation1 + $0x8] sm:$0xff pattern:$0x75316420]
    %v1475 = vld.sshfl [vmem:[#allocation1 + $0x10] sm:$0xff pattern:$0x75316420]
    %1479 = vrot.lane.b32.xlu0 %v1473, 46
    %v1480 = vpop.permute.xlu0 %1479
    %1481 = vrot.lane.b32.xlu0 %v1474, 46
    %v1482 = vpop.permute.xlu0 %1481
    %1483 = vrot.lane.b32.xlu0 %v1475, 46
    %v1484 = vpop.permute.xlu0 %1483
    %vm1485 = vcmp.lt.s32.totalorder %v505, 46
    %v1486 = vsel %vm1485, %v1482, %v1484
    %v1487 = vsel %vm1485, %v1480, %v1482
    %v1488 = vmul.f32 %v1469, %v1487
    %v1489 = vmul.f32 %v1469, %v1486
    %v1490 = vadd.f32 %v1488, 0.0
    %v1491 = vadd.f32 %v1489, 0.0
    %s1492 = sld [smem:[#allocation3 + $0xc]]
    %s1493 = sld [smem:[#allocation3 + $0x3d]]
    %v1494 = vstv %s1492
    %v1495 = vstv %s1493
    %v1496 = vsel %vm481, %v1494, %v1495
    %1497 = vst [vmem:[#allocation1] ss:$2 sm:$0xff] %v477
    %s1498 = scalar_lea.vmem [#allocation1], 16
    %1499 = vst [vmem:[%s1498] ss:$2 sm:$0xff] %v478
    %v1500 = vld.sshfl [vmem:[#allocation1] sm:$0xff pattern:$0x75316420]
    %v1501 = vld.sshfl [vmem:[#allocation1 + $0x8] sm:$0xff pattern:$0x75316420]
    %v1502 = vld.sshfl [vmem:[#allocation1 + $0x10] sm:$0xff pattern:$0x75316420]
    %1506 = vrot.lane.b32.xlu0 %v1500, 30
    %v1507 = vpop.permute.xlu0 %1506
    %1508 = vrot.lane.b32.xlu0 %v1501, 30
    %v1509 = vpop.permute.xlu0 %1508
    %1510 = vrot.lane.b32.xlu0 %v1502, 30
    %v1511 = vpop.permute.xlu0 %1510
    %vm1512 = vcmp.lt.s32.totalorder %v505, 30
    %v1513 = vsel %vm1512, %v1509, %v1511
    %v1514 = vsel %vm1512, %v1507, %v1509
    %v1515 = vmul.f32 %v1496, %v1514
    %v1516 = vmul.f32 %v1496, %v1513
    %v1517 = vadd.f32 %v1490, %v1515
    %v1518 = vadd.f32 %v1491, %v1516
    %s1519 = sld [smem:[#allocation3 + $0x13]]
    %s1520 = sld [smem:[#allocation3 + $0x44]]
    %v1521 = vstv %s1519
    %v1522 = vstv %s1520
    %v1523 = vsel %vm481, %v1521, %v1522
    %1524 = vst [vmem:[#allocation1] ss:$2 sm:$0xff] %v477
    %s1525 = scalar_lea.vmem [#allocation1], 16
    %1526 = vst [vmem:[%s1525] ss:$2 sm:$0xff] %v478
    %v1527 = vld.sshfl [vmem:[#allocation1] sm:$0xff pattern:$0x75316420]
    %v1528 = vld.sshfl [vmem:[#allocation1 + $0x8] sm:$0xff pattern:$0x75316420]
    %v1529 = vld.sshfl [vmem:[#allocation1 + $0x10] sm:$0xff pattern:$0x75316420]
    %1533 = vrot.lane.b32.xlu0 %v1527, 14
    %v1534 = vpop.permute.xlu0 %1533
    %1535 = vrot.lane.b32.xlu0 %v1528, 14
    %v1536 = vpop.permute.xlu0 %1535
    %1537 = vrot.lane.b32.xlu0 %v1529, 14
    %v1538 = vpop.permute.xlu0 %1537
    %vm1539 = vcmp.lt.s32.totalorder %v505, 14
    %v1540 = vsel %vm1539, %v1536, %v1538
    %v1541 = vsel %vm1539, %v1534, %v1536
    %v1542 = vmul.f32 %v1523, %v1541
    %v1543 = vmul.f32 %v1523, %v1540
    %v1544 = vadd.f32 %v1517, %v1542
    %v1545 = vadd.f32 %v1518, %v1543
    %s1546 = sld [smem:[#allocation3 + $0x1a]]
    %s1547 = sld [smem:[#allocation3 + $0x4b]]
    %v1548 = vstv %s1546
    %v1549 = vstv %s1547
    %v1550 = vsel %vm481, %v1548, %v1549
    %1551 = vst [vmem:[#allocation1] ss:$2 sm:$0xff] %v477
    %s1552 = scalar_lea.vmem [#allocation1], 16
    %1553 = vst [vmem:[%s1552] ss:$2 sm:$0xff] %v478
    %v1554 = vld.sshfl [vmem:[#allocation1 + $0x8] sm:$0xff pattern:$0x75316420]
    %v1555 = vld.sshfl [vmem:[#allocation1 + $0x10] sm:$0xff pattern:$0x75316420]
    %v1556 = vld.sshfl [vmem:[#allocation1 + $0x18] sm:$0xff pattern:$0x75316420]
    %1560 = vrot.lane.b32.xlu0 %v1554, 126
    %v1561 = vpop.permute.xlu0 %1560
    %1562 = vrot.lane.b32.xlu0 %v1555, 126
    %v1563 = vpop.permute.xlu0 %1562
    %1564 = vrot.lane.b32.xlu0 %v1556, 126
    %v1565 = vpop.permute.xlu0 %1564
    %vm1566 = vcmp.lt.s32.totalorder %v505, 126
    %v1567 = vsel %vm1566, %v1563, %v1565
    %v1568 = vsel %vm1566, %v1561, %v1563
    %v1569 = vmul.f32 %v1550, %v1568
    %v1570 = vmul.f32 %v1550, %v1567
    %v1571 = vadd.f32 %v1544, %v1569
    %v1572 = vadd.f32 %v1545, %v1570
    %s1573 = sld [smem:[#allocation3 + $0x21]]
    %s1574 = sld [smem:[#allocation3 + $0x52]]
    %v1575 = vstv %s1573
    %v1576 = vstv %s1574
    %v1577 = vsel %vm481, %v1575, %v1576
    %1578 = vst [vmem:[#allocation1] ss:$2 sm:$0xff] %v477
    %s1579 = scalar_lea.vmem [#allocation1], 16
    %1580 = vst [vmem:[%s1579] ss:$2 sm:$0xff] %v478
    %v1581 = vld.sshfl [vmem:[#allocation1 + $0x8] sm:$0xff pattern:$0x75316420]
    %v1582 = vld.sshfl [vmem:[#allocation1 + $0x10] sm:$0xff pattern:$0x75316420]
    %v1583 = vld.sshfl [vmem:[#allocation1 + $0x18] sm:$0xff pattern:$0x75316420]
    %1587 = vrot.lane.b32.xlu0 %v1581, 110
    %v1588 = vpop.permute.xlu0 %1587
    %1589 = vrot.lane.b32.xlu0 %v1582, 110
    %v1590 = vpop.permute.xlu0 %1589
    %1591 = vrot.lane.b32.xlu0 %v1583, 110
    %v1592 = vpop.permute.xlu0 %1591
    %vm1593 = vcmp.lt.s32.totalorder %v505, 110
    %v1594 = vsel %vm1593, %v1590, %v1592
    %v1595 = vsel %vm1593, %v1588, %v1590
    %v1596 = vmul.f32 %v1577, %v1595
    %v1597 = vmul.f32 %v1577, %v1594
    %v1598 = vadd.f32 %v1571, %v1596
    %v1599 = vadd.f32 %v1572, %v1597
    %s1600 = sld [smem:[#allocation3 + $0x28]]
    %s1601 = sld [smem:[#allocation3 + $0x59]]
    %v1602 = vstv %s1600
    %v1603 = vstv %s1601
    %v1604 = vsel %vm481, %v1602, %v1603
    %1605 = vst [vmem:[#allocation1] ss:$2 sm:$0xff] %v477
    %s1606 = scalar_lea.vmem [#allocation1], 16
    %1607 = vst [vmem:[%s1606] ss:$2 sm:$0xff] %v478
    %v1608 = vld.sshfl [vmem:[#allocation1 + $0x8] sm:$0xff pattern:$0x75316420]
    %v1609 = vld.sshfl [vmem:[#allocation1 + $0x10] sm:$0xff pattern:$0x75316420]
    %v1610 = vld.sshfl [vmem:[#allocation1 + $0x18] sm:$0xff pattern:$0x75316420]
    %1614 = vrot.lane.b32.xlu0 %v1608, 94
    %v1615 = vpop.permute.xlu0 %1614
    %1616 = vrot.lane.b32.xlu0 %v1609, 94
    %v1617 = vpop.permute.xlu0 %1616
    %1618 = vrot.lane.b32.xlu0 %v1610, 94
    %v1619 = vpop.permute.xlu0 %1618
    %vm1620 = vcmp.lt.s32.totalorder %v505, 94
    %v1621 = vsel %vm1620, %v1617, %v1619
    %v1622 = vsel %vm1620, %v1615, %v1617
    %v1623 = vmul.f32 %v1604, %v1622
    %v1624 = vmul.f32 %v1604, %v1621
    %v1625 = vadd.f32 %v1598, %v1623
    %v1626 = vadd.f32 %v1599, %v1624
    %s1627 = sld [smem:[#allocation3 + $0x2f]]
    %s1628 = sld [smem:[#allocation3 + $0x60]]
    %v1629 = vstv %s1627
    %v1630 = vstv %s1628
    %v1631 = vsel %vm481, %v1629, %v1630
    %1632 = vst [vmem:[#allocation1] ss:$2 sm:$0xff] %v477
    %s1633 = scalar_lea.vmem [#allocation1], 16
    %1634 = vst [vmem:[%s1633] ss:$2 sm:$0xff] %v478
    %v1635 = vld.sshfl [vmem:[#allocation1 + $0x8] sm:$0xff pattern:$0x75316420]
    %v1636 = vld.sshfl [vmem:[#allocation1 + $0x10] sm:$0xff pattern:$0x75316420]
    %v1637 = vld.sshfl [vmem:[#allocation1 + $0x18] sm:$0xff pattern:$0x75316420]
    %1641 = vrot.lane.b32.xlu0 %v1635, 78
    %v1642 = vpop.permute.xlu0 %1641
    %1643 = vrot.lane.b32.xlu0 %v1636, 78
    %v1644 = vpop.permute.xlu0 %1643
    %1645 = vrot.lane.b32.xlu0 %v1637, 78
    %v1646 = vpop.permute.xlu0 %1645
    %vm1647 = vcmp.lt.s32.totalorder %v505, 78
    %v1648 = vsel %vm1647, %v1644, %v1646
    %v1649 = vsel %vm1647, %v1642, %v1644
    %v1650 = vmul.f32 %v1631, %v1649
    %v1651 = vmul.f32 %v1631, %v1648
    %v1652 = vadd.f32 %v1625, %v1650
    %v1653 = vadd.f32 %v1626, %v1651
    %s1654 = scalar_lea.vmem %s4, 5
    %v1655 = vld [vmem:[%s1654] ss:$8 sm:$0x3]
    %v1657 = vperm.slane %v1655, 0
    %v1658 = vperm.slane %v1655, 1
    %v1661 = vmul.f32 %v1652, %v1657
    %v1662 = vmul.f32 %v1653, %v1658
    %v1663 = vadd.f32 %v1463, %v1661
    %v1664 = vadd.f32 %v1464, %v1662
    %s1665 = sld [smem:[#allocation3 + $0x6]]
    %s1666 = sld [smem:[#allocation3 + $0x37]]
    %v1667 = vstv %s1665
    %v1668 = vstv %s1666
    %v1669 = vsel %vm481, %v1667, %v1668
    %1670 = vst [vmem:[#allocation1] ss:$2 sm:$0xff] %v477
    %s1671 = scalar_lea.vmem [#allocation1], 16
    %1672 = vst [vmem:[%s1671] ss:$2 sm:$0xff] %v478
    %v1673 = vld.sshfl [vmem:[#allocation1] sm:$0xff pattern:$0x75316420]
    %v1674 = vld.sshfl [vmem:[#allocation1 + $0x8] sm:$0xff pattern:$0x75316420]
    %v1675 = vld.sshfl [vmem:[#allocation1 + $0x10] sm:$0xff pattern:$0x75316420]
    %1679 = vrot.lane.b32.xlu0 %v1673, 45
    %v1680 = vpop.permute.xlu0 %1679
    %1681 = vrot.lane.b32.xlu0 %v1674, 45
    %v1682 = vpop.permute.xlu0 %1681
    %1683 = vrot.lane.b32.xlu0 %v1675, 45
    %v1684 = vpop.permute.xlu0 %1683
    %vm1685 = vcmp.lt.s32.totalorder %v505, 45
    %v1686 = vsel %vm1685, %v1682, %v1684
    %v1687 = vsel %vm1685, %v1680, %v1682
    %v1688 = vmul.f32 %v1669, %v1687
    %v1689 = vmul.f32 %v1669, %v1686
    %v1690 = vadd.f32 %v1688, 0.0
    %v1691 = vadd.f32 %v1689, 0.0
    %s1692 = sld [smem:[#allocation3 + $0xd]]
    %s1693 = sld [smem:[#allocation3 + $0x3e]]
    %v1694 = vstv %s1692
    %v1695 = vstv %s1693
    %v1696 = vsel %vm481, %v1694, %v1695
    %1697 = vst [vmem:[#allocation1] ss:$2 sm:$0xff] %v477
    %s1698 = scalar_lea.vmem [#allocation1], 16
    %1699 = vst [vmem:[%s1698] ss:$2 sm:$0xff] %v478
    %v1700 = vld.sshfl [vmem:[#allocation1] sm:$0xff pattern:$0x75316420]
    %v1701 = vld.sshfl [vmem:[#allocation1 + $0x8] sm:$0xff pattern:$0x75316420]
    %v1702 = vld.sshfl [vmem:[#allocation1 + $0x10] sm:$0xff pattern:$0x75316420]
    %1706 = vrot.lane.b32.xlu0 %v1700, 29
    %v1707 = vpop.permute.xlu0 %1706
    %1708 = vrot.lane.b32.xlu0 %v1701, 29
    %v1709 = vpop.permute.xlu0 %1708
    %1710 = vrot.lane.b32.xlu0 %v1702, 29
    %v1711 = vpop.permute.xlu0 %1710
    %vm1712 = vcmp.lt.s32.totalorder %v505, 29
    %v1713 = vsel %vm1712, %v1709, %v1711
    %v1714 = vsel %vm1712, %v1707, %v1709
    %v1715 = vmul.f32 %v1696, %v1714
    %v1716 = vmul.f32 %v1696, %v1713
    %v1717 = vadd.f32 %v1690, %v1715
    %v1718 = vadd.f32 %v1691, %v1716
    %s1719 = sld [smem:[#allocation3 + $0x14]]
    %s1720 = sld [smem:[#allocation3 + $0x45]]
    %v1721 = vstv %s1719
    %v1722 = vstv %s1720
    %v1723 = vsel %vm481, %v1721, %v1722
    %1724 = vst [vmem:[#allocation1] ss:$2 sm:$0xff] %v477
    %s1725 = scalar_lea.vmem [#allocation1], 16
    %1726 = vst [vmem:[%s1725] ss:$2 sm:$0xff] %v478
    %v1727 = vld.sshfl [vmem:[#allocation1] sm:$0xff pattern:$0x75316420]
    %v1728 = vld.sshfl [vmem:[#allocation1 + $0x8] sm:$0xff pattern:$0x75316420]
    %v1729 = vld.sshfl [vmem:[#allocation1 + $0x10] sm:$0xff pattern:$0x75316420]
    %1733 = vrot.lane.b32.xlu0 %v1727, 13
    %v1734 = vpop.permute.xlu0 %1733
    %1735 = vrot.lane.b32.xlu0 %v1728, 13
    %v1736 = vpop.permute.xlu0 %1735
    %1737 = vrot.lane.b32.xlu0 %v1729, 13
    %v1738 = vpop.permute.xlu0 %1737
    %vm1739 = vcmp.lt.s32.totalorder %v505, 13
    %v1740 = vsel %vm1739, %v1736, %v1738
    %v1741 = vsel %vm1739, %v1734, %v1736
    %v1742 = vmul.f32 %v1723, %v1741
    %v1743 = vmul.f32 %v1723, %v1740
    %v1744 = vadd.f32 %v1717, %v1742
    %v1745 = vadd.f32 %v1718, %v1743
    %s1746 = sld [smem:[#allocation3 + $0x1b]]
    %s1747 = sld [smem:[#allocation3 + $0x4c]]
    %v1748 = vstv %s1746
    %v1749 = vstv %s1747
    %v1750 = vsel %vm481, %v1748, %v1749
    %1751 = vst [vmem:[#allocation1] ss:$2 sm:$0xff] %v477
    %s1752 = scalar_lea.vmem [#allocation1], 16
    %1753 = vst [vmem:[%s1752] ss:$2 sm:$0xff] %v478
    %v1754 = vld.sshfl [vmem:[#allocation1 + $0x8] sm:$0xff pattern:$0x75316420]
    %v1755 = vld.sshfl [vmem:[#allocation1 + $0x10] sm:$0xff pattern:$0x75316420]
    %v1756 = vld.sshfl [vmem:[#allocation1 + $0x18] sm:$0xff pattern:$0x75316420]
    %1760 = vrot.lane.b32.xlu0 %v1754, 125
    %v1761 = vpop.permute.xlu0 %1760
    %1762 = vrot.lane.b32.xlu0 %v1755, 125
    %v1763 = vpop.permute.xlu0 %1762
    %1764 = vrot.lane.b32.xlu0 %v1756, 125
    %v1765 = vpop.permute.xlu0 %1764
    %vm1766 = vcmp.lt.s32.totalorder %v505, 125
    %v1767 = vsel %vm1766, %v1763, %v1765
    %v1768 = vsel %vm1766, %v1761, %v1763
    %v1769 = vmul.f32 %v1750, %v1768
    %v1770 = vmul.f32 %v1750, %v1767
    %v1771 = vadd.f32 %v1744, %v1769
    %v1772 = vadd.f32 %v1745, %v1770
    %s1773 = sld [smem:[#allocation3 + $0x22]]
    %s1774 = sld [smem:[#allocation3 + $0x53]]
    %v1775 = vstv %s1773
    %v1776 = vstv %s1774
    %v1777 = vsel %vm481, %v1775, %v1776
    %1778 = vst [vmem:[#allocation1] ss:$2 sm:$0xff] %v477
    %s1779 = scalar_lea.vmem [#allocation1], 16
    %1780 = vst [vmem:[%s1779] ss:$2 sm:$0xff] %v478
    %v1781 = vld.sshfl [vmem:[#allocation1 + $0x8] sm:$0xff pattern:$0x75316420]
    %v1782 = vld.sshfl [vmem:[#allocation1 + $0x10] sm:$0xff pattern:$0x75316420]
    %v1783 = vld.sshfl [vmem:[#allocation1 + $0x18] sm:$0xff pattern:$0x75316420]
    %1787 = vrot.lane.b32.xlu0 %v1781, 109
    %v1788 = vpop.permute.xlu0 %1787
    %1789 = vrot.lane.b32.xlu0 %v1782, 109
    %v1790 = vpop.permute.xlu0 %1789
    %1791 = vrot.lane.b32.xlu0 %v1783, 109
    %v1792 = vpop.permute.xlu0 %1791
    %vm1793 = vcmp.lt.s32.totalorder %v505, 109
    %v1794 = vsel %vm1793, %v1790, %v1792
    %v1795 = vsel %vm1793, %v1788, %v1790
    %v1796 = vmul.f32 %v1777, %v1795
    %v1797 = vmul.f32 %v1777, %v1794
    %v1798 = vadd.f32 %v1771, %v1796
    %v1799 = vadd.f32 %v1772, %v1797
    %s1800 = sld [smem:[#allocation3 + $0x29]]
    %s1801 = sld [smem:[#allocation3 + $0x5a]]
    %v1802 = vstv %s1800
    %v1803 = vstv %s1801
    %v1804 = vsel %vm481, %v1802, %v1803
    %1805 = vst [vmem:[#allocation1] ss:$2 sm:$0xff] %v477
    %s1806 = scalar_lea.vmem [#allocation1], 16
    %1807 = vst [vmem:[%s1806] ss:$2 sm:$0xff] %v478
    %v1808 = vld.sshfl [vmem:[#allocation1 + $0x8] sm:$0xff pattern:$0x75316420]
    %v1809 = vld.sshfl [vmem:[#allocation1 + $0x10] sm:$0xff pattern:$0x75316420]
    %v1810 = vld.sshfl [vmem:[#allocation1 + $0x18] sm:$0xff pattern:$0x75316420]
    %1814 = vrot.lane.b32.xlu0 %v1808, 93
    %v1815 = vpop.permute.xlu0 %1814
    %1816 = vrot.lane.b32.xlu0 %v1809, 93
    %v1817 = vpop.permute.xlu0 %1816
    %1818 = vrot.lane.b32.xlu0 %v1810, 93
    %v1819 = vpop.permute.xlu0 %1818
    %vm1820 = vcmp.lt.s32.totalorder %v505, 93
    %v1821 = vsel %vm1820, %v1817, %v1819
    %v1822 = vsel %vm1820, %v1815, %v1817
    %v1823 = vmul.f32 %v1804, %v1822
    %v1824 = vmul.f32 %v1804, %v1821
    %v1825 = vadd.f32 %v1798, %v1823
    %v1826 = vadd.f32 %v1799, %v1824
    %s1827 = sld [smem:[#allocation3 + $0x30]]
    %s1828 = sld [smem:[#allocation3 + $0x61]]
    %v1829 = vstv %s1827
    %v1830 = vstv %s1828
    %v1831 = vsel %vm481, %v1829, %v1830
    %1832 = vst [vmem:[#allocation1] ss:$2 sm:$0xff] %v477
    %s1833 = scalar_lea.vmem [#allocation1], 16
    %1834 = vst [vmem:[%s1833] ss:$2 sm:$0xff] %v478
    %v1835 = vld.sshfl [vmem:[#allocation1 + $0x8] sm:$0xff pattern:$0x75316420]
    %v1836 = vld.sshfl [vmem:[#allocation1 + $0x10] sm:$0xff pattern:$0x75316420]
    %v1837 = vld.sshfl [vmem:[#allocation1 + $0x18] sm:$0xff pattern:$0x75316420]
    %1841 = vrot.lane.b32.xlu0 %v1835, 77
    %v1842 = vpop.permute.xlu0 %1841
    %1843 = vrot.lane.b32.xlu0 %v1836, 77
    %v1844 = vpop.permute.xlu0 %1843
    %1845 = vrot.lane.b32.xlu0 %v1837, 77
    %v1846 = vpop.permute.xlu0 %1845
    %vm1847 = vcmp.lt.s32.totalorder %v505, 77
    %v1848 = vsel %vm1847, %v1844, %v1846
    %v1849 = vsel %vm1847, %v1842, %v1844
    %v1850 = vmul.f32 %v1831, %v1849
    %v1851 = vmul.f32 %v1831, %v1848
    %v1852 = vadd.f32 %v1825, %v1850
    %v1853 = vadd.f32 %v1826, %v1851
    %s1854 = scalar_lea.vmem %s4, 6
    %v1855 = vld [vmem:[%s1854] ss:$8 sm:$0x3]
    %v1857 = vperm.slane %v1855, 0
    %v1858 = vperm.slane %v1855, 1
    %v1861 = vmul.f32 %v1852, %v1857
    %v1862 = vmul.f32 %v1853, %v1858
    %v1863 = vadd.f32 %v1663, %v1861
    %v1864 = vadd.f32 %v1664, %v1862
    %v1867 = vrot.slane %v1863, 2
    %v1868 = vrot.slane %v1864, 2
    %v1871 = vadd.f32 %v1863, %v1867
    %v1872 = vadd.f32 %v1864, %v1868
    %v1873 = vsub.f32 0.0, %v1871
    %v1874 = vsub.f32 0.0, %v1872
    %v1875 = vmul.f32 %v1873, 1.442695
    %v1876 = vpow.pop %v1875
    %v1877 = vmul.f32 %v1874, 1.442695
    %v1878 = vpow.pop %v1877
    %v1879 = vadd.f32 %v1876, 1.0
    %v1880 = vadd.f32 %v1878, 1.0
    %v1881 = vrcp.pop %v1879
    %v1882 = vrcp.pop %v1880
    %v1883 = vld [vmem:[#allocation7] sm:$0xff]
    %v1884 = vld [vmem:[#allocation7 + $0x8] sm:$0xff]
    %v1885 = vld [vmem:[#allocation7 + $0x10] sm:$0xff]
    %v1886 = vld [vmem:[#allocation7 + $0x18] sm:$0xff]
    %v1887 = vld [vmem:[#allocation7 + $0x20] sm:$0xff]
    %v1888 = vld [vmem:[#allocation7 + $0x28] sm:$0xff]
    %v1889 = vld [vmem:[#allocation7 + $0x30] sm:$0xff]
    %v1890 = vld [vmem:[#allocation7 + $0x38] sm:$0xff]
    %v1891 = vmul.f32 %v1883, %v154
    %v1892 = vmul.f32 %v1884, %v154
    %v1893 = vmul.f32 %v1885, %v169
    %v1894 = vmul.f32 %v1886, %v169
    %v1895 = vmul.f32 %v1887, %v184
    %v1896 = vmul.f32 %v1888, %v184
    %v1897 = vmul.f32 %v1889, %v199
    %v1898 = vmul.f32 %v1890, %v199
    %v1899 = vperm.slane %v1881, 0
    %v1900 = vperm.slane %v1882, 0
    %v1901 = vmul.f32 %v1891, %v1899
    %v1902 = vmul.f32 %v1892, %v1900
    %v1903 = vmul.f32 %v1893, %v1899
    %v1904 = vmul.f32 %v1894, %v1900
    %v1905 = vmul.f32 %v1895, %v1899
    %v1906 = vmul.f32 %v1896, %v1900
    %v1907 = vmul.f32 %v1897, %v1899
    %v1908 = vmul.f32 %v1898, %v1900
    %1909 = vst [vmem:[#allocation8] sm:$0xff] %v1901
    %1910 = vst [vmem:[#allocation8 + $0x8] sm:$0xff] %v1902
    %1911 = vst [vmem:[#allocation8 + $0x10] sm:$0xff] %v1903
    %1912 = vst [vmem:[#allocation8 + $0x18] sm:$0xff] %v1904
    %1913 = vst [vmem:[#allocation8 + $0x20] sm:$0xff] %v1905
    %1914 = vst [vmem:[#allocation8 + $0x28] sm:$0xff] %v1906
    %1915 = vst [vmem:[#allocation8 + $0x30] sm:$0xff] %v1907
    %1916 = vst [vmem:[#allocation8 + $0x38] sm:$0xff] %v1908
    %v1917 = vld [vmem:[%s272] sm:$0xff]
    %v1918 = vld [vmem:[%s272 + $0x8] sm:$0xff]
    %v1919 = vld [vmem:[%s272 + $0x10] sm:$0xff]
    %v1920 = vld [vmem:[%s272 + $0x18] sm:$0xff]
    %v1921 = vld [vmem:[%s272 + $0x20] sm:$0xff]
    %v1922 = vld [vmem:[%s272 + $0x28] sm:$0xff]
    %v1923 = vld [vmem:[%s272 + $0x30] sm:$0xff]
    %v1924 = vld [vmem:[%s272 + $0x38] sm:$0xff]
    %v1925 = vmul.f32 %v1917, %v369
    %v1926 = vmul.f32 %v1918, %v369
    %v1927 = vmul.f32 %v1919, %v384
    %v1928 = vmul.f32 %v1920, %v384
    %v1929 = vmul.f32 %v1921, %v399
    %v1930 = vmul.f32 %v1922, %v399
    %v1931 = vmul.f32 %v1923, %v414
    %v1932 = vmul.f32 %v1924, %v414
    %v1933 = vperm.slane %v1881, 1
    %v1934 = vperm.slane %v1882, 1
    %v1935 = vmul.f32 %v1925, %v1933
    %v1936 = vmul.f32 %v1926, %v1934
    %v1937 = vmul.f32 %v1927, %v1933
    %v1938 = vmul.f32 %v1928, %v1934
    %v1939 = vmul.f32 %v1929, %v1933
    %v1940 = vmul.f32 %v1930, %v1934
    %v1941 = vmul.f32 %v1931, %v1933
    %v1942 = vmul.f32 %v1932, %v1934
    %s1943 = scalar_lea.vmem [#allocation8], 64
    %1944 = vst [vmem:[%s1943] sm:$0xff] %v1935
    %1945 = vst [vmem:[%s1943 + $0x8] sm:$0xff] %v1936
    %1946 = vst [vmem:[%s1943 + $0x10] sm:$0xff] %v1937
    %1947 = vst [vmem:[%s1943 + $0x18] sm:$0xff] %v1938
    %1948 = vst [vmem:[%s1943 + $0x20] sm:$0xff] %v1939
    %1949 = vst [vmem:[%s1943 + $0x28] sm:$0xff] %v1940
    %1950 = vst [vmem:[%s1943 + $0x30] sm:$0xff] %v1941
    %1951 = vst [vmem:[%s1943 + $0x38] sm:$0xff] %v1942
    // Predicated region
    $region30: #{tpu_custom_call.1} parent=1 // pred_check
      _
    $region31: #{tpu_custom_call.1} parent=1 // pred_check_branch
      %1953 = sbr.rel (0) target = $region33
    $region32: #{tpu_custom_call.1} parent=1 // pred_region
      %1955 = vsyncadd [#allocation5], 0
      %s1956 = sshll.u32 [#allocation8], 4
      %s1957 = int_to_ptr.vmem [resolvable:$true] %s1956
      %s1958 = sshll.u32 %s5, 4
      %s1959 = int_to_ptr.hbm [resolvable:$true] %s1958
      %1964 = dma.vmem_to_hbm [thread:$0]  %s1957, 2048, %s1959, [#allocation5], 256, 256, 16
    $region33: #{tpu_custom_call.1} parent=1 // pred_fallthru
      _
    // Predicated region
    $region34: #{tpu_custom_call.1} parent=1 // pred_check
      _
    $region35: #{tpu_custom_call.1} parent=1 // pred_check_branch
      %1966 = sbr.rel (0) target = $region37
    $region36: #{tpu_custom_call.1} parent=1 // pred_region
      %1968 = dma.done [#allocation5], 2048
    $region37: #{tpu_custom_call.1} parent=1 // pred_fallthru
      _
    %1969 = vsyncpa [#allocation4], 1
    %1970 = vsyncpa [#allocation5], 1
    %1971 = vsyncpa [#allocation6], 1

</llo_original>
